<compile_context>
chip_gen: v5e
topology: v5e:2x2
jax: 0.10.0
libtpu: 0.0.40
codegen_flags: <defaults>
</compile_context>

<pallas_src>
import math

import jax
import jax.numpy as jnp
from jax import lax
from jax.experimental import pallas as pl
from jax.experimental.pallas import tpu as pltpu


# ----------------------------------------------------------------------------
# Fused Pallas kernel (built per static network configuration)
# ----------------------------------------------------------------------------
def make_vgg_kernel(B, layer_cfgs, F):
    """layer_cfgs: list of (Lin, Cin, Lout, Lh, Cout, K, pad) static ints."""
    N = len(layer_cfgs)

    def kernel(*refs):
        # ---- unpack refs: inputs..., output, scratches... -------------------
        xp_ref = refs[0]                               # (B, Lin0 + 2*pad, 1) pre-padded
        idx = 1
        layer_w = []
        for _ in range(N):
            layer_w.append(refs[idx:idx + 4])          # (wflat, bias, gamma, beta)
            idx += 4
        w1_ref, b1_ref, w2t_ref, b2_ref = refs[idx:idx + 4]
        idx += 4
        o_ref = refs[idx]
        idx += 1
        pad_refs = refs[idx:idx + N - 1]               # padded inputs of layers 1..N-1
        idx += N - 1
        cv_refs = refs[idx:idx + N]                    # conv outputs (for pooling reads)
        idx += N
        feat_ref = refs[idx]                           # (B, F) classifier features

        cur_pad = xp_ref
        for i, (Lin, Cin, Lout, Lh, Cout, K, pad) in enumerate(layer_cfgs):
            wf_ref, b_ref, g_ref, bt_ref = layer_w[i]
            cv_ref = cv_refs[i]

            # --- Conv1d as K*Cin shifted VPU FMAs (no im2col, no masked-store storm)
            acc = jnp.zeros((B, Lout, Cout), jnp.float32)
            for k in range(K):
                xk = cur_pad[:, k:k + Lout, :]                     # (B, Lout, Cin)
                for c in range(Cin):
                    row = k * Cin + c
                    acc = acc + xk[:, :, c:c + 1] * wf_ref[row:row + 1, :]
            acc = jnp.maximum(acc + b_ref[...], 0.0)               # bias + ReLU
            cv_ref[...] = acc

            # --- AvgPool1d(2): even/odd sublane-strided reads + VPU add
            even = cv_ref[:, pl.ds(0, Lh, stride=2), :]
            odd = cv_ref[:, pl.ds(1, Lh, stride=2), :]
            pooled = (even + odd) * 0.5                            # (B, Lh, Cout)

            # --- BatchNorm1d (training-mode batch stats, biased var), two-pass
            inv_n = 1.0 / float(B * Lh)
            mean = jnp.sum(jnp.sum(pooled, axis=1, keepdims=True),
                           axis=0, keepdims=True) * inv_n          # (1, 1, Cout)
            cen = pooled - mean
            var = jnp.sum(jnp.sum(cen * cen, axis=1, keepdims=True),
                          axis=0, keepdims=True) * inv_n
            normed = cen * (lax.rsqrt(var + 1e-5) * g_ref[...]) + bt_ref[...]

            if i + 1 < N:
                # single interior-slice store into the next layer's padded buffer;
                # only the tiny padding slabs are zeroed (no full-buffer memset).
                nxt = pad_refs[i]
                pad_n = layer_cfgs[i + 1][6]
                if pad_n > 0:
                    zpad = jnp.zeros((B, pad_n, Cout), jnp.float32)
                    nxt[:, 0:pad_n, :] = zpad
                    nxt[:, pad_n + Lh:pad_n + Lh + pad_n, :] = zpad
                nxt[:, pad_n:pad_n + Lh, :] = normed
                cur_pad = nxt
            else:
                # flatten last activation (NLC order (l, c)) into the classifier
                # feature scratch; w1 was pre-permuted to this order in the wrapper.
                for l in range(Lh):
                    feat_ref[:, l * Cout:(l + 1) * Cout] = normed[:, l, :]

        # ---- classifier: ONE (B,F)x(F,Hp) MXU GEMM -> ReLU -> (B,Hp)x(Hp,out) ----
        feat = feat_ref[...]                                       # (B, F)
        z = jnp.dot(feat, w1_ref[...], preferred_element_type=jnp.float32)
        z = jnp.maximum(z + b1_ref[...], 0.0)                      # (B, Hp), lane-dense
        out = lax.dot_general(z, w2t_ref[...],
                              dimension_numbers=(((1,), (1,)), ((), ())),
                              preferred_element_type=jnp.float32)  # (B, out)
        o_ref[...] = out + b2_ref[...]

    return kernel


# ----------------------------------------------------------------------------
# Wrapper: one-time weight transforms + single pallas_call
# ----------------------------------------------------------------------------
def _spec(shape):
    nd = len(shape)
    return pl.BlockSpec(shape, lambda i, _nd=nd: (0,) * _nd)


def vgg_forward(x, params):
    """x: (B, input_shape) float32 — equivalent of the torch forward."""
    B, L0 = x.shape
    blocks = params["blocks"]

    # static per-layer dims
    layer_cfgs = []
    Lin, Cin = L0, 1
    for (w, b, g, bt) in blocks:
        K, cin_w, Cout = w.shape
        assert cin_w == Cin
        pad = K // 2
        Lout = Lin + 2 * pad - (K - 1)
        Lh = Lout // 2
        layer_cfgs.append((Lin, Cin, Lout, Lh, Cout, K, pad))
        Lin, Cin = Lh, Cout
    Lf, Cf = Lin, Cin                         # final length / channels
    F = Lf * Cf

    w1, b1, w2, b2 = params["classifier"]
    assert w1.shape[0] == F
    H = w1.shape[1]
    Hp = ((H + 127) // 128) * 128             # lane-dense hidden (4000 -> 4096)
    out_dim = w2.shape[1]

    # One-time weight-only transforms (parameters, done outside the kernel):
    #  * permute + flatten w1 rows from torch (c*Lf + l) order to the kernel's (l*Cf + c)
    #    order so the classifier is a single un-transposed GEMM on NLC features
    #  * zero-pad the hidden dim; the extra zero rows/cols cancel exactly
    #  * store w2 transposed (out, Hp) so it is lane-dense in VMEM
    w1p = jnp.transpose(w1.reshape(Cf, Lf, H), (1, 0, 2)).reshape(F, H)
    w1p = jnp.pad(w1p, ((0, 0), (0, Hp - H)))
    b1p = jnp.pad(b1, ((0, 0), (0, Hp - H)))
    w2t = jnp.transpose(jnp.pad(w2, ((0, Hp - H), (0, 0))), (1, 0))   # (out, Hp)

    pad0 = layer_cfgs[0][6]
    xp = jnp.pad(x.reshape(B, L0, 1), ((0, 0), (pad0, pad0), (0, 0)))  # NLC, pre-padded

    inputs = [xp]
    in_specs = [_spec(xp.shape)]
    for (w, b, g, bt), (Lin_, Cin_, Lout_, Lh_, Cout_, K_, _) in zip(blocks, layer_cfgs):
        wflat = w.reshape(K_ * Cin_, Cout_)   # rows ordered (tap, in-channel)
        inputs += [wflat, b, g, bt]
        in_specs += [_spec(a.shape) for a in (wflat, b, g, bt)]
    inputs += [w1p, b1p, w2t, b2]
    in_specs += [_spec(a.shape) for a in (w1p, b1p, w2t, b2)]

    scratch_shapes = []
    for i in range(1, len(layer_cfgs)):       # padded inputs of layers 1..N-1
        Lin_i, Cin_i, _, _, _, _, pad_i = layer_cfgs[i]
        scratch_shapes.append(pltpu.VMEM((B, Lin_i + 2 * pad_i, Cin_i), jnp.float32))
    for (_, _, Lout_, _, Cout_, _, _) in layer_cfgs:   # conv outputs (pool reads)
        scratch_shapes.append(pltpu.VMEM((B, Lout_, Cout_), jnp.float32))
    scratch_shapes.append(pltpu.VMEM((B, F), jnp.float32))   # classifier features

    kernel = make_vgg_kernel(B, layer_cfgs, F)

    return pl.pallas_call(
        kernel,
        grid=(1,),
        in_specs=in_specs,
        out_specs=_spec((B, out_dim)),
        out_shape=jax.ShapeDtypeStruct((B, out_dim), jnp.float32),
        scratch_shapes=scratch_shapes,
        compiler_params=pltpu.CompilerParams(
            dimension_semantics=("arbitrary",),
            # actual footprint ~5 MiB (w1p double-buffered dominates); keep the cap
            # tight so headroom remains on v7x's 64 MiB physical VMEM at larger configs.
            vmem_limit_bytes=16 * 1024 * 1024),
    )(*inputs)


# ----------------------------------------------------------------------------
# Deterministic parameter init (shapes follow VGGNumBlocks.__init__)
# ----------------------------------------------------------------------------
def init_params(key, input_shape, out_shape, num_layers, kernel_size, channel_size,
                max_channels=512, hidden=4000):
    pad = kernel_size // 2
    blocks = []
    in_ch, out_ch, L = 1, channel_size, input_shape
    for _ in range(num_layers):
        if out_ch >= max_channels:
            out_ch = max_channels
        key, k1, k2 = jax.random.split(key, 3)
        bound = 1.0 / math.sqrt(in_ch * kernel_size)
        w = jax.random.uniform(k1, (kernel_size, in_ch, out_ch), jnp.float32, -bound, bound)
        b = jax.random.uniform(k2, (1, out_ch), jnp.float32, -bound, bound)
        g = jnp.ones((1, out_ch), jnp.float32)    # BatchNorm default weight
        bt = jnp.zeros((1, out_ch), jnp.float32)  # BatchNorm default bias
        blocks.append((w, b, g, bt))
        L = (L + 2 * pad - (kernel_size - 1)) // 2
        in_ch = out_ch
        out_ch = out_ch * 2

    feat_dim = in_ch * L  # == int((out_channels/2) * num_features) in the torch module
    key, k1, k2, k3, k4 = jax.random.split(key, 5)
    b1d = 1.0 / math.sqrt(feat_dim)
    w1 = jax.random.uniform(k1, (feat_dim, hidden), jnp.float32, -b1d, b1d)
    b1 = jax.random.uniform(k2, (1, hidden), jnp.float32, -b1d, b1d)
    b2d = 1.0 / math.sqrt(hidden)
    w2 = jax.random.uniform(k3, (hidden, out_shape), jnp.float32, -b2d, b2d)
    b2 = jax.random.uniform(k4, (1, out_shape), jnp.float32, -b2d, b2d)
    return {"blocks": blocks, "classifier": (w1, b1, w2, b2)}


# ----------------------------------------------------------------------------
# Pure-JAX reference (independent formulation) for validation
# ----------------------------------------------------------------------------
def ref_forward(x, params):
    B = x.shape[0]
    h = x.reshape(B, 1, -1)  # NCL like torch
    for (w, b, g, bt) in params["blocks"]:
        K, _, Cout = w.shape
        pad = K // 2
        wt = jnp.transpose(w, (2, 1, 0))  # (Cout, Cin, K)  ('OIH')
        y = lax.conv_general_dilated(h, wt, window_strides=(1,),
                                     padding=[(pad, pad)],
                                     dimension_numbers=("NCH", "OIH", "NCH"))
        y = jnp.maximum(y + b.reshape(1, Cout, 1), 0.0)
        L = y.shape[2]
        Lh = L // 2
        y = y[:, :, : Lh * 2].reshape(B, Cout, Lh, 2).mean(-1)
        mean = y.mean(axis=(0, 2), keepdims=True)
        var = ((y - mean) ** 2).mean(axis=(0, 2), keepdims=True)
        h = (y - mean) * lax.rsqrt(var + 1e-5) * g.reshape(1, Cout, 1) + bt.reshape(1, Cout, 1)
    feat = h.reshape(B, -1)
    w1, b1, w2, b2 = params["classifier"]
    return jnp.maximum(feat @ w1 + b1, 0.0) @ w2 + b2


# ----------------------------------------------------------------------------
if __name__ == "__main__":
    BATCH = 2
    INPUT_SHAPE = 64     # 1-D signal length
    OUT_SHAPE = 4        # n_classes
    NUM_LAYERS = 2
    KERNEL_SIZE = 3
    CHANNEL_SIZE = 4

    key = jax.random.PRNGKey(0)
    key, kx = jax.random.split(key)
    x = jax.random.normal(kx, (BATCH, INPUT_SHAPE), jnp.float32)

    params = init_params(key, INPUT_SHAPE, OUT_SHAPE, NUM_LAYERS, KERNEL_SIZE, CHANNEL_SIZE)

    out = vgg_forward(x, params)
    out = jax.block_until_ready(out)
    assert out.shape == (BATCH, OUT_SHAPE), out.shape

    ref = jax.block_until_ready(ref_forward(x, params))
    assert jnp.allclose(out, ref, rtol=1e-3, atol=1e-3), (out, ref)

    print("KERNEL_OK")
</pallas_src>

<mosaic_0001>
module attributes {stable_mosaic.version = 11 : i64} {
  func.func @kernel(%arg0: i32, %arg1: memref<2x66x1xf32, #tpu.memory_space<vmem>>, %arg2: memref<3x4xf32, #tpu.memory_space<vmem>>, %arg3: memref<1x4xf32, #tpu.memory_space<vmem>>, %arg4: memref<1x4xf32, #tpu.memory_space<vmem>>, %arg5: memref<1x4xf32, #tpu.memory_space<vmem>>, %arg6: memref<12x8xf32, #tpu.memory_space<vmem>>, %arg7: memref<1x8xf32, #tpu.memory_space<vmem>>, %arg8: memref<1x8xf32, #tpu.memory_space<vmem>>, %arg9: memref<1x8xf32, #tpu.memory_space<vmem>>, %arg10: memref<128x4096xf32, #tpu.memory_space<vmem>>, %arg11: memref<1x4096xf32, #tpu.memory_space<vmem>>, %arg12: memref<4x4096xf32, #tpu.memory_space<vmem>>, %arg13: memref<1x4xf32, #tpu.memory_space<vmem>>, %arg14: memref<2x4xf32, #tpu.memory_space<vmem>>, %arg15: memref<2x34x4xf32, #tpu.memory_space<vmem>>, %arg16: memref<2x64x4xf32, #tpu.memory_space<vmem>>, %arg17: memref<2x32x8xf32, #tpu.memory_space<vmem>>, %arg18: memref<2x128xf32, #tpu.memory_space<vmem>>) attributes {dimension_semantics = [#tpu.dimension_semantics<arbitrary>], iteration_bounds = array<i64: 1>, scalar_prefetch = 0 : i64, scratch_operands = 4 : i64, tpu.core_type = #tpu.core_type<tc>, window_params = [{pipeline_mode = #tpu.pipeline_mode<synchronous>, transform_indices = @transform_0, window_bounds = array<i64: 2, 66, 1>}, {pipeline_mode = #tpu.pipeline_mode<synchronous>, transform_indices = @transform_1, window_bounds = array<i64: 3, 4>}, {pipeline_mode = #tpu.pipeline_mode<synchronous>, transform_indices = @transform_2, window_bounds = array<i64: 1, 4>}, {pipeline_mode = #tpu.pipeline_mode<synchronous>, transform_indices = @transform_3, window_bounds = array<i64: 1, 4>}, {pipeline_mode = #tpu.pipeline_mode<synchronous>, transform_indices = @transform_4, window_bounds = array<i64: 1, 4>}, {pipeline_mode = #tpu.pipeline_mode<synchronous>, transform_indices = @transform_5, window_bounds = array<i64: 12, 8>}, {pipeline_mode = #tpu.pipeline_mode<synchronous>, transform_indices = @transform_6, window_bounds = array<i64: 1, 8>}, {pipeline_mode = #tpu.pipeline_mode<synchronous>, transform_indices = @transform_7, window_bounds = array<i64: 1, 8>}, {pipeline_mode = #tpu.pipeline_mode<synchronous>, transform_indices = @transform_8, window_bounds = array<i64: 1, 8>}, {pipeline_mode = #tpu.pipeline_mode<synchronous>, transform_indices = @transform_9, window_bounds = array<i64: 128, 4096>}, {pipeline_mode = #tpu.pipeline_mode<synchronous>, transform_indices = @transform_10, window_bounds = array<i64: 1, 4096>}, {pipeline_mode = #tpu.pipeline_mode<synchronous>, transform_indices = @transform_11, window_bounds = array<i64: 4, 4096>}, {pipeline_mode = #tpu.pipeline_mode<synchronous>, transform_indices = @transform_12, window_bounds = array<i64: 1, 4>}, {pipeline_mode = #tpu.pipeline_mode<synchronous>, transform_indices = @transform_13, window_bounds = array<i64: 2, 4>}]} {
    %cst = arith.constant 0.000000e+00 : f32
    %0 = vector.broadcast %cst : f32 to vector<2x64x4xf32>
    %c0 = arith.constant 0 : index
    %c0_0 = arith.constant 0 : index
    %c0_1 = arith.constant 0 : index
    %1 = vector.load %arg1[%c0, %c0_0, %c0_1] : memref<2x66x1xf32, #tpu.memory_space<vmem>>, vector<2x64x1xf32>
    %c0_2 = arith.constant 0 : index
    %c0_3 = arith.constant 0 : index
    %2 = vector.load %arg2[%c0_2, %c0_3] : memref<3x4xf32, #tpu.memory_space<vmem>>, vector<1x4xf32>
    %3 = vector.shape_cast %2 : vector<1x4xf32> to vector<1x1x4xf32>
    %4 = vector.broadcast %1 : vector<2x64x1xf32> to vector<2x64x4xf32>
    %5 = vector.broadcast %3 : vector<1x1x4xf32> to vector<2x64x4xf32>
    %6 = arith.mulf %4, %5 : vector<2x64x4xf32>
    %7 = arith.addf %0, %6 : vector<2x64x4xf32>
    %c0_4 = arith.constant 0 : index
    %c1 = arith.constant 1 : index
    %c0_5 = arith.constant 0 : index
    %8 = vector.load %arg1[%c0_4, %c1, %c0_5] : memref<2x66x1xf32, #tpu.memory_space<vmem>>, vector<2x64x1xf32>
    %c1_6 = arith.constant 1 : index
    %c0_7 = arith.constant 0 : index
    %9 = vector.load %arg2[%c1_6, %c0_7] : memref<3x4xf32, #tpu.memory_space<vmem>>, vector<1x4xf32>
    %10 = vector.shape_cast %9 : vector<1x4xf32> to vector<1x1x4xf32>
    %11 = vector.broadcast %8 : vector<2x64x1xf32> to vector<2x64x4xf32>
    %12 = vector.broadcast %10 : vector<1x1x4xf32> to vector<2x64x4xf32>
    %13 = arith.mulf %11, %12 : vector<2x64x4xf32>
    %14 = arith.addf %7, %13 : vector<2x64x4xf32>
    %c0_8 = arith.constant 0 : index
    %c2 = arith.constant 2 : index
    %c0_9 = arith.constant 0 : index
    %15 = vector.load %arg1[%c0_8, %c2, %c0_9] : memref<2x66x1xf32, #tpu.memory_space<vmem>>, vector<2x64x1xf32>
    %c2_10 = arith.constant 2 : index
    %c0_11 = arith.constant 0 : index
    %16 = vector.load %arg2[%c2_10, %c0_11] : memref<3x4xf32, #tpu.memory_space<vmem>>, vector<1x4xf32>
    %17 = vector.shape_cast %16 : vector<1x4xf32> to vector<1x1x4xf32>
    %18 = vector.broadcast %15 : vector<2x64x1xf32> to vector<2x64x4xf32>
    %19 = vector.broadcast %17 : vector<1x1x4xf32> to vector<2x64x4xf32>
    %20 = arith.mulf %18, %19 : vector<2x64x4xf32>
    %21 = arith.addf %14, %20 : vector<2x64x4xf32>
    %c0_12 = arith.constant 0 : index
    %c0_13 = arith.constant 0 : index
    %22 = vector.load %arg3[%c0_12, %c0_13] : memref<1x4xf32, #tpu.memory_space<vmem>>, vector<1x4xf32>
    %23 = vector.shape_cast %22 : vector<1x4xf32> to vector<1x1x4xf32>
    %24 = vector.broadcast %23 : vector<1x1x4xf32> to vector<2x64x4xf32>
    %25 = arith.addf %21, %24 : vector<2x64x4xf32>
    %cst_14 = arith.constant 0.000000e+00 : f32
    %26 = vector.broadcast %cst_14 : f32 to vector<2x64x4xf32>
    %27 = arith.maximumf %25, %26 : vector<2x64x4xf32>
    %c0_15 = arith.constant 0 : index
    %c0_16 = arith.constant 0 : index
    %c0_17 = arith.constant 0 : index
    %28 = vector.load %arg16[%c0_15, %c0_16, %c0_17] : memref<2x64x4xf32, #tpu.memory_space<vmem>>, vector<2x64x4xf32>
    tpu.vector_store %arg16[%c0_15, %c0_16, %c0_17], %27 {strides = array<i32>} : memref<2x64x4xf32, #tpu.memory_space<vmem>>, vector<2x64x4xf32>,
    %c0_18 = arith.constant 0 : index
    %c0_19 = arith.constant 0 : index
    %c0_20 = arith.constant 0 : index
    %29 = tpu.strided_load %arg16[%c0_18, %c0_19, %c0_20] {strides = array<i32: 1, 2, 1>} : memref<2x64x4xf32, #tpu.memory_space<vmem>>, vector<2x32x4xf32>
    %c0_21 = arith.constant 0 : index
    %c1_22 = arith.constant 1 : index
    %c0_23 = arith.constant 0 : index
    %30 = tpu.strided_load %arg16[%c0_21, %c1_22, %c0_23] {strides = array<i32: 1, 2, 1>} : memref<2x64x4xf32, #tpu.memory_space<vmem>>, vector<2x32x4xf32>
    %31 = arith.addf %29, %30 : vector<2x32x4xf32>
    %cst_24 = arith.constant 5.000000e-01 : f32
    %32 = vector.broadcast %cst_24 : f32 to vector<2x32x4xf32>
    %33 = arith.mulf %31, %32 : vector<2x32x4xf32>
    %cst_25 = arith.constant dense<0.000000e+00> : vector<2x4xf32>
    %34 = vector.multi_reduction <add>, %33, %cst_25 [1] : vector<2x32x4xf32> to vector<2x4xf32>
    %35 = vector.shape_cast %34 : vector<2x4xf32> to vector<2x1x4xf32>
    %cst_26 = arith.constant dense<0.000000e+00> : vector<1x4xf32>
    %36 = vector.multi_reduction <add>, %35, %cst_26 [0] : vector<2x1x4xf32> to vector<1x4xf32>
    %37 = vector.shape_cast %36 : vector<1x4xf32> to vector<1x1x4xf32>
    %cst_27 = arith.constant 1.562500e-02 : f32
    %38 = vector.broadcast %cst_27 : f32 to vector<1x1x4xf32>
    %39 = arith.mulf %37, %38 : vector<1x1x4xf32>
    %40 = vector.broadcast %39 : vector<1x1x4xf32> to vector<2x32x4xf32>
    %41 = arith.subf %33, %40 : vector<2x32x4xf32>
    %42 = arith.mulf %41, %41 : vector<2x32x4xf32>
    %cst_28 = arith.constant dense<0.000000e+00> : vector<2x4xf32>
    %43 = vector.multi_reduction <add>, %42, %cst_28 [1] : vector<2x32x4xf32> to vector<2x4xf32>
    %44 = vector.shape_cast %43 : vector<2x4xf32> to vector<2x1x4xf32>
    %cst_29 = arith.constant dense<0.000000e+00> : vector<1x4xf32>
    %45 = vector.multi_reduction <add>, %44, %cst_29 [0] : vector<2x1x4xf32> to vector<1x4xf32>
    %46 = vector.shape_cast %45 : vector<1x4xf32> to vector<1x1x4xf32>
    %cst_30 = arith.constant 1.562500e-02 : f32
    %47 = vector.broadcast %cst_30 : f32 to vector<1x1x4xf32>
    %48 = arith.mulf %46, %47 : vector<1x1x4xf32>
    %cst_31 = arith.constant 9.99999974E-6 : f32
    %49 = vector.broadcast %cst_31 : f32 to vector<1x1x4xf32>
    %50 = arith.addf %48, %49 : vector<1x1x4xf32>
    %51 = math.rsqrt %50 : vector<1x1x4xf32>
    %c0_32 = arith.constant 0 : index
    %c0_33 = arith.constant 0 : index
    %52 = vector.load %arg4[%c0_32, %c0_33] : memref<1x4xf32, #tpu.memory_space<vmem>>, vector<1x4xf32>
    %53 = vector.shape_cast %52 : vector<1x4xf32> to vector<1x1x4xf32>
    %54 = arith.mulf %51, %53 : vector<1x1x4xf32>
    %55 = vector.broadcast %54 : vector<1x1x4xf32> to vector<2x32x4xf32>
    %56 = arith.mulf %41, %55 : vector<2x32x4xf32>
    %c0_34 = arith.constant 0 : index
    %c0_35 = arith.constant 0 : index
    %57 = vector.load %arg5[%c0_34, %c0_35] : memref<1x4xf32, #tpu.memory_space<vmem>>, vector<1x4xf32>
    %58 = vector.shape_cast %57 : vector<1x4xf32> to vector<1x1x4xf32>
    %59 = vector.broadcast %58 : vector<1x1x4xf32> to vector<2x32x4xf32>
    %60 = arith.addf %56, %59 : vector<2x32x4xf32>
    %cst_36 = arith.constant 0.000000e+00 : f32
    %61 = vector.broadcast %cst_36 : f32 to vector<2x1x4xf32>
    %c0_37 = arith.constant 0 : index
    %c0_38 = arith.constant 0 : index
    %c0_39 = arith.constant 0 : index
    %62 = vector.load %arg15[%c0_37, %c0_38, %c0_39] : memref<2x34x4xf32, #tpu.memory_space<vmem>>, vector<2x1x4xf32>
    tpu.vector_store %arg15[%c0_37, %c0_38, %c0_39], %61 {strides = array<i32>} : memref<2x34x4xf32, #tpu.memory_space<vmem>>, vector<2x1x4xf32>,
    %c0_40 = arith.constant 0 : index
    %c33 = arith.constant 33 : index
    %c0_41 = arith.constant 0 : index
    %63 = vector.load %arg15[%c0_40, %c33, %c0_41] : memref<2x34x4xf32, #tpu.memory_space<vmem>>, vector<2x1x4xf32>
    tpu.vector_store %arg15[%c0_40, %c33, %c0_41], %61 {strides = array<i32>} : memref<2x34x4xf32, #tpu.memory_space<vmem>>, vector<2x1x4xf32>,
    %c0_42 = arith.constant 0 : index
    %c1_43 = arith.constant 1 : index
    %c0_44 = arith.constant 0 : index
    %64 = vector.load %arg15[%c0_42, %c1_43, %c0_44] : memref<2x34x4xf32, #tpu.memory_space<vmem>>, vector<2x32x4xf32>
    tpu.vector_store %arg15[%c0_42, %c1_43, %c0_44], %60 {strides = array<i32>} : memref<2x34x4xf32, #tpu.memory_space<vmem>>, vector<2x32x4xf32>,
    %cst_45 = arith.constant 0.000000e+00 : f32
    %65 = vector.broadcast %cst_45 : f32 to vector<2x32x8xf32>
    %c0_46 = arith.constant 0 : index
    %c0_47 = arith.constant 0 : index
    %c0_48 = arith.constant 0 : index
    %66 = vector.load %arg15[%c0_46, %c0_47, %c0_48] : memref<2x34x4xf32, #tpu.memory_space<vmem>>, vector<2x32x4xf32>
    %67 = vector.extract_strided_slice %66 {offsets = [0, 0, 0], sizes = [2, 32, 1], strides = [1, 1, 1]} : vector<2x32x4xf32> to vector<2x32x1xf32>
    %c0_49 = arith.constant 0 : index
    %c0_50 = arith.constant 0 : index
    %68 = vector.load %arg6[%c0_49, %c0_50] : memref<12x8xf32, #tpu.memory_space<vmem>>, vector<1x8xf32>
    %69 = vector.shape_cast %68 : vector<1x8xf32> to vector<1x1x8xf32>
    %70 = vector.broadcast %67 : vector<2x32x1xf32> to vector<2x32x8xf32>
    %71 = vector.broadcast %69 : vector<1x1x8xf32> to vector<2x32x8xf32>
    %72 = arith.mulf %70, %71 : vector<2x32x8xf32>
    %73 = arith.addf %65, %72 : vector<2x32x8xf32>
    %74 = vector.extract_strided_slice %66 {offsets = [0, 0, 1], sizes = [2, 32, 1], strides = [1, 1, 1]} : vector<2x32x4xf32> to vector<2x32x1xf32>
    %c1_51 = arith.constant 1 : index
    %c0_52 = arith.constant 0 : index
    %75 = vector.load %arg6[%c1_51, %c0_52] : memref<12x8xf32, #tpu.memory_space<vmem>>, vector<1x8xf32>
    %76 = vector.shape_cast %75 : vector<1x8xf32> to vector<1x1x8xf32>
    %77 = vector.broadcast %74 : vector<2x32x1xf32> to vector<2x32x8xf32>
    %78 = vector.broadcast %76 : vector<1x1x8xf32> to vector<2x32x8xf32>
    %79 = arith.mulf %77, %78 : vector<2x32x8xf32>
    %80 = arith.addf %73, %79 : vector<2x32x8xf32>
    %81 = vector.extract_strided_slice %66 {offsets = [0, 0, 2], sizes = [2, 32, 1], strides = [1, 1, 1]} : vector<2x32x4xf32> to vector<2x32x1xf32>
    %c2_53 = arith.constant 2 : index
    %c0_54 = arith.constant 0 : index
    %82 = vector.load %arg6[%c2_53, %c0_54] : memref<12x8xf32, #tpu.memory_space<vmem>>, vector<1x8xf32>
    %83 = vector.shape_cast %82 : vector<1x8xf32> to vector<1x1x8xf32>
    %84 = vector.broadcast %81 : vector<2x32x1xf32> to vector<2x32x8xf32>
    %85 = vector.broadcast %83 : vector<1x1x8xf32> to vector<2x32x8xf32>
    %86 = arith.mulf %84, %85 : vector<2x32x8xf32>
    %87 = arith.addf %80, %86 : vector<2x32x8xf32>
    %88 = vector.extract_strided_slice %66 {offsets = [0, 0, 3], sizes = [2, 32, 1], strides = [1, 1, 1]} : vector<2x32x4xf32> to vector<2x32x1xf32>
    %c3 = arith.constant 3 : index
    %c0_55 = arith.constant 0 : index
    %89 = vector.load %arg6[%c3, %c0_55] : memref<12x8xf32, #tpu.memory_space<vmem>>, vector<1x8xf32>
    %90 = vector.shape_cast %89 : vector<1x8xf32> to vector<1x1x8xf32>
    %91 = vector.broadcast %88 : vector<2x32x1xf32> to vector<2x32x8xf32>
    %92 = vector.broadcast %90 : vector<1x1x8xf32> to vector<2x32x8xf32>
    %93 = arith.mulf %91, %92 : vector<2x32x8xf32>
    %94 = arith.addf %87, %93 : vector<2x32x8xf32>
    %c0_56 = arith.constant 0 : index
    %c1_57 = arith.constant 1 : index
    %c0_58 = arith.constant 0 : index
    %95 = vector.load %arg15[%c0_56, %c1_57, %c0_58] : memref<2x34x4xf32, #tpu.memory_space<vmem>>, vector<2x32x4xf32>
    %96 = vector.extract_strided_slice %95 {offsets = [0, 0, 0], sizes = [2, 32, 1], strides = [1, 1, 1]} : vector<2x32x4xf32> to vector<2x32x1xf32>
    %c4 = arith.constant 4 : index
    %c0_59 = arith.constant 0 : index
    %97 = vector.load %arg6[%c4, %c0_59] : memref<12x8xf32, #tpu.memory_space<vmem>>, vector<1x8xf32>
    %98 = vector.shape_cast %97 : vector<1x8xf32> to vector<1x1x8xf32>
    %99 = vector.broadcast %96 : vector<2x32x1xf32> to vector<2x32x8xf32>
    %100 = vector.broadcast %98 : vector<1x1x8xf32> to vector<2x32x8xf32>
    %101 = arith.mulf %99, %100 : vector<2x32x8xf32>
    %102 = arith.addf %94, %101 : vector<2x32x8xf32>
    %103 = vector.extract_strided_slice %95 {offsets = [0, 0, 1], sizes = [2, 32, 1], strides = [1, 1, 1]} : vector<2x32x4xf32> to vector<2x32x1xf32>
    %c5 = arith.constant 5 : index
    %c0_60 = arith.constant 0 : index
    %104 = vector.load %arg6[%c5, %c0_60] : memref<12x8xf32, #tpu.memory_space<vmem>>, vector<1x8xf32>
    %105 = vector.shape_cast %104 : vector<1x8xf32> to vector<1x1x8xf32>
    %106 = vector.broadcast %103 : vector<2x32x1xf32> to vector<2x32x8xf32>
    %107 = vector.broadcast %105 : vector<1x1x8xf32> to vector<2x32x8xf32>
    %108 = arith.mulf %106, %107 : vector<2x32x8xf32>
    %109 = arith.addf %102, %108 : vector<2x32x8xf32>
    %110 = vector.extract_strided_slice %95 {offsets = [0, 0, 2], sizes = [2, 32, 1], strides = [1, 1, 1]} : vector<2x32x4xf32> to vector<2x32x1xf32>
    %c6 = arith.constant 6 : index
    %c0_61 = arith.constant 0 : index
    %111 = vector.load %arg6[%c6, %c0_61] : memref<12x8xf32, #tpu.memory_space<vmem>>, vector<1x8xf32>
    %112 = vector.shape_cast %111 : vector<1x8xf32> to vector<1x1x8xf32>
    %113 = vector.broadcast %110 : vector<2x32x1xf32> to vector<2x32x8xf32>
    %114 = vector.broadcast %112 : vector<1x1x8xf32> to vector<2x32x8xf32>
    %115 = arith.mulf %113, %114 : vector<2x32x8xf32>
    %116 = arith.addf %109, %115 : vector<2x32x8xf32>
    %117 = vector.extract_strided_slice %95 {offsets = [0, 0, 3], sizes = [2, 32, 1], strides = [1, 1, 1]} : vector<2x32x4xf32> to vector<2x32x1xf32>
    %c7 = arith.constant 7 : index
    %c0_62 = arith.constant 0 : index
    %118 = vector.load %arg6[%c7, %c0_62] : memref<12x8xf32, #tpu.memory_space<vmem>>, vector<1x8xf32>
    %119 = vector.shape_cast %118 : vector<1x8xf32> to vector<1x1x8xf32>
    %120 = vector.broadcast %117 : vector<2x32x1xf32> to vector<2x32x8xf32>
    %121 = vector.broadcast %119 : vector<1x1x8xf32> to vector<2x32x8xf32>
    %122 = arith.mulf %120, %121 : vector<2x32x8xf32>
    %123 = arith.addf %116, %122 : vector<2x32x8xf32>
    %c0_63 = arith.constant 0 : index
    %c2_64 = arith.constant 2 : index
    %c0_65 = arith.constant 0 : index
    %124 = vector.load %arg15[%c0_63, %c2_64, %c0_65] : memref<2x34x4xf32, #tpu.memory_space<vmem>>, vector<2x32x4xf32>
    %125 = vector.extract_strided_slice %124 {offsets = [0, 0, 0], sizes = [2, 32, 1], strides = [1, 1, 1]} : vector<2x32x4xf32> to vector<2x32x1xf32>
    %c8 = arith.constant 8 : index
    %c0_66 = arith.constant 0 : index
    %126 = vector.load %arg6[%c8, %c0_66] : memref<12x8xf32, #tpu.memory_space<vmem>>, vector<1x8xf32>
    %127 = vector.shape_cast %126 : vector<1x8xf32> to vector<1x1x8xf32>
    %128 = vector.broadcast %125 : vector<2x32x1xf32> to vector<2x32x8xf32>
    %129 = vector.broadcast %127 : vector<1x1x8xf32> to vector<2x32x8xf32>
    %130 = arith.mulf %128, %129 : vector<2x32x8xf32>
    %131 = arith.addf %123, %130 : vector<2x32x8xf32>
    %132 = vector.extract_strided_slice %124 {offsets = [0, 0, 1], sizes = [2, 32, 1], strides = [1, 1, 1]} : vector<2x32x4xf32> to vector<2x32x1xf32>
    %c9 = arith.constant 9 : index
    %c0_67 = arith.constant 0 : index
    %133 = vector.load %arg6[%c9, %c0_67] : memref<12x8xf32, #tpu.memory_space<vmem>>, vector<1x8xf32>
    %134 = vector.shape_cast %133 : vector<1x8xf32> to vector<1x1x8xf32>
    %135 = vector.broadcast %132 : vector<2x32x1xf32> to vector<2x32x8xf32>
    %136 = vector.broadcast %134 : vector<1x1x8xf32> to vector<2x32x8xf32>
    %137 = arith.mulf %135, %136 : vector<2x32x8xf32>
    %138 = arith.addf %131, %137 : vector<2x32x8xf32>
    %139 = vector.extract_strided_slice %124 {offsets = [0, 0, 2], sizes = [2, 32, 1], strides = [1, 1, 1]} : vector<2x32x4xf32> to vector<2x32x1xf32>
    %c10 = arith.constant 10 : index
    %c0_68 = arith.constant 0 : index
    %140 = vector.load %arg6[%c10, %c0_68] : memref<12x8xf32, #tpu.memory_space<vmem>>, vector<1x8xf32>
    %141 = vector.shape_cast %140 : vector<1x8xf32> to vector<1x1x8xf32>
    %142 = vector.broadcast %139 : vector<2x32x1xf32> to vector<2x32x8xf32>
    %143 = vector.broadcast %141 : vector<1x1x8xf32> to vector<2x32x8xf32>
    %144 = arith.mulf %142, %143 : vector<2x32x8xf32>
    %145 = arith.addf %138, %144 : vector<2x32x8xf32>
    %146 = vector.extract_strided_slice %124 {offsets = [0, 0, 3], sizes = [2, 32, 1], strides = [1, 1, 1]} : vector<2x32x4xf32> to vector<2x32x1xf32>
    %c11 = arith.constant 11 : index
    %c0_69 = arith.constant 0 : index
    %147 = vector.load %arg6[%c11, %c0_69] : memref<12x8xf32, #tpu.memory_space<vmem>>, vector<1x8xf32>
    %148 = vector.shape_cast %147 : vector<1x8xf32> to vector<1x1x8xf32>
    %149 = vector.broadcast %146 : vector<2x32x1xf32> to vector<2x32x8xf32>
    %150 = vector.broadcast %148 : vector<1x1x8xf32> to vector<2x32x8xf32>
    %151 = arith.mulf %149, %150 : vector<2x32x8xf32>
    %152 = arith.addf %145, %151 : vector<2x32x8xf32>
    %c0_70 = arith.constant 0 : index
    %c0_71 = arith.constant 0 : index
    %153 = vector.load %arg7[%c0_70, %c0_71] : memref<1x8xf32, #tpu.memory_space<vmem>>, vector<1x8xf32>
    %154 = vector.shape_cast %153 : vector<1x8xf32> to vector<1x1x8xf32>
    %155 = vector.broadcast %154 : vector<1x1x8xf32> to vector<2x32x8xf32>
    %156 = arith.addf %152, %155 : vector<2x32x8xf32>
    %cst_72 = arith.constant 0.000000e+00 : f32
    %157 = vector.broadcast %cst_72 : f32 to vector<2x32x8xf32>
    %158 = arith.maximumf %156, %157 : vector<2x32x8xf32>
    %c0_73 = arith.constant 0 : index
    %c0_74 = arith.constant 0 : index
    %c0_75 = arith.constant 0 : index
    %159 = vector.load %arg17[%c0_73, %c0_74, %c0_75] : memref<2x32x8xf32, #tpu.memory_space<vmem>>, vector<2x32x8xf32>
    tpu.vector_store %arg17[%c0_73, %c0_74, %c0_75], %158 {strides = array<i32>} : memref<2x32x8xf32, #tpu.memory_space<vmem>>, vector<2x32x8xf32>,
    %c0_76 = arith.constant 0 : index
    %c0_77 = arith.constant 0 : index
    %c0_78 = arith.constant 0 : index
    %160 = tpu.strided_load %arg17[%c0_76, %c0_77, %c0_78] {strides = array<i32: 1, 2, 1>} : memref<2x32x8xf32, #tpu.memory_space<vmem>>, vector<2x16x8xf32>
    %c0_79 = arith.constant 0 : index
    %c1_80 = arith.constant 1 : index
    %c0_81 = arith.constant 0 : index
    %161 = tpu.strided_load %arg17[%c0_79, %c1_80, %c0_81] {strides = array<i32: 1, 2, 1>} : memref<2x32x8xf32, #tpu.memory_space<vmem>>, vector<2x16x8xf32>
    %162 = arith.addf %160, %161 : vector<2x16x8xf32>
    %cst_82 = arith.constant 5.000000e-01 : f32
    %163 = vector.broadcast %cst_82 : f32 to vector<2x16x8xf32>
    %164 = arith.mulf %162, %163 : vector<2x16x8xf32>
    %cst_83 = arith.constant dense<0.000000e+00> : vector<2x8xf32>
    %165 = vector.multi_reduction <add>, %164, %cst_83 [1] : vector<2x16x8xf32> to vector<2x8xf32>
    %166 = vector.shape_cast %165 : vector<2x8xf32> to vector<2x1x8xf32>
    %cst_84 = arith.constant dense<0.000000e+00> : vector<1x8xf32>
    %167 = vector.multi_reduction <add>, %166, %cst_84 [0] : vector<2x1x8xf32> to vector<1x8xf32>
    %168 = vector.shape_cast %167 : vector<1x8xf32> to vector<1x1x8xf32>
    %cst_85 = arith.constant 3.125000e-02 : f32
    %169 = vector.broadcast %cst_85 : f32 to vector<1x1x8xf32>
    %170 = arith.mulf %168, %169 : vector<1x1x8xf32>
    %171 = vector.broadcast %170 : vector<1x1x8xf32> to vector<2x16x8xf32>
    %172 = arith.subf %164, %171 : vector<2x16x8xf32>
    %173 = arith.mulf %172, %172 : vector<2x16x8xf32>
    %cst_86 = arith.constant dense<0.000000e+00> : vector<2x8xf32>
    %174 = vector.multi_reduction <add>, %173, %cst_86 [1] : vector<2x16x8xf32> to vector<2x8xf32>
    %175 = vector.shape_cast %174 : vector<2x8xf32> to vector<2x1x8xf32>
    %cst_87 = arith.constant dense<0.000000e+00> : vector<1x8xf32>
    %176 = vector.multi_reduction <add>, %175, %cst_87 [0] : vector<2x1x8xf32> to vector<1x8xf32>
    %177 = vector.shape_cast %176 : vector<1x8xf32> to vector<1x1x8xf32>
    %cst_88 = arith.constant 3.125000e-02 : f32
    %178 = vector.broadcast %cst_88 : f32 to vector<1x1x8xf32>
    %179 = arith.mulf %177, %178 : vector<1x1x8xf32>
    %cst_89 = arith.constant 9.99999974E-6 : f32
    %180 = vector.broadcast %cst_89 : f32 to vector<1x1x8xf32>
    %181 = arith.addf %179, %180 : vector<1x1x8xf32>
    %182 = math.rsqrt %181 : vector<1x1x8xf32>
    %c0_90 = arith.constant 0 : index
    %c0_91 = arith.constant 0 : index
    %183 = vector.load %arg8[%c0_90, %c0_91] : memref<1x8xf32, #tpu.memory_space<vmem>>, vector<1x8xf32>
    %184 = vector.shape_cast %183 : vector<1x8xf32> to vector<1x1x8xf32>
    %185 = arith.mulf %182, %184 : vector<1x1x8xf32>
    %186 = vector.broadcast %185 : vector<1x1x8xf32> to vector<2x16x8xf32>
    %187 = arith.mulf %172, %186 : vector<2x16x8xf32>
    %c0_92 = arith.constant 0 : index
    %c0_93 = arith.constant 0 : index
    %188 = vector.load %arg9[%c0_92, %c0_93] : memref<1x8xf32, #tpu.memory_space<vmem>>, vector<1x8xf32>
    %189 = vector.shape_cast %188 : vector<1x8xf32> to vector<1x1x8xf32>
    %190 = vector.broadcast %189 : vector<1x1x8xf32> to vector<2x16x8xf32>
    %191 = arith.addf %187, %190 : vector<2x16x8xf32>
    %192 = vector.extract_strided_slice %191 {offsets = [0, 0, 0], sizes = [2, 1, 8], strides = [1, 1, 1]} : vector<2x16x8xf32> to vector<2x1x8xf32>
    %193 = vector.shape_cast %192 : vector<2x1x8xf32> to vector<2x8xf32>
    %c0_94 = arith.constant 0 : index
    %c0_95 = arith.constant 0 : index
    %194 = vector.load %arg18[%c0_94, %c0_95] : memref<2x128xf32, #tpu.memory_space<vmem>>, vector<2x8xf32>
    tpu.vector_store %arg18[%c0_94, %c0_95], %193 {strides = array<i32>} : memref<2x128xf32, #tpu.memory_space<vmem>>, vector<2x8xf32>,
    %195 = vector.extract_strided_slice %191 {offsets = [0, 1, 0], sizes = [2, 1, 8], strides = [1, 1, 1]} : vector<2x16x8xf32> to vector<2x1x8xf32>
    %196 = vector.shape_cast %195 : vector<2x1x8xf32> to vector<2x8xf32>
    %c0_96 = arith.constant 0 : index
    %c8_97 = arith.constant 8 : index
    %197 = vector.load %arg18[%c0_96, %c8_97] : memref<2x128xf32, #tpu.memory_space<vmem>>, vector<2x8xf32>
    tpu.vector_store %arg18[%c0_96, %c8_97], %196 {strides = array<i32>} : memref<2x128xf32, #tpu.memory_space<vmem>>, vector<2x8xf32>,
    %198 = vector.extract_strided_slice %191 {offsets = [0, 2, 0], sizes = [2, 1, 8], strides = [1, 1, 1]} : vector<2x16x8xf32> to vector<2x1x8xf32>
    %199 = vector.shape_cast %198 : vector<2x1x8xf32> to vector<2x8xf32>
    %c0_98 = arith.constant 0 : index
    %c16 = arith.constant 16 : index
    %200 = vector.load %arg18[%c0_98, %c16] : memref<2x128xf32, #tpu.memory_space<vmem>>, vector<2x8xf32>
    tpu.vector_store %arg18[%c0_98, %c16], %199 {strides = array<i32>} : memref<2x128xf32, #tpu.memory_space<vmem>>, vector<2x8xf32>,
    %201 = vector.extract_strided_slice %191 {offsets = [0, 3, 0], sizes = [2, 1, 8], strides = [1, 1, 1]} : vector<2x16x8xf32> to vector<2x1x8xf32>
    %202 = vector.shape_cast %201 : vector<2x1x8xf32> to vector<2x8xf32>
    %c0_99 = arith.constant 0 : index
    %c24 = arith.constant 24 : index
    %203 = vector.load %arg18[%c0_99, %c24] : memref<2x128xf32, #tpu.memory_space<vmem>>, vector<2x8xf32>
    tpu.vector_store %arg18[%c0_99, %c24], %202 {strides = array<i32>} : memref<2x128xf32, #tpu.memory_space<vmem>>, vector<2x8xf32>,
    %204 = vector.extract_strided_slice %191 {offsets = [0, 4, 0], sizes = [2, 1, 8], strides = [1, 1, 1]} : vector<2x16x8xf32> to vector<2x1x8xf32>
    %205 = vector.shape_cast %204 : vector<2x1x8xf32> to vector<2x8xf32>
    %c0_100 = arith.constant 0 : index
    %c32 = arith.constant 32 : index
    %206 = vector.load %arg18[%c0_100, %c32] : memref<2x128xf32, #tpu.memory_space<vmem>>, vector<2x8xf32>
    tpu.vector_store %arg18[%c0_100, %c32], %205 {strides = array<i32>} : memref<2x128xf32, #tpu.memory_space<vmem>>, vector<2x8xf32>,
    %207 = vector.extract_strided_slice %191 {offsets = [0, 5, 0], sizes = [2, 1, 8], strides = [1, 1, 1]} : vector<2x16x8xf32> to vector<2x1x8xf32>
    %208 = vector.shape_cast %207 : vector<2x1x8xf32> to vector<2x8xf32>
    %c0_101 = arith.constant 0 : index
    %c40 = arith.constant 40 : index
    %209 = vector.load %arg18[%c0_101, %c40] : memref<2x128xf32, #tpu.memory_space<vmem>>, vector<2x8xf32>
    tpu.vector_store %arg18[%c0_101, %c40], %208 {strides = array<i32>} : memref<2x128xf32, #tpu.memory_space<vmem>>, vector<2x8xf32>,
    %210 = vector.extract_strided_slice %191 {offsets = [0, 6, 0], sizes = [2, 1, 8], strides = [1, 1, 1]} : vector<2x16x8xf32> to vector<2x1x8xf32>
    %211 = vector.shape_cast %210 : vector<2x1x8xf32> to vector<2x8xf32>
    %c0_102 = arith.constant 0 : index
    %c48 = arith.constant 48 : index
    %212 = vector.load %arg18[%c0_102, %c48] : memref<2x128xf32, #tpu.memory_space<vmem>>, vector<2x8xf32>
    tpu.vector_store %arg18[%c0_102, %c48], %211 {strides = array<i32>} : memref<2x128xf32, #tpu.memory_space<vmem>>, vector<2x8xf32>,
    %213 = vector.extract_strided_slice %191 {offsets = [0, 7, 0], sizes = [2, 1, 8], strides = [1, 1, 1]} : vector<2x16x8xf32> to vector<2x1x8xf32>
    %214 = vector.shape_cast %213 : vector<2x1x8xf32> to vector<2x8xf32>
    %c0_103 = arith.constant 0 : index
    %c56 = arith.constant 56 : index
    %215 = vector.load %arg18[%c0_103, %c56] : memref<2x128xf32, #tpu.memory_space<vmem>>, vector<2x8xf32>
    tpu.vector_store %arg18[%c0_103, %c56], %214 {strides = array<i32>} : memref<2x128xf32, #tpu.memory_space<vmem>>, vector<2x8xf32>,
    %216 = vector.extract_strided_slice %191 {offsets = [0, 8, 0], sizes = [2, 1, 8], strides = [1, 1, 1]} : vector<2x16x8xf32> to vector<2x1x8xf32>
    %217 = vector.shape_cast %216 : vector<2x1x8xf32> to vector<2x8xf32>
    %c0_104 = arith.constant 0 : index
    %c64 = arith.constant 64 : index
    %218 = vector.load %arg18[%c0_104, %c64] : memref<2x128xf32, #tpu.memory_space<vmem>>, vector<2x8xf32>
    tpu.vector_store %arg18[%c0_104, %c64], %217 {strides = array<i32>} : memref<2x128xf32, #tpu.memory_space<vmem>>, vector<2x8xf32>,
    %219 = vector.extract_strided_slice %191 {offsets = [0, 9, 0], sizes = [2, 1, 8], strides = [1, 1, 1]} : vector<2x16x8xf32> to vector<2x1x8xf32>
    %220 = vector.shape_cast %219 : vector<2x1x8xf32> to vector<2x8xf32>
    %c0_105 = arith.constant 0 : index
    %c72 = arith.constant 72 : index
    %221 = vector.load %arg18[%c0_105, %c72] : memref<2x128xf32, #tpu.memory_space<vmem>>, vector<2x8xf32>
    tpu.vector_store %arg18[%c0_105, %c72], %220 {strides = array<i32>} : memref<2x128xf32, #tpu.memory_space<vmem>>, vector<2x8xf32>,
    %222 = vector.extract_strided_slice %191 {offsets = [0, 10, 0], sizes = [2, 1, 8], strides = [1, 1, 1]} : vector<2x16x8xf32> to vector<2x1x8xf32>
    %223 = vector.shape_cast %222 : vector<2x1x8xf32> to vector<2x8xf32>
    %c0_106 = arith.constant 0 : index
    %c80 = arith.constant 80 : index
    %224 = vector.load %arg18[%c0_106, %c80] : memref<2x128xf32, #tpu.memory_space<vmem>>, vector<2x8xf32>
    tpu.vector_store %arg18[%c0_106, %c80], %223 {strides = array<i32>} : memref<2x128xf32, #tpu.memory_space<vmem>>, vector<2x8xf32>,
    %225 = vector.extract_strided_slice %191 {offsets = [0, 11, 0], sizes = [2, 1, 8], strides = [1, 1, 1]} : vector<2x16x8xf32> to vector<2x1x8xf32>
    %226 = vector.shape_cast %225 : vector<2x1x8xf32> to vector<2x8xf32>
    %c0_107 = arith.constant 0 : index
    %c88 = arith.constant 88 : index
    %227 = vector.load %arg18[%c0_107, %c88] : memref<2x128xf32, #tpu.memory_space<vmem>>, vector<2x8xf32>
    tpu.vector_store %arg18[%c0_107, %c88], %226 {strides = array<i32>} : memref<2x128xf32, #tpu.memory_space<vmem>>, vector<2x8xf32>,
    %228 = vector.extract_strided_slice %191 {offsets = [0, 12, 0], sizes = [2, 1, 8], strides = [1, 1, 1]} : vector<2x16x8xf32> to vector<2x1x8xf32>
    %229 = vector.shape_cast %228 : vector<2x1x8xf32> to vector<2x8xf32>
    %c0_108 = arith.constant 0 : index
    %c96 = arith.constant 96 : index
    %230 = vector.load %arg18[%c0_108, %c96] : memref<2x128xf32, #tpu.memory_space<vmem>>, vector<2x8xf32>
    tpu.vector_store %arg18[%c0_108, %c96], %229 {strides = array<i32>} : memref<2x128xf32, #tpu.memory_space<vmem>>, vector<2x8xf32>,
    %231 = vector.extract_strided_slice %191 {offsets = [0, 13, 0], sizes = [2, 1, 8], strides = [1, 1, 1]} : vector<2x16x8xf32> to vector<2x1x8xf32>
    %232 = vector.shape_cast %231 : vector<2x1x8xf32> to vector<2x8xf32>
    %c0_109 = arith.constant 0 : index
    %c104 = arith.constant 104 : index
    %233 = vector.load %arg18[%c0_109, %c104] : memref<2x128xf32, #tpu.memory_space<vmem>>, vector<2x8xf32>
    tpu.vector_store %arg18[%c0_109, %c104], %232 {strides = array<i32>} : memref<2x128xf32, #tpu.memory_space<vmem>>, vector<2x8xf32>,
    %234 = vector.extract_strided_slice %191 {offsets = [0, 14, 0], sizes = [2, 1, 8], strides = [1, 1, 1]} : vector<2x16x8xf32> to vector<2x1x8xf32>
    %235 = vector.shape_cast %234 : vector<2x1x8xf32> to vector<2x8xf32>
    %c0_110 = arith.constant 0 : index
    %c112 = arith.constant 112 : index
    %236 = vector.load %arg18[%c0_110, %c112] : memref<2x128xf32, #tpu.memory_space<vmem>>, vector<2x8xf32>
    tpu.vector_store %arg18[%c0_110, %c112], %235 {strides = array<i32>} : memref<2x128xf32, #tpu.memory_space<vmem>>, vector<2x8xf32>,
    %237 = vector.extract_strided_slice %191 {offsets = [0, 15, 0], sizes = [2, 1, 8], strides = [1, 1, 1]} : vector<2x16x8xf32> to vector<2x1x8xf32>
    %238 = vector.shape_cast %237 : vector<2x1x8xf32> to vector<2x8xf32>
    %c0_111 = arith.constant 0 : index
    %c120 = arith.constant 120 : index
    %239 = vector.load %arg18[%c0_111, %c120] : memref<2x128xf32, #tpu.memory_space<vmem>>, vector<2x8xf32>
    tpu.vector_store %arg18[%c0_111, %c120], %238 {strides = array<i32>} : memref<2x128xf32, #tpu.memory_space<vmem>>, vector<2x8xf32>,
    %c0_112 = arith.constant 0 : index
    %c0_113 = arith.constant 0 : index
    %240 = vector.load %arg18[%c0_112, %c0_113] : memref<2x128xf32, #tpu.memory_space<vmem>>, vector<2x128xf32>
    %c0_114 = arith.constant 0 : index
    %c0_115 = arith.constant 0 : index
    %241 = vector.load %arg10[%c0_114, %c0_115] : memref<128x4096xf32, #tpu.memory_space<vmem>>, vector<128x4096xf32>
    %cst_116 = arith.constant dense<0.000000e+00> : vector<2x4096xf32>
    %242 = tpu.matmul %240, %241, %cst_116 {dimension_numbers = #tpu.dot_dimension_numbers<[1], [0], [0], [1], [0, 0, 1, 1], [], []>} : vector<2x128xf32>, vector<128x4096xf32>, vector<2x4096xf32> -> vector<2x4096xf32>
    %c0_117 = arith.constant 0 : index
    %c0_118 = arith.constant 0 : index
    %243 = vector.load %arg11[%c0_117, %c0_118] : memref<1x4096xf32, #tpu.memory_space<vmem>>, vector<1x4096xf32>
    %244 = vector.broadcast %243 : vector<1x4096xf32> to vector<2x4096xf32>
    %245 = arith.addf %242, %244 : vector<2x4096xf32>
    %cst_119 = arith.constant 0.000000e+00 : f32
    %246 = vector.broadcast %cst_119 : f32 to vector<2x4096xf32>
    %247 = arith.maximumf %245, %246 : vector<2x4096xf32>
    %c0_120 = arith.constant 0 : index
    %c0_121 = arith.constant 0 : index
    %248 = vector.load %arg12[%c0_120, %c0_121] : memref<4x4096xf32, #tpu.memory_space<vmem>>, vector<4x4096xf32>
    %cst_122 = arith.constant dense<0.000000e+00> : vector<2x4xf32>
    %249 = tpu.matmul %247, %248, %cst_122 {dimension_numbers = #tpu.dot_dimension_numbers<[1], [1], [0], [0], [0, 0, 1, 0], [], []>} : vector<2x4096xf32>, vector<4x4096xf32>, vector<2x4xf32> -> vector<2x4xf32>
    %c0_123 = arith.constant 0 : index
    %c0_124 = arith.constant 0 : index
    %250 = vector.load %arg13[%c0_123, %c0_124] : memref<1x4xf32, #tpu.memory_space<vmem>>, vector<1x4xf32>
    %251 = vector.broadcast %250 : vector<1x4xf32> to vector<2x4xf32>
    %252 = arith.addf %249, %251 : vector<2x4xf32>
    %c0_125 = arith.constant 0 : index
    %c0_126 = arith.constant 0 : index
    %253 = vector.load %arg14[%c0_125, %c0_126] : memref<2x4xf32, #tpu.memory_space<vmem>>, vector<2x4xf32>
    tpu.vector_store %arg14[%c0_125, %c0_126], %252 {strides = array<i32>} : memref<2x4xf32, #tpu.memory_space<vmem>>, vector<2x4xf32>,
    return
  }
  func.func @transform_0(%arg0: i32) -> (i32, i32, i32) {
    %c0_i32 = arith.constant 0 : i32
    %c0_i32_0 = arith.constant 0 : i32
    %c0_i32_1 = arith.constant 0 : i32
    %c0_i32_2 = arith.constant 0 : i32
    return %c0_i32, %c0_i32_0, %c0_i32_1 : i32, i32, i32
  }
  func.func @transform_1(%arg0: i32) -> (i32, i32) {
    %c0_i32 = arith.constant 0 : i32
    %c0_i32_0 = arith.constant 0 : i32
    %c0_i32_1 = arith.constant 0 : i32
    return %c0_i32, %c0_i32_0 : i32, i32
  }
  func.func @transform_2(%arg0: i32) -> (i32, i32) {
    %c0_i32 = arith.constant 0 : i32
    %c0_i32_0 = arith.constant 0 : i32
    %c0_i32_1 = arith.constant 0 : i32
    return %c0_i32, %c0_i32_0 : i32, i32
  }
  func.func @transform_3(%arg0: i32) -> (i32, i32) {
    %c0_i32 = arith.constant 0 : i32
    %c0_i32_0 = arith.constant 0 : i32
    %c0_i32_1 = arith.constant 0 : i32
    return %c0_i32, %c0_i32_0 : i32, i32
  }
  func.func @transform_4(%arg0: i32) -> (i32, i32) {
    %c0_i32 = arith.constant 0 : i32
    %c0_i32_0 = arith.constant 0 : i32
    %c0_i32_1 = arith.constant 0 : i32
    return %c0_i32, %c0_i32_0 : i32, i32
  }
  func.func @transform_5(%arg0: i32) -> (i32, i32) {
    %c0_i32 = arith.constant 0 : i32
    %c0_i32_0 = arith.constant 0 : i32
    %c0_i32_1 = arith.constant 0 : i32
    return %c0_i32, %c0_i32_0 : i32, i32
  }
  func.func @transform_6(%arg0: i32) -> (i32, i32) {
    %c0_i32 = arith.constant 0 : i32
    %c0_i32_0 = arith.constant 0 : i32
    %c0_i32_1 = arith.constant 0 : i32
    return %c0_i32, %c0_i32_0 : i32, i32
  }
  func.func @transform_7(%arg0: i32) -> (i32, i32) {
    %c0_i32 = arith.constant 0 : i32
    %c0_i32_0 = arith.constant 0 : i32
    %c0_i32_1 = arith.constant 0 : i32
    return %c0_i32, %c0_i32_0 : i32, i32
  }
  func.func @transform_8(%arg0: i32) -> (i32, i32) {
    %c0_i32 = arith.constant 0 : i32
    %c0_i32_0 = arith.constant 0 : i32
    %c0_i32_1 = arith.constant 0 : i32
    return %c0_i32, %c0_i32_0 : i32, i32
  }
  func.func @transform_9(%arg0: i32) -> (i32, i32) {
    %c0_i32 = arith.constant 0 : i32
    %c0_i32_0 = arith.constant 0 : i32
    %c0_i32_1 = arith.constant 0 : i32
    return %c0_i32, %c0_i32_0 : i32, i32
  }
  func.func @transform_10(%arg0: i32) -> (i32, i32) {
    %c0_i32 = arith.constant 0 : i32
    %c0_i32_0 = arith.constant 0 : i32
    %c0_i32_1 = arith.constant 0 : i32
    return %c0_i32, %c0_i32_0 : i32, i32
  }
  func.func @transform_11(%arg0: i32) -> (i32, i32) {
    %c0_i32 = arith.constant 0 : i32
    %c0_i32_0 = arith.constant 0 : i32
    %c0_i32_1 = arith.constant 0 : i32
    return %c0_i32, %c0_i32_0 : i32, i32
  }
  func.func @transform_12(%arg0: i32) -> (i32, i32) {
    %c0_i32 = arith.constant 0 : i32
    %c0_i32_0 = arith.constant 0 : i32
    %c0_i32_1 = arith.constant 0 : i32
    return %c0_i32, %c0_i32_0 : i32, i32
  }
  func.func @transform_13(%arg0: i32) -> (i32, i32) {
    %c0_i32 = arith.constant 0 : i32
    %c0_i32_0 = arith.constant 0 : i32
    %c0_i32_1 = arith.constant 0 : i32
    return %c0_i32, %c0_i32_0 : i32, i32
  }
}

</mosaic_0001>

<llo_original>
// kernel: tpu_custom_call.1
$region0: #{tpu_custom_call.1}
  #allocation0 [shape = 'u32[]', space=smem, size = 0x4, offset = 0x4, fixed_abs, tag = 'smem constant byte address 0x4 - core index']
  #allocation1 [shape = 'u32[72,128]{1,0:T(1,128)}', space=vmem, size = 0x9000, scoped, tag = 'internal scratch']
  #allocation2 [shape = 'f32[2,34,4]{2,1,0:T(8,128)}', space=vmem, size = 0xa000, scoped, tag = 'scratch operand']
  #allocation3 [shape = 'f32[2,64,4]{2,1,0:T(8,128)}', space=vmem, size = 0x10000, scoped, tag = 'scratch operand']
  #allocation4 [shape = 'f32[2,32,8]{2,1,0:T(8,128)}', space=vmem, size = 0x8000, scoped, tag = 'scratch operand']
  #allocation5 [shape = 'f32[2,128]{1,0:T(2,128)}', space=vmem, size = 0x400, scoped, tag = 'scratch operand']
  %s0 = inlined_call_operand.vmem [shape: f32[2,66,1], index: 0, kind: input, shape index: {}]
  %s1 = inlined_call_operand.hbm [shape: f32[3,4], index: 1, kind: input, shape index: {}]
  %s2 = inlined_call_operand.hbm [shape: f32[1,4], index: 2, kind: input, shape index: {}]
  %s3 = inlined_call_operand.hbm [shape: f32[1,4], index: 3, kind: input, shape index: {}]
  %s4 = inlined_call_operand.hbm [shape: f32[1,4], index: 4, kind: input, shape index: {}]
  %s5 = inlined_call_operand.vmem [shape: f32[12,8], index: 5, kind: input, shape index: {}]
  %s6 = inlined_call_operand.hbm [shape: f32[1,8], index: 6, kind: input, shape index: {}]
  %s7 = inlined_call_operand.hbm [shape: f32[1,8], index: 7, kind: input, shape index: {}]
  %s8 = inlined_call_operand.hbm [shape: f32[1,8], index: 8, kind: input, shape index: {}]
  %s9 = inlined_call_operand.hbm [shape: f32[128,4096], index: 9, kind: input, shape index: {}]
  %s10 = inlined_call_operand.hbm [shape: f32[1,4096], index: 10, kind: input, shape index: {}]
  %s11 = inlined_call_operand.hbm [shape: f32[4,4096], index: 11, kind: input, shape index: {}]
  %s12 = inlined_call_operand.hbm [shape: f32[1,4], index: 12, kind: input, shape index: {}]
  %s13 = inlined_call_operand.hbm [shape: f32[2,4], index: 13, kind: output, shape index: {}]
  %s14 = sld [smem:[#allocation0]]
  $region106: #{tpu_custom_call.1} parent=0
    _
  %s16 = ssub.s32 1, %s14
  %s17 = scalar_select 0, %s16, %s14
  $region1: #{tpu_custom_call.1} parent=0
    #allocation6 [shape = 'u8[2048]{0}', space=vmem, size = 0x800, scoped, tag = 'input window, operand 1, single buffered']
    #allocation7 [shape = 's32[1]{0}', space=sflag, size = 0x4, scoped, tag = 'scoped memory for tpu_custom_call.1']
    #allocation8 [shape = 's32[1]{0}', space=sflag, size = 0x4, scoped, tag = 'scoped memory for tpu_custom_call.1']
    #allocation9 [shape = 'u8[512]{0}', space=vmem, size = 0x400, scoped, tag = 'input window, operand 2, single buffered']
    #allocation10 [shape = 's32[1]{0}', space=sflag, size = 0x4, scoped, tag = 'scoped memory for tpu_custom_call.1']
    #allocation11 [shape = 'u8[512]{0}', space=vmem, size = 0x400, scoped, tag = 'input window, operand 3, single buffered']
    #allocation12 [shape = 'u8[512]{0}', space=vmem, size = 0x400, scoped, tag = 'input window, operand 4, single buffered']
    #allocation13 [shape = 's32[1]{0}', space=sflag, size = 0x4, scoped, tag = 'scoped memory for tpu_custom_call.1']
    #allocation14 [shape = 'u8[512]{0}', space=vmem, size = 0x400, scoped, tag = 'input window, operand 6, single buffered']
    #allocation15 [shape = 'u8[512]{0}', space=vmem, size = 0x400, scoped, tag = 'input window, operand 7, single buffered']
    #allocation16 [shape = 's32[1]{0}', space=sflag, size = 0x4, scoped, tag = 'scoped memory for tpu_custom_call.1']
    #allocation17 [shape = 'u8[512]{0}', space=vmem, size = 0x400, scoped, tag = 'input window, operand 8, single buffered']
    #allocation18 [shape = 'u8[2097152]{0}', space=vmem, size = 0x200000, scoped, tag = 'input window, operand 9, single buffered']
    #allocation19 [shape = 's32[1]{0}', space=sflag, size = 0x4, scoped, tag = 'scoped memory for tpu_custom_call.1']
    #allocation20 [shape = 'u8[16384]{0}', space=vmem, size = 0x4000, scoped, tag = 'input window, operand 10, single buffered']
    #allocation21 [shape = 'u8[65536]{0}', space=vmem, size = 0x10000, scoped, tag = 'input window, operand 11, single buffered']
    #allocation22 [shape = 's32[1]{0}', space=sflag, size = 0x4, scoped, tag = 'scoped memory for tpu_custom_call.1']
    #allocation23 [shape = 'u8[512]{0}', space=vmem, size = 0x400, scoped, tag = 'input window, operand 12, single buffered']
    #allocation24 [shape = 'u8[1024]{0}', space=vmem, size = 0x400, scoped, tag = 'output window, operand 0, single buffered']
    %18 = vsyncpa [#allocation7], 0
    %19 = vsyncpa [#allocation10], 0
    %20 = vsyncpa [#allocation13], 0
    %21 = vsyncpa [#allocation16], 0
    %22 = vsyncpa [#allocation19], 0
    %23 = vsyncpa [#allocation22], 0
    %24 = vsyncpa [#allocation8], 0
    // Predicated region
    $region2: #{tpu_custom_call.1} parent=1 // pred_check
      _
    $region3: #{tpu_custom_call.1} parent=1 // pred_check_branch
      %26 = sbr.rel (0) target = $region5
    $region4: #{tpu_custom_call.1} parent=1 // pred_region
      _
    $region5: #{tpu_custom_call.1} parent=1 // pred_fallthru
      _
    // Predicated region
    $region6: #{tpu_custom_call.1} parent=1 // pred_check
      _
    $region7: #{tpu_custom_call.1} parent=1 // pred_check_branch
      %28 = sbr.rel (0) target = $region9
    $region8: #{tpu_custom_call.1} parent=1 // pred_region
      %30 = vsyncadd [#allocation7], 0
      %s32 = sshll.u32 %s1, 4
      %s33 = int_to_ptr.hbm [resolvable:$true] %s32
      %s34 = sshll.u32 [#allocation6], 4
      %s35 = int_to_ptr.vmem [resolvable:$true] %s34
      %37 = dma.hbm_to_vmem [thread:$0]  %s33, 64, %s35, [#allocation7]
    $region9: #{tpu_custom_call.1} parent=1 // pred_fallthru
      _
    // Predicated region
    $region10: #{tpu_custom_call.1} parent=1 // pred_check
      _
    $region11: #{tpu_custom_call.1} parent=1 // pred_check_branch
      %39 = sbr.rel (0) target = $region13
    $region12: #{tpu_custom_call.1} parent=1 // pred_region
      %41 = vsyncadd [#allocation10], 0
      %s43 = sshll.u32 %s2, 4
      %s44 = int_to_ptr.hbm [resolvable:$true] %s43
      %s45 = sshll.u32 [#allocation9], 4
      %s46 = int_to_ptr.vmem [resolvable:$true] %s45
      %48 = dma.hbm_to_vmem [thread:$0]  %s44, 16, %s46, [#allocation10]
    $region13: #{tpu_custom_call.1} parent=1 // pred_fallthru
      _
    // Predicated region
    $region14: #{tpu_custom_call.1} parent=1 // pred_check
      _
    $region15: #{tpu_custom_call.1} parent=1 // pred_check_branch
      %50 = sbr.rel (0) target = $region17
    $region16: #{tpu_custom_call.1} parent=1 // pred_region
      %52 = vsyncadd [#allocation10], 0
      %s54 = sshll.u32 %s3, 4
      %s55 = int_to_ptr.hbm [resolvable:$true] %s54
      %s56 = sshll.u32 [#allocation11], 4
      %s57 = int_to_ptr.vmem [resolvable:$true] %s56
      %59 = dma.hbm_to_vmem [thread:$0]  %s55, 16, %s57, [#allocation10]
    $region17: #{tpu_custom_call.1} parent=1 // pred_fallthru
      _
    // Predicated region
    $region18: #{tpu_custom_call.1} parent=1 // pred_check
      _
    $region19: #{tpu_custom_call.1} parent=1 // pred_check_branch
      %61 = sbr.rel (0) target = $region21
    $region20: #{tpu_custom_call.1} parent=1 // pred_region
      %63 = vsyncadd [#allocation13], 0
      %s65 = sshll.u32 %s4, 4
      %s66 = int_to_ptr.hbm [resolvable:$true] %s65
      %s67 = sshll.u32 [#allocation12], 4
      %s68 = int_to_ptr.vmem [resolvable:$true] %s67
      %70 = dma.hbm_to_vmem [thread:$0]  %s66, 16, %s68, [#allocation13]
    $region21: #{tpu_custom_call.1} parent=1 // pred_fallthru
      _
    // Predicated region
    $region22: #{tpu_custom_call.1} parent=1 // pred_check
      _
    $region23: #{tpu_custom_call.1} parent=1 // pred_check_branch
      %72 = sbr.rel (0) target = $region25
    $region24: #{tpu_custom_call.1} parent=1 // pred_region
      _
    $region25: #{tpu_custom_call.1} parent=1 // pred_fallthru
      _
    // Predicated region
    $region26: #{tpu_custom_call.1} parent=1 // pred_check
      _
    $region27: #{tpu_custom_call.1} parent=1 // pred_check_branch
      %74 = sbr.rel (0) target = $region29
    $region28: #{tpu_custom_call.1} parent=1 // pred_region
      %76 = vsyncadd [#allocation13], 0
      %s78 = sshll.u32 %s6, 4
      %s79 = int_to_ptr.hbm [resolvable:$true] %s78
      %s80 = sshll.u32 [#allocation14], 4
      %s81 = int_to_ptr.vmem [resolvable:$true] %s80
      %83 = dma.hbm_to_vmem [thread:$0]  %s79, 16, %s81, [#allocation13]
    $region29: #{tpu_custom_call.1} parent=1 // pred_fallthru
      _
    // Predicated region
    $region30: #{tpu_custom_call.1} parent=1 // pred_check
      _
    $region31: #{tpu_custom_call.1} parent=1 // pred_check_branch
      %85 = sbr.rel (0) target = $region33
    $region32: #{tpu_custom_call.1} parent=1 // pred_region
      %87 = vsyncadd [#allocation16], 0
      %s89 = sshll.u32 %s7, 4
      %s90 = int_to_ptr.hbm [resolvable:$true] %s89
      %s91 = sshll.u32 [#allocation15], 4
      %s92 = int_to_ptr.vmem [resolvable:$true] %s91
      %94 = dma.hbm_to_vmem [thread:$0]  %s90, 16, %s92, [#allocation16]
    $region33: #{tpu_custom_call.1} parent=1 // pred_fallthru
      _
    // Predicated region
    $region34: #{tpu_custom_call.1} parent=1 // pred_check
      _
    $region35: #{tpu_custom_call.1} parent=1 // pred_check_branch
      %96 = sbr.rel (0) target = $region37
    $region36: #{tpu_custom_call.1} parent=1 // pred_region
      %98 = vsyncadd [#allocation16], 0
      %s100 = sshll.u32 %s8, 4
      %s101 = int_to_ptr.hbm [resolvable:$true] %s100
      %s102 = sshll.u32 [#allocation17], 4
      %s103 = int_to_ptr.vmem [resolvable:$true] %s102
      %105 = dma.hbm_to_vmem [thread:$0]  %s101, 16, %s103, [#allocation16]
    $region37: #{tpu_custom_call.1} parent=1 // pred_fallthru
      _
    // Predicated region
    $region38: #{tpu_custom_call.1} parent=1 // pred_check
      _
    $region39: #{tpu_custom_call.1} parent=1 // pred_check_branch
      %107 = sbr.rel (0) target = $region41
    $region40: #{tpu_custom_call.1} parent=1 // pred_region
      %109 = vsyncadd [#allocation19], 0
      %s110 = sshll.u32 %s9, 4
      %s111 = int_to_ptr.hbm [resolvable:$true] %s110
      %s112 = sshll.u32 [#allocation18], 4
      %s113 = int_to_ptr.vmem [resolvable:$true] %s112
      %118 = dma.hbm_to_vmem [thread:$0]  %s111, 65536, %s113, [#allocation19], 4096, 4096, 256
    $region41: #{tpu_custom_call.1} parent=1 // pred_fallthru
      _
    // Predicated region
    $region42: #{tpu_custom_call.1} parent=1 // pred_check
      _
    $region43: #{tpu_custom_call.1} parent=1 // pred_check_branch
      %120 = sbr.rel (0) target = $region45
    $region44: #{tpu_custom_call.1} parent=1 // pred_region
      %122 = vsyncadd [#allocation19], 0
      %s124 = sshll.u32 %s10, 4
      %s125 = int_to_ptr.hbm [resolvable:$true] %s124
      %s126 = sshll.u32 [#allocation20], 4
      %s127 = int_to_ptr.vmem [resolvable:$true] %s126
      %129 = dma.hbm_to_vmem [thread:$0]  %s125, 512, %s127, [#allocation19]
    $region45: #{tpu_custom_call.1} parent=1 // pred_fallthru
      _
    // Predicated region
    $region46: #{tpu_custom_call.1} parent=1 // pred_check
      _
    $region47: #{tpu_custom_call.1} parent=1 // pred_check_branch
      %131 = sbr.rel (0) target = $region49
    $region48: #{tpu_custom_call.1} parent=1 // pred_region
      %133 = vsyncadd [#allocation22], 0
      %s135 = sshll.u32 %s11, 4
      %s136 = int_to_ptr.hbm [resolvable:$true] %s135
      %s137 = sshll.u32 [#allocation21], 4
      %s138 = int_to_ptr.vmem [resolvable:$true] %s137
      %140 = dma.hbm_to_vmem [thread:$0]  %s136, 2048, %s138, [#allocation22]
    $region49: #{tpu_custom_call.1} parent=1 // pred_fallthru
      _
    // Predicated region
    $region50: #{tpu_custom_call.1} parent=1 // pred_check
      _
    $region51: #{tpu_custom_call.1} parent=1 // pred_check_branch
      %142 = sbr.rel (0) target = $region53
    $region52: #{tpu_custom_call.1} parent=1 // pred_region
      %144 = vsyncadd [#allocation22], 0
      %s146 = sshll.u32 %s12, 4
      %s147 = int_to_ptr.hbm [resolvable:$true] %s146
      %s148 = sshll.u32 [#allocation23], 4
      %s149 = int_to_ptr.vmem [resolvable:$true] %s148
      %151 = dma.hbm_to_vmem [thread:$0]  %s147, 16, %s149, [#allocation22]
    $region53: #{tpu_custom_call.1} parent=1 // pred_fallthru
      _
    // Predicated region
    $region54: #{tpu_custom_call.1} parent=1 // pred_check
      _
    $region55: #{tpu_custom_call.1} parent=1 // pred_check_branch
      %153 = sbr.rel (0) target = $region57
    $region56: #{tpu_custom_call.1} parent=1 // pred_region
      %155 = dma.done [#allocation7], 64
    $region57: #{tpu_custom_call.1} parent=1 // pred_fallthru
      _
    // Predicated region
    $region58: #{tpu_custom_call.1} parent=1 // pred_check
      _
    $region59: #{tpu_custom_call.1} parent=1 // pred_check_branch
      %157 = sbr.rel (0) target = $region61
    $region60: #{tpu_custom_call.1} parent=1 // pred_region
      %159 = dma.done [#allocation10], 16
    $region61: #{tpu_custom_call.1} parent=1 // pred_fallthru
      _
    // Predicated region
    $region62: #{tpu_custom_call.1} parent=1 // pred_check
      _
    $region63: #{tpu_custom_call.1} parent=1 // pred_check_branch
      %161 = sbr.rel (0) target = $region65
    $region64: #{tpu_custom_call.1} parent=1 // pred_region
      %163 = dma.done [#allocation10], 16
    $region65: #{tpu_custom_call.1} parent=1 // pred_fallthru
      _
    // Predicated region
    $region66: #{tpu_custom_call.1} parent=1 // pred_check
      _
    $region67: #{tpu_custom_call.1} parent=1 // pred_check_branch
      %165 = sbr.rel (0) target = $region69
    $region68: #{tpu_custom_call.1} parent=1 // pred_region
      %167 = dma.done [#allocation13], 16
    $region69: #{tpu_custom_call.1} parent=1 // pred_fallthru
      _
    // Predicated region
    $region70: #{tpu_custom_call.1} parent=1 // pred_check
      _
    $region71: #{tpu_custom_call.1} parent=1 // pred_check_branch
      %169 = sbr.rel (0) target = $region73
    $region72: #{tpu_custom_call.1} parent=1 // pred_region
      %171 = dma.done [#allocation13], 16
    $region73: #{tpu_custom_call.1} parent=1 // pred_fallthru
      _
    // Predicated region
    $region74: #{tpu_custom_call.1} parent=1 // pred_check
      _
    $region75: #{tpu_custom_call.1} parent=1 // pred_check_branch
      %173 = sbr.rel (0) target = $region77
    $region76: #{tpu_custom_call.1} parent=1 // pred_region
      %175 = dma.done [#allocation16], 16
    $region77: #{tpu_custom_call.1} parent=1 // pred_fallthru
      _
    // Predicated region
    $region78: #{tpu_custom_call.1} parent=1 // pred_check
      _
    $region79: #{tpu_custom_call.1} parent=1 // pred_check_branch
      %177 = sbr.rel (0) target = $region81
    $region80: #{tpu_custom_call.1} parent=1 // pred_region
      %179 = dma.done [#allocation16], 16
    $region81: #{tpu_custom_call.1} parent=1 // pred_fallthru
      _
    // Predicated region
    $region82: #{tpu_custom_call.1} parent=1 // pred_check
      _
    $region83: #{tpu_custom_call.1} parent=1 // pred_check_branch
      %181 = sbr.rel (0) target = $region85
    $region84: #{tpu_custom_call.1} parent=1 // pred_region
      %183 = dma.done [#allocation19], 65536
    $region85: #{tpu_custom_call.1} parent=1 // pred_fallthru
      _
    // Predicated region
    $region86: #{tpu_custom_call.1} parent=1 // pred_check
      _
    $region87: #{tpu_custom_call.1} parent=1 // pred_check_branch
      %185 = sbr.rel (0) target = $region89
    $region88: #{tpu_custom_call.1} parent=1 // pred_region
      %187 = dma.done [#allocation19], 512
    $region89: #{tpu_custom_call.1} parent=1 // pred_fallthru
      _
    // Predicated region
    $region90: #{tpu_custom_call.1} parent=1 // pred_check
      _
    $region91: #{tpu_custom_call.1} parent=1 // pred_check_branch
      %189 = sbr.rel (0) target = $region93
    $region92: #{tpu_custom_call.1} parent=1 // pred_region
      %191 = dma.done [#allocation22], 2048
    $region93: #{tpu_custom_call.1} parent=1 // pred_fallthru
      _
    // Predicated region
    $region94: #{tpu_custom_call.1} parent=1 // pred_check
      _
    $region95: #{tpu_custom_call.1} parent=1 // pred_check_branch
      %193 = sbr.rel (0) target = $region97
    $region96: #{tpu_custom_call.1} parent=1 // pred_region
      %195 = dma.done [#allocation22], 16
    $region97: #{tpu_custom_call.1} parent=1 // pred_fallthru
      _
    %v196 = vld [vmem:[%s0] sm:$0xff]
    %v197 = vld [vmem:[%s0 + $0x8] sm:$0xff]
    %v198 = vld [vmem:[%s0 + $0x10] sm:$0xff]
    %v199 = vld [vmem:[%s0 + $0x18] sm:$0xff]
    %v200 = vld [vmem:[%s0 + $0x20] sm:$0xff]
    %v201 = vld [vmem:[%s0 + $0x28] sm:$0xff]
    %v202 = vld [vmem:[%s0 + $0x30] sm:$0xff]
    %v203 = vld [vmem:[%s0 + $0x38] sm:$0xff]
    %v204 = vld [vmem:[%s0 + $0x48] sm:$0xff]
    %v205 = vld [vmem:[%s0 + $0x50] sm:$0xff]
    %v206 = vld [vmem:[%s0 + $0x58] sm:$0xff]
    %v207 = vld [vmem:[%s0 + $0x60] sm:$0xff]
    %v208 = vld [vmem:[%s0 + $0x68] sm:$0xff]
    %v209 = vld [vmem:[%s0 + $0x70] sm:$0xff]
    %v210 = vld [vmem:[%s0 + $0x78] sm:$0xff]
    %v211 = vld [vmem:[%s0 + $0x80] sm:$0xff]
    %v212 = vld [vmem:[#allocation6] sm:$0x1]
    %214 = vset.pattern.permute.xlu0 0
    %215 = vperm.xlu0 %214, %v196
    %v216 = vpop.permute.xlu0 %215
    %219 = vset.pattern.permute.xlu0 0
    %220 = vperm.xlu0 %219, %v197
    %v221 = vpop.permute.xlu0 %220
    %224 = vset.pattern.permute.xlu0 0
    %225 = vperm.xlu0 %224, %v198
    %v226 = vpop.permute.xlu0 %225
    %229 = vset.pattern.permute.xlu0 0
    %230 = vperm.xlu0 %229, %v199
    %v231 = vpop.permute.xlu0 %230
    %234 = vset.pattern.permute.xlu0 0
    %235 = vperm.xlu0 %234, %v200
    %v236 = vpop.permute.xlu0 %235
    %239 = vset.pattern.permute.xlu0 0
    %240 = vperm.xlu0 %239, %v201
    %v241 = vpop.permute.xlu0 %240
    %244 = vset.pattern.permute.xlu0 0
    %245 = vperm.xlu0 %244, %v202
    %v246 = vpop.permute.xlu0 %245
    %249 = vset.pattern.permute.xlu0 0
    %250 = vperm.xlu0 %249, %v203
    %v251 = vpop.permute.xlu0 %250
    %254 = vset.pattern.permute.xlu0 0
    %255 = vperm.xlu0 %254, %v204
    %v256 = vpop.permute.xlu0 %255
    %259 = vset.pattern.permute.xlu0 0
    %260 = vperm.xlu0 %259, %v205
    %v261 = vpop.permute.xlu0 %260
    %264 = vset.pattern.permute.xlu0 0
    %265 = vperm.xlu0 %264, %v206
    %v266 = vpop.permute.xlu0 %265
    %269 = vset.pattern.permute.xlu0 0
    %270 = vperm.xlu0 %269, %v207
    %v271 = vpop.permute.xlu0 %270
    %274 = vset.pattern.permute.xlu0 0
    %275 = vperm.xlu0 %274, %v208
    %v276 = vpop.permute.xlu0 %275
    %279 = vset.pattern.permute.xlu0 0
    %280 = vperm.xlu0 %279, %v209
    %v281 = vpop.permute.xlu0 %280
    %284 = vset.pattern.permute.xlu0 0
    %285 = vperm.xlu0 %284, %v210
    %v286 = vpop.permute.xlu0 %285
    %289 = vset.pattern.permute.xlu0 0
    %290 = vperm.xlu0 %289, %v211
    %v291 = vpop.permute.xlu0 %290
    %v293 = vperm.slane %v212, 0
    %v294 = vmul.f32 %v216, %v293
    %v295 = vmul.f32 %v221, %v293
    %v296 = vmul.f32 %v226, %v293
    %v297 = vmul.f32 %v231, %v293
    %v298 = vmul.f32 %v236, %v293
    %v299 = vmul.f32 %v241, %v293
    %v300 = vmul.f32 %v246, %v293
    %v301 = vmul.f32 %v251, %v293
    %v302 = vmul.f32 %v256, %v293
    %v303 = vmul.f32 %v261, %v293
    %v304 = vmul.f32 %v266, %v293
    %v305 = vmul.f32 %v271, %v293
    %v306 = vmul.f32 %v276, %v293
    %v307 = vmul.f32 %v281, %v293
    %v308 = vmul.f32 %v286, %v293
    %v309 = vmul.f32 %v291, %v293
    %v310 = vadd.f32 %v294, 0.0
    %v311 = vadd.f32 %v295, 0.0
    %v312 = vadd.f32 %v296, 0.0
    %v313 = vadd.f32 %v297, 0.0
    %v314 = vadd.f32 %v298, 0.0
    %v315 = vadd.f32 %v299, 0.0
    %v316 = vadd.f32 %v300, 0.0
    %v317 = vadd.f32 %v301, 0.0
    %v318 = vadd.f32 %v302, 0.0
    %v319 = vadd.f32 %v303, 0.0
    %v320 = vadd.f32 %v304, 0.0
    %v321 = vadd.f32 %v305, 0.0
    %v322 = vadd.f32 %v306, 0.0
    %v323 = vadd.f32 %v307, 0.0
    %v324 = vadd.f32 %v308, 0.0
    %v325 = vadd.f32 %v309, 0.0
    %v326 = vld [vmem:[%s0 + $0x1] sm:$0xff]
    %v327 = vld [vmem:[%s0 + $0x9] sm:$0xff]
    %v328 = vld [vmem:[%s0 + $0x11] sm:$0xff]
    %v329 = vld [vmem:[%s0 + $0x19] sm:$0xff]
    %v330 = vld [vmem:[%s0 + $0x21] sm:$0xff]
    %v331 = vld [vmem:[%s0 + $0x29] sm:$0xff]
    %v332 = vld [vmem:[%s0 + $0x31] sm:$0xff]
    %v333 = vld [vmem:[%s0 + $0x39] sm:$0xff]
    %v334 = vld [vmem:[%s0 + $0x49] sm:$0xff]
    %v335 = vld [vmem:[%s0 + $0x51] sm:$0xff]
    %v336 = vld [vmem:[%s0 + $0x59] sm:$0xff]
    %v337 = vld [vmem:[%s0 + $0x61] sm:$0xff]
    %v338 = vld [vmem:[%s0 + $0x69] sm:$0xff]
    %v339 = vld [vmem:[%s0 + $0x71] sm:$0xff]
    %v340 = vld [vmem:[%s0 + $0x79] sm:$0xff]
    %v341 = vld [vmem:[%s0 + $0x81] sm:$0xff]
    %v342 = vld [vmem:[#allocation6 + $0x1] sm:$0x1]
    %344 = vset.pattern.permute.xlu0 0
    %345 = vperm.xlu0 %344, %v326
    %v346 = vpop.permute.xlu0 %345
    %349 = vset.pattern.permute.xlu0 0
    %350 = vperm.xlu0 %349, %v327
    %v351 = vpop.permute.xlu0 %350
    %354 = vset.pattern.permute.xlu0 0
    %355 = vperm.xlu0 %354, %v328
    %v356 = vpop.permute.xlu0 %355
    %359 = vset.pattern.permute.xlu0 0
    %360 = vperm.xlu0 %359, %v329
    %v361 = vpop.permute.xlu0 %360
    %364 = vset.pattern.permute.xlu0 0
    %365 = vperm.xlu0 %364, %v330
    %v366 = vpop.permute.xlu0 %365
    %369 = vset.pattern.permute.xlu0 0
    %370 = vperm.xlu0 %369, %v331
    %v371 = vpop.permute.xlu0 %370
    %374 = vset.pattern.permute.xlu0 0
    %375 = vperm.xlu0 %374, %v332
    %v376 = vpop.permute.xlu0 %375
    %379 = vset.pattern.permute.xlu0 0
    %380 = vperm.xlu0 %379, %v333
    %v381 = vpop.permute.xlu0 %380
    %384 = vset.pattern.permute.xlu0 0
    %385 = vperm.xlu0 %384, %v334
    %v386 = vpop.permute.xlu0 %385
    %389 = vset.pattern.permute.xlu0 0
    %390 = vperm.xlu0 %389, %v335
    %v391 = vpop.permute.xlu0 %390
    %394 = vset.pattern.permute.xlu0 0
    %395 = vperm.xlu0 %394, %v336
    %v396 = vpop.permute.xlu0 %395
    %399 = vset.pattern.permute.xlu0 0
    %400 = vperm.xlu0 %399, %v337
    %v401 = vpop.permute.xlu0 %400
    %404 = vset.pattern.permute.xlu0 0
    %405 = vperm.xlu0 %404, %v338
    %v406 = vpop.permute.xlu0 %405
    %409 = vset.pattern.permute.xlu0 0
    %410 = vperm.xlu0 %409, %v339
    %v411 = vpop.permute.xlu0 %410
    %414 = vset.pattern.permute.xlu0 0
    %415 = vperm.xlu0 %414, %v340
    %v416 = vpop.permute.xlu0 %415
    %419 = vset.pattern.permute.xlu0 0
    %420 = vperm.xlu0 %419, %v341
    %v421 = vpop.permute.xlu0 %420
    %v423 = vperm.slane %v342, 0
    %v424 = vmul.f32 %v346, %v423
    %v425 = vmul.f32 %v351, %v423
    %v426 = vmul.f32 %v356, %v423
    %v427 = vmul.f32 %v361, %v423
    %v428 = vmul.f32 %v366, %v423
    %v429 = vmul.f32 %v371, %v423
    %v430 = vmul.f32 %v376, %v423
    %v431 = vmul.f32 %v381, %v423
    %v432 = vmul.f32 %v386, %v423
    %v433 = vmul.f32 %v391, %v423
    %v434 = vmul.f32 %v396, %v423
    %v435 = vmul.f32 %v401, %v423
    %v436 = vmul.f32 %v406, %v423
    %v437 = vmul.f32 %v411, %v423
    %v438 = vmul.f32 %v416, %v423
    %v439 = vmul.f32 %v421, %v423
    %v440 = vadd.f32 %v310, %v424
    %v441 = vadd.f32 %v311, %v425
    %v442 = vadd.f32 %v312, %v426
    %v443 = vadd.f32 %v313, %v427
    %v444 = vadd.f32 %v314, %v428
    %v445 = vadd.f32 %v315, %v429
    %v446 = vadd.f32 %v316, %v430
    %v447 = vadd.f32 %v317, %v431
    %v448 = vadd.f32 %v318, %v432
    %v449 = vadd.f32 %v319, %v433
    %v450 = vadd.f32 %v320, %v434
    %v451 = vadd.f32 %v321, %v435
    %v452 = vadd.f32 %v322, %v436
    %v453 = vadd.f32 %v323, %v437
    %v454 = vadd.f32 %v324, %v438
    %v455 = vadd.f32 %v325, %v439
    %v456 = vld [vmem:[%s0 + $0x2] sm:$0xff]
    %v457 = vld [vmem:[%s0 + $0xa] sm:$0xff]
    %v458 = vld [vmem:[%s0 + $0x12] sm:$0xff]
    %v459 = vld [vmem:[%s0 + $0x1a] sm:$0xff]
    %v460 = vld [vmem:[%s0 + $0x22] sm:$0xff]
    %v461 = vld [vmem:[%s0 + $0x2a] sm:$0xff]
    %v462 = vld [vmem:[%s0 + $0x32] sm:$0xff]
    %v463 = vld [vmem:[%s0 + $0x3a] sm:$0xff]
    %v464 = vld [vmem:[%s0 + $0x4a] sm:$0xff]
    %v465 = vld [vmem:[%s0 + $0x52] sm:$0xff]
    %v466 = vld [vmem:[%s0 + $0x5a] sm:$0xff]
    %v467 = vld [vmem:[%s0 + $0x62] sm:$0xff]
    %v468 = vld [vmem:[%s0 + $0x6a] sm:$0xff]
    %v469 = vld [vmem:[%s0 + $0x72] sm:$0xff]
    %v470 = vld [vmem:[%s0 + $0x7a] sm:$0xff]
    %v471 = vld [vmem:[%s0 + $0x82] sm:$0xff]
    %v472 = vld [vmem:[#allocation6 + $0x2] sm:$0x1]
    %474 = vset.pattern.permute.xlu0 0
    %475 = vperm.xlu0 %474, %v456
    %v476 = vpop.permute.xlu0 %475
    %479 = vset.pattern.permute.xlu0 0
    %480 = vperm.xlu0 %479, %v457
    %v481 = vpop.permute.xlu0 %480
    %484 = vset.pattern.permute.xlu0 0
    %485 = vperm.xlu0 %484, %v458
    %v486 = vpop.permute.xlu0 %485
    %489 = vset.pattern.permute.xlu0 0
    %490 = vperm.xlu0 %489, %v459
    %v491 = vpop.permute.xlu0 %490
    %494 = vset.pattern.permute.xlu0 0
    %495 = vperm.xlu0 %494, %v460
    %v496 = vpop.permute.xlu0 %495
    %499 = vset.pattern.permute.xlu0 0
    %500 = vperm.xlu0 %499, %v461
    %v501 = vpop.permute.xlu0 %500
    %504 = vset.pattern.permute.xlu0 0
    %505 = vperm.xlu0 %504, %v462
    %v506 = vpop.permute.xlu0 %505
    %509 = vset.pattern.permute.xlu0 0
    %510 = vperm.xlu0 %509, %v463
    %v511 = vpop.permute.xlu0 %510
    %514 = vset.pattern.permute.xlu0 0
    %515 = vperm.xlu0 %514, %v464
    %v516 = vpop.permute.xlu0 %515
    %519 = vset.pattern.permute.xlu0 0
    %520 = vperm.xlu0 %519, %v465
    %v521 = vpop.permute.xlu0 %520
    %524 = vset.pattern.permute.xlu0 0
    %525 = vperm.xlu0 %524, %v466
    %v526 = vpop.permute.xlu0 %525
    %529 = vset.pattern.permute.xlu0 0
    %530 = vperm.xlu0 %529, %v467
    %v531 = vpop.permute.xlu0 %530
    %534 = vset.pattern.permute.xlu0 0
    %535 = vperm.xlu0 %534, %v468
    %v536 = vpop.permute.xlu0 %535
    %539 = vset.pattern.permute.xlu0 0
    %540 = vperm.xlu0 %539, %v469
    %v541 = vpop.permute.xlu0 %540
    %544 = vset.pattern.permute.xlu0 0
    %545 = vperm.xlu0 %544, %v470
    %v546 = vpop.permute.xlu0 %545
    %549 = vset.pattern.permute.xlu0 0
    %550 = vperm.xlu0 %549, %v471
    %v551 = vpop.permute.xlu0 %550
    %v553 = vperm.slane %v472, 0
    %v554 = vmul.f32 %v476, %v553
    %v555 = vmul.f32 %v481, %v553
    %v556 = vmul.f32 %v486, %v553
    %v557 = vmul.f32 %v491, %v553
    %v558 = vmul.f32 %v496, %v553
    %v559 = vmul.f32 %v501, %v553
    %v560 = vmul.f32 %v506, %v553
    %v561 = vmul.f32 %v511, %v553
    %v562 = vmul.f32 %v516, %v553
    %v563 = vmul.f32 %v521, %v553
    %v564 = vmul.f32 %v526, %v553
    %v565 = vmul.f32 %v531, %v553
    %v566 = vmul.f32 %v536, %v553
    %v567 = vmul.f32 %v541, %v553
    %v568 = vmul.f32 %v546, %v553
    %v569 = vmul.f32 %v551, %v553
    %v570 = vadd.f32 %v440, %v554
    %v571 = vadd.f32 %v441, %v555
    %v572 = vadd.f32 %v442, %v556
    %v573 = vadd.f32 %v443, %v557
    %v574 = vadd.f32 %v444, %v558
    %v575 = vadd.f32 %v445, %v559
    %v576 = vadd.f32 %v446, %v560
    %v577 = vadd.f32 %v447, %v561
    %v578 = vadd.f32 %v448, %v562
    %v579 = vadd.f32 %v449, %v563
    %v580 = vadd.f32 %v450, %v564
    %v581 = vadd.f32 %v451, %v565
    %v582 = vadd.f32 %v452, %v566
    %v583 = vadd.f32 %v453, %v567
    %v584 = vadd.f32 %v454, %v568
    %v585 = vadd.f32 %v455, %v569
    %v586 = vld [vmem:[#allocation9] sm:$0x1]
    %v588 = vperm.slane %v586, 0
    %v590 = vadd.f32 %v570, %v588
    %v591 = vadd.f32 %v571, %v588
    %v592 = vadd.f32 %v572, %v588
    %v593 = vadd.f32 %v573, %v588
    %v594 = vadd.f32 %v574, %v588
    %v595 = vadd.f32 %v575, %v588
    %v596 = vadd.f32 %v576, %v588
    %v597 = vadd.f32 %v577, %v588
    %v598 = vadd.f32 %v578, %v588
    %v599 = vadd.f32 %v579, %v588
    %v600 = vadd.f32 %v580, %v588
    %v601 = vadd.f32 %v581, %v588
    %v602 = vadd.f32 %v582, %v588
    %v603 = vadd.f32 %v583, %v588
    %v604 = vadd.f32 %v584, %v588
    %v605 = vadd.f32 %v585, %v588
    %v606 = vmax.f32 %v590, 0.0
    %v607 = vmax.f32 %v591, 0.0
    %v608 = vmax.f32 %v592, 0.0
    %v609 = vmax.f32 %v593, 0.0
    %v610 = vmax.f32 %v594, 0.0
    %v611 = vmax.f32 %v595, 0.0
    %v612 = vmax.f32 %v596, 0.0
    %v613 = vmax.f32 %v597, 0.0
    %v614 = vmax.f32 %v598, 0.0
    %v615 = vmax.f32 %v599, 0.0
    %v616 = vmax.f32 %v600, 0.0
    %v617 = vmax.f32 %v601, 0.0
    %v618 = vmax.f32 %v602, 0.0
    %v619 = vmax.f32 %v603, 0.0
    %v620 = vmax.f32 %v604, 0.0
    %v621 = vmax.f32 %v605, 0.0
    %vm622 = vcmask 31744
    %623 = vst.msk [vmem:[#allocation3] sm:$0xff] %vm622, %v606
    %624 = vst.msk [vmem:[#allocation3 + $0x8] sm:$0xff] %vm622, %v607
    %625 = vst.msk [vmem:[#allocation3 + $0x10] sm:$0xff] %vm622, %v608
    %626 = vst.msk [vmem:[#allocation3 + $0x18] sm:$0xff] %vm622, %v609
    %627 = vst.msk [vmem:[#allocation3 + $0x20] sm:$0xff] %vm622, %v610
    %628 = vst.msk [vmem:[#allocation3 + $0x28] sm:$0xff] %vm622, %v611
    %629 = vst.msk [vmem:[#allocation3 + $0x30] sm:$0xff] %vm622, %v612
    %630 = vst.msk [vmem:[#allocation3 + $0x38] sm:$0xff] %vm622, %v613
    %631 = vst.msk [vmem:[#allocation3 + $0x40] sm:$0xff] %vm622, %v614
    %632 = vst.msk [vmem:[#allocation3 + $0x48] sm:$0xff] %vm622, %v615
    %633 = vst.msk [vmem:[#allocation3 + $0x50] sm:$0xff] %vm622, %v616
    %634 = vst.msk [vmem:[#allocation3 + $0x58] sm:$0xff] %vm622, %v617
    %635 = vst.msk [vmem:[#allocation3 + $0x60] sm:$0xff] %vm622, %v618
    %636 = vst.msk [vmem:[#allocation3 + $0x68] sm:$0xff] %vm622, %v619
    %637 = vst.msk [vmem:[#allocation3 + $0x70] sm:$0xff] %vm622, %v620
    %638 = vst.msk [vmem:[#allocation3 + $0x78] sm:$0xff] %vm622, %v621
    %v639 = vld [vmem:[#allocation3] ss:$2 sm:$0xff]
    %s640 = scalar_lea.vmem [#allocation3], 16
    %v641 = vld [vmem:[%s640] ss:$2 sm:$0xff]
    %s642 = scalar_lea.vmem [#allocation3], 32
    %v643 = vld [vmem:[%s642] ss:$2 sm:$0xff]
    %s644 = scalar_lea.vmem [#allocation3], 48
    %v645 = vld [vmem:[%s644] ss:$2 sm:$0xff]
    %s646 = scalar_lea.vmem [#allocation3], 64
    %v647 = vld [vmem:[%s646] ss:$2 sm:$0xff]
    %s648 = scalar_lea.vmem [#allocation3], 80
    %v649 = vld [vmem:[%s648] ss:$2 sm:$0xff]
    %s650 = scalar_lea.vmem [#allocation3], 96
    %v651 = vld [vmem:[%s650] ss:$2 sm:$0xff]
    %s652 = scalar_lea.vmem [#allocation3], 112
    %v653 = vld [vmem:[%s652] ss:$2 sm:$0xff]
    %s654 = scalar_lea.vmem [#allocation3], 1
    %v655 = vld [vmem:[%s654] ss:$2 sm:$0xff]
    %s656 = scalar_lea.vmem [#allocation3], 17
    %v657 = vld [vmem:[%s656] ss:$2 sm:$0xff]
    %s658 = scalar_lea.vmem [#allocation3], 33
    %v659 = vld [vmem:[%s658] ss:$2 sm:$0xff]
    %s660 = scalar_lea.vmem [#allocation3], 49
    %v661 = vld [vmem:[%s660] ss:$2 sm:$0xff]
    %s662 = scalar_lea.vmem [#allocation3], 65
    %v663 = vld [vmem:[%s662] ss:$2 sm:$0xff]
    %s664 = scalar_lea.vmem [#allocation3], 81
    %v665 = vld [vmem:[%s664] ss:$2 sm:$0xff]
    %s666 = scalar_lea.vmem [#allocation3], 97
    %v667 = vld [vmem:[%s666] ss:$2 sm:$0xff]
    %s668 = scalar_lea.vmem [#allocation3], 113
    %v669 = vld [vmem:[%s668] ss:$2 sm:$0xff]
    %v670 = vadd.f32 %v639, %v655
    %v671 = vadd.f32 %v641, %v657
    %v672 = vadd.f32 %v643, %v659
    %v673 = vadd.f32 %v645, %v661
    %v674 = vadd.f32 %v647, %v663
    %v675 = vadd.f32 %v649, %v665
    %v676 = vadd.f32 %v651, %v667
    %v677 = vadd.f32 %v653, %v669
    %v678 = vmul.f32 %v670, 0.5
    %v679 = vmul.f32 %v671, 0.5
    %v680 = vmul.f32 %v672, 0.5
    %v681 = vmul.f32 %v673, 0.5
    %v682 = vmul.f32 %v674, 0.5
    %v683 = vmul.f32 %v675, 0.5
    %v684 = vmul.f32 %v676, 0.5
    %v685 = vmul.f32 %v677, 0.5
    %v686 = vsel %vm622, %v678, 0.0
    %v687 = vsel %vm622, %v679, 0.0
    %v688 = vadd.f32 %v686, %v687
    %v689 = vsel %vm622, %v680, 0.0
    %v690 = vadd.f32 %v688, %v689
    %v691 = vsel %vm622, %v681, 0.0
    %v692 = vadd.f32 %v690, %v691
    %v693 = vrot.slane %v692, 4
    %v694 = vadd.f32 %v692, %v693
    %v695 = vrot.slane %v694, 2
    %v696 = vadd.f32 %v694, %v695
    %v697 = vrot.slane %v696, 1
    %v698 = vadd.f32 %v696, %v697
    %v699 = vsel %vm622, %v682, 0.0
    %v700 = vsel %vm622, %v683, 0.0
    %v701 = vadd.f32 %v699, %v700
    %v702 = vsel %vm622, %v684, 0.0
    %v703 = vadd.f32 %v701, %v702
    %v704 = vsel %vm622, %v685, 0.0
    %v705 = vadd.f32 %v703, %v704
    %v706 = vrot.slane %v705, 4
    %v707 = vadd.f32 %v705, %v706
    %v708 = vrot.slane %v707, 2
    %v709 = vadd.f32 %v707, %v708
    %v710 = vrot.slane %v709, 1
    %v711 = vadd.f32 %v709, %v710
    %v712 = vsel %vm622, %v698, 0.0
    %v713 = vsel %vm622, %v711, 0.0
    %v714 = vadd.f32 %v712, %v713
    %v715 = vmul.f32 %v714, 0.015625
    %v716 = vsub.f32 %v678, %v715
    %v717 = vsub.f32 %v679, %v715
    %v718 = vsub.f32 %v680, %v715
    %v719 = vsub.f32 %v681, %v715
    %v720 = vsub.f32 %v682, %v715
    %v721 = vsub.f32 %v683, %v715
    %v722 = vsub.f32 %v684, %v715
    %v723 = vsub.f32 %v685, %v715
    %v724 = vmul.f32 %v716, %v716
    %v725 = vmul.f32 %v717, %v717
    %v726 = vmul.f32 %v718, %v718
    %v727 = vmul.f32 %v719, %v719
    %v728 = vmul.f32 %v720, %v720
    %v729 = vmul.f32 %v721, %v721
    %v730 = vmul.f32 %v722, %v722
    %v731 = vmul.f32 %v723, %v723
    %v732 = vsel %vm622, %v724, 0.0
    %v733 = vsel %vm622, %v725, 0.0
    %v734 = vadd.f32 %v732, %v733
    %v735 = vsel %vm622, %v726, 0.0
    %v736 = vadd.f32 %v734, %v735
    %v737 = vsel %vm622, %v727, 0.0
    %v738 = vadd.f32 %v736, %v737
    %v739 = vrot.slane %v738, 4
    %v740 = vadd.f32 %v738, %v739
    %v741 = vrot.slane %v740, 2
    %v742 = vadd.f32 %v740, %v741
    %v743 = vrot.slane %v742, 1
    %v744 = vadd.f32 %v742, %v743
    %v745 = vsel %vm622, %v728, 0.0
    %v746 = vsel %vm622, %v729, 0.0
    %v747 = vadd.f32 %v745, %v746
    %v748 = vsel %vm622, %v730, 0.0
    %v749 = vadd.f32 %v747, %v748
    %v750 = vsel %vm622, %v731, 0.0
    %v751 = vadd.f32 %v749, %v750
    %v752 = vrot.slane %v751, 4
    %v753 = vadd.f32 %v751, %v752
    %v754 = vrot.slane %v753, 2
    %v755 = vadd.f32 %v753, %v754
    %v756 = vrot.slane %v755, 1
    %v757 = vadd.f32 %v755, %v756
    %v758 = vsel %vm622, %v744, 0.0
    %v759 = vsel %vm622, %v757, 0.0
    %v760 = vadd.f32 %v758, %v759
    %v761 = vmul.f32 %v760, 0.015625
    %v762 = vadd.f32 %v761, 1e-05
    %v763 = vrsqrt.pop %v762
    %v764 = vmul.f32 %v763, %v762
    %v765 = vmul.f32 %v764, %v763
    %v766 = vmul.f32 0.5, %v765
    %v767 = vsub.f32 1.5, %v766
    %v768 = vmul.f32 %v763, %v767
    %vm769 = vweird.f32 %v762
    %vm770 = vweird.f32 %v763
    %vm771 = vmor %vm769, %vm770
    %v772 = vsel %vm771, %v763, %v768
    %v773 = vld [vmem:[#allocation11] sm:$0x1]
    %v774 = vmul.f32 %v772, %v773
    %v775 = vperm.slane %v774, 0
    %v776 = vmul.f32 %v716, %v775
    %v777 = vmul.f32 %v717, %v775
    %v778 = vmul.f32 %v718, %v775
    %v779 = vmul.f32 %v719, %v775
    %v780 = vmul.f32 %v720, %v775
    %v781 = vmul.f32 %v721, %v775
    %v782 = vmul.f32 %v722, %v775
    %v783 = vmul.f32 %v723, %v775
    %v784 = vld [vmem:[#allocation12] sm:$0x1]
    %v786 = vperm.slane %v784, 0
    %v788 = vadd.f32 %v776, %v786
    %v789 = vadd.f32 %v777, %v786
    %v790 = vadd.f32 %v778, %v786
    %v791 = vadd.f32 %v779, %v786
    %v792 = vadd.f32 %v780, %v786
    %v793 = vadd.f32 %v781, %v786
    %v794 = vadd.f32 %v782, %v786
    %v795 = vadd.f32 %v783, %v786
    %vm796 = vcmask 24576
    %797 = vst.msk [vmem:[#allocation2] sm:$0x1] %vm796, 0.0
    %798 = vst.msk [vmem:[#allocation2 + $0x28] sm:$0x1] %vm796, 0.0
    %799 = vst.msk [vmem:[#allocation2 + $0x21] sm:$0x1] %vm796, 0.0
    %800 = vst.msk [vmem:[#allocation2 + $0x49] sm:$0x1] %vm796, 0.0
    %801 = vst.msk [vmem:[#allocation2 + $0x1] sm:$0xff] %vm622, %v788
    %802 = vst.msk [vmem:[#allocation2 + $0x9] sm:$0xff] %vm622, %v789
    %803 = vst.msk [vmem:[#allocation2 + $0x11] sm:$0xff] %vm622, %v790
    %804 = vst.msk [vmem:[#allocation2 + $0x19] sm:$0xff] %vm622, %v791
    %805 = vst.msk [vmem:[#allocation2 + $0x29] sm:$0xff] %vm622, %v792
    %806 = vst.msk [vmem:[#allocation2 + $0x31] sm:$0xff] %vm622, %v793
    %807 = vst.msk [vmem:[#allocation2 + $0x39] sm:$0xff] %vm622, %v794
    %808 = vst.msk [vmem:[#allocation2 + $0x41] sm:$0xff] %vm622, %v795
    %v809 = vld [vmem:[#allocation2] sm:$0xff]
    %v810 = vld [vmem:[#allocation2 + $0x8] sm:$0xff]
    %v811 = vld [vmem:[#allocation2 + $0x10] sm:$0xff]
    %v812 = vld [vmem:[#allocation2 + $0x18] sm:$0xff]
    %v813 = vld [vmem:[#allocation2 + $0x28] sm:$0xff]
    %v814 = vld [vmem:[#allocation2 + $0x30] sm:$0xff]
    %v815 = vld [vmem:[#allocation2 + $0x38] sm:$0xff]
    %v816 = vld [vmem:[#allocation2 + $0x40] sm:$0xff]
    %v817 = vld [vmem:[%s5] sm:$0x1]
    %819 = vset.pattern.permute.xlu0 0
    %820 = vperm.xlu0 %819, %v809
    %v821 = vpop.permute.xlu0 %820
    %824 = vset.pattern.permute.xlu0 0
    %825 = vperm.xlu0 %824, %v810
    %v826 = vpop.permute.xlu0 %825
    %829 = vset.pattern.permute.xlu0 0
    %830 = vperm.xlu0 %829, %v811
    %v831 = vpop.permute.xlu0 %830
    %834 = vset.pattern.permute.xlu0 0
    %835 = vperm.xlu0 %834, %v812
    %v836 = vpop.permute.xlu0 %835
    %839 = vset.pattern.permute.xlu0 0
    %840 = vperm.xlu0 %839, %v813
    %v841 = vpop.permute.xlu0 %840
    %844 = vset.pattern.permute.xlu0 0
    %845 = vperm.xlu0 %844, %v814
    %v846 = vpop.permute.xlu0 %845
    %849 = vset.pattern.permute.xlu0 0
    %850 = vperm.xlu0 %849, %v815
    %v851 = vpop.permute.xlu0 %850
    %854 = vset.pattern.permute.xlu0 0
    %855 = vperm.xlu0 %854, %v816
    %v856 = vpop.permute.xlu0 %855
    %v858 = vperm.slane %v817, 0
    %v859 = vmul.f32 %v821, %v858
    %v860 = vmul.f32 %v826, %v858
    %v861 = vmul.f32 %v831, %v858
    %v862 = vmul.f32 %v836, %v858
    %v863 = vmul.f32 %v841, %v858
    %v864 = vmul.f32 %v846, %v858
    %v865 = vmul.f32 %v851, %v858
    %v866 = vmul.f32 %v856, %v858
    %v867 = vadd.f32 %v859, 0.0
    %v868 = vadd.f32 %v860, 0.0
    %v869 = vadd.f32 %v861, 0.0
    %v870 = vadd.f32 %v862, 0.0
    %v871 = vadd.f32 %v863, 0.0
    %v872 = vadd.f32 %v864, 0.0
    %v873 = vadd.f32 %v865, 0.0
    %v874 = vadd.f32 %v866, 0.0
    %v875 = vld [vmem:[%s5 + $0x1] sm:$0x1]
    %876 = vset.pattern.permute.xlu0 1
    %877 = vperm.xlu0 %876, %v809
    %v878 = vpop.permute.xlu0 %877
    %880 = vset.pattern.permute.xlu0 1
    %881 = vperm.xlu0 %880, %v810
    %v882 = vpop.permute.xlu0 %881
    %884 = vset.pattern.permute.xlu0 1
    %885 = vperm.xlu0 %884, %v811
    %v886 = vpop.permute.xlu0 %885
    %888 = vset.pattern.permute.xlu0 1
    %889 = vperm.xlu0 %888, %v812
    %v890 = vpop.permute.xlu0 %889
    %892 = vset.pattern.permute.xlu0 1
    %893 = vperm.xlu0 %892, %v813
    %v894 = vpop.permute.xlu0 %893
    %896 = vset.pattern.permute.xlu0 1
    %897 = vperm.xlu0 %896, %v814
    %v898 = vpop.permute.xlu0 %897
    %900 = vset.pattern.permute.xlu0 1
    %901 = vperm.xlu0 %900, %v815
    %v902 = vpop.permute.xlu0 %901
    %904 = vset.pattern.permute.xlu0 1
    %905 = vperm.xlu0 %904, %v816
    %v906 = vpop.permute.xlu0 %905
    %v908 = vperm.slane %v875, 0
    %v909 = vmul.f32 %v878, %v908
    %v910 = vmul.f32 %v882, %v908
    %v911 = vmul.f32 %v886, %v908
    %v912 = vmul.f32 %v890, %v908
    %v913 = vmul.f32 %v894, %v908
    %v914 = vmul.f32 %v898, %v908
    %v915 = vmul.f32 %v902, %v908
    %v916 = vmul.f32 %v906, %v908
    %v917 = vadd.f32 %v867, %v909
    %v918 = vadd.f32 %v868, %v910
    %v919 = vadd.f32 %v869, %v911
    %v920 = vadd.f32 %v870, %v912
    %v921 = vadd.f32 %v871, %v913
    %v922 = vadd.f32 %v872, %v914
    %v923 = vadd.f32 %v873, %v915
    %v924 = vadd.f32 %v874, %v916
    %v925 = vld [vmem:[%s5 + $0x2] sm:$0x1]
    %926 = vset.pattern.permute.xlu0 2
    %927 = vperm.xlu0 %926, %v809
    %v928 = vpop.permute.xlu0 %927
    %930 = vset.pattern.permute.xlu0 2
    %931 = vperm.xlu0 %930, %v810
    %v932 = vpop.permute.xlu0 %931
    %934 = vset.pattern.permute.xlu0 2
    %935 = vperm.xlu0 %934, %v811
    %v936 = vpop.permute.xlu0 %935
    %938 = vset.pattern.permute.xlu0 2
    %939 = vperm.xlu0 %938, %v812
    %v940 = vpop.permute.xlu0 %939
    %942 = vset.pattern.permute.xlu0 2
    %943 = vperm.xlu0 %942, %v813
    %v944 = vpop.permute.xlu0 %943
    %946 = vset.pattern.permute.xlu0 2
    %947 = vperm.xlu0 %946, %v814
    %v948 = vpop.permute.xlu0 %947
    %950 = vset.pattern.permute.xlu0 2
    %951 = vperm.xlu0 %950, %v815
    %v952 = vpop.permute.xlu0 %951
    %954 = vset.pattern.permute.xlu0 2
    %955 = vperm.xlu0 %954, %v816
    %v956 = vpop.permute.xlu0 %955
    %v958 = vperm.slane %v925, 0
    %v959 = vmul.f32 %v928, %v958
    %v960 = vmul.f32 %v932, %v958
    %v961 = vmul.f32 %v936, %v958
    %v962 = vmul.f32 %v940, %v958
    %v963 = vmul.f32 %v944, %v958
    %v964 = vmul.f32 %v948, %v958
    %v965 = vmul.f32 %v952, %v958
    %v966 = vmul.f32 %v956, %v958
    %v967 = vadd.f32 %v917, %v959
    %v968 = vadd.f32 %v918, %v960
    %v969 = vadd.f32 %v919, %v961
    %v970 = vadd.f32 %v920, %v962
    %v971 = vadd.f32 %v921, %v963
    %v972 = vadd.f32 %v922, %v964
    %v973 = vadd.f32 %v923, %v965
    %v974 = vadd.f32 %v924, %v966
    %v975 = vld [vmem:[%s5 + $0x3] sm:$0x1]
    %976 = vset.pattern.permute.xlu0 3
    %977 = vperm.xlu0 %976, %v809
    %v978 = vpop.permute.xlu0 %977
    %980 = vset.pattern.permute.xlu0 3
    %981 = vperm.xlu0 %980, %v810
    %v982 = vpop.permute.xlu0 %981
    %984 = vset.pattern.permute.xlu0 3
    %985 = vperm.xlu0 %984, %v811
    %v986 = vpop.permute.xlu0 %985
    %988 = vset.pattern.permute.xlu0 3
    %989 = vperm.xlu0 %988, %v812
    %v990 = vpop.permute.xlu0 %989
    %992 = vset.pattern.permute.xlu0 3
    %993 = vperm.xlu0 %992, %v813
    %v994 = vpop.permute.xlu0 %993
    %996 = vset.pattern.permute.xlu0 3
    %997 = vperm.xlu0 %996, %v814
    %v998 = vpop.permute.xlu0 %997
    %1000 = vset.pattern.permute.xlu0 3
    %1001 = vperm.xlu0 %1000, %v815
    %v1002 = vpop.permute.xlu0 %1001
    %1004 = vset.pattern.permute.xlu0 3
    %1005 = vperm.xlu0 %1004, %v816
    %v1006 = vpop.permute.xlu0 %1005
    %v1008 = vperm.slane %v975, 0
    %v1009 = vmul.f32 %v978, %v1008
    %v1010 = vmul.f32 %v982, %v1008
    %v1011 = vmul.f32 %v986, %v1008
    %v1012 = vmul.f32 %v990, %v1008
    %v1013 = vmul.f32 %v994, %v1008
    %v1014 = vmul.f32 %v998, %v1008
    %v1015 = vmul.f32 %v1002, %v1008
    %v1016 = vmul.f32 %v1006, %v1008
    %v1017 = vadd.f32 %v967, %v1009
    %v1018 = vadd.f32 %v968, %v1010
    %v1019 = vadd.f32 %v969, %v1011
    %v1020 = vadd.f32 %v970, %v1012
    %v1021 = vadd.f32 %v971, %v1013
    %v1022 = vadd.f32 %v972, %v1014
    %v1023 = vadd.f32 %v973, %v1015
    %v1024 = vadd.f32 %v974, %v1016
    %v1025 = vld [vmem:[#allocation2 + $0x1] sm:$0xff]
    %v1026 = vld [vmem:[#allocation2 + $0x9] sm:$0xff]
    %v1027 = vld [vmem:[#allocation2 + $0x11] sm:$0xff]
    %v1028 = vld [vmem:[#allocation2 + $0x19] sm:$0xff]
    %v1029 = vld [vmem:[#allocation2 + $0x29] sm:$0xff]
    %v1030 = vld [vmem:[#allocation2 + $0x31] sm:$0xff]
    %v1031 = vld [vmem:[#allocation2 + $0x39] sm:$0xff]
    %v1032 = vld [vmem:[#allocation2 + $0x41] sm:$0xff]
    %v1033 = vld [vmem:[%s5 + $0x4] sm:$0x1]
    %1035 = vset.pattern.permute.xlu0 0
    %1036 = vperm.xlu0 %1035, %v1025
    %v1037 = vpop.permute.xlu0 %1036
    %1040 = vset.pattern.permute.xlu0 0
    %1041 = vperm.xlu0 %1040, %v1026
    %v1042 = vpop.permute.xlu0 %1041
    %1045 = vset.pattern.permute.xlu0 0
    %1046 = vperm.xlu0 %1045, %v1027
    %v1047 = vpop.permute.xlu0 %1046
    %1050 = vset.pattern.permute.xlu0 0
    %1051 = vperm.xlu0 %1050, %v1028
    %v1052 = vpop.permute.xlu0 %1051
    %1055 = vset.pattern.permute.xlu0 0
    %1056 = vperm.xlu0 %1055, %v1029
    %v1057 = vpop.permute.xlu0 %1056
    %1060 = vset.pattern.permute.xlu0 0
    %1061 = vperm.xlu0 %1060, %v1030
    %v1062 = vpop.permute.xlu0 %1061
    %1065 = vset.pattern.permute.xlu0 0
    %1066 = vperm.xlu0 %1065, %v1031
    %v1067 = vpop.permute.xlu0 %1066
    %1070 = vset.pattern.permute.xlu0 0
    %1071 = vperm.xlu0 %1070, %v1032
    %v1072 = vpop.permute.xlu0 %1071
    %v1074 = vperm.slane %v1033, 0
    %v1075 = vmul.f32 %v1037, %v1074
    %v1076 = vmul.f32 %v1042, %v1074
    %v1077 = vmul.f32 %v1047, %v1074
    %v1078 = vmul.f32 %v1052, %v1074
    %v1079 = vmul.f32 %v1057, %v1074
    %v1080 = vmul.f32 %v1062, %v1074
    %v1081 = vmul.f32 %v1067, %v1074
    %v1082 = vmul.f32 %v1072, %v1074
    %v1083 = vadd.f32 %v1017, %v1075
    %v1084 = vadd.f32 %v1018, %v1076
    %v1085 = vadd.f32 %v1019, %v1077
    %v1086 = vadd.f32 %v1020, %v1078
    %v1087 = vadd.f32 %v1021, %v1079
    %v1088 = vadd.f32 %v1022, %v1080
    %v1089 = vadd.f32 %v1023, %v1081
    %v1090 = vadd.f32 %v1024, %v1082
    %v1091 = vld [vmem:[%s5 + $0x5] sm:$0x1]
    %1092 = vset.pattern.permute.xlu0 1
    %1093 = vperm.xlu0 %1092, %v1025
    %v1094 = vpop.permute.xlu0 %1093
    %1096 = vset.pattern.permute.xlu0 1
    %1097 = vperm.xlu0 %1096, %v1026
    %v1098 = vpop.permute.xlu0 %1097
    %1100 = vset.pattern.permute.xlu0 1
    %1101 = vperm.xlu0 %1100, %v1027
    %v1102 = vpop.permute.xlu0 %1101
    %1104 = vset.pattern.permute.xlu0 1
    %1105 = vperm.xlu0 %1104, %v1028
    %v1106 = vpop.permute.xlu0 %1105
    %1108 = vset.pattern.permute.xlu0 1
    %1109 = vperm.xlu0 %1108, %v1029
    %v1110 = vpop.permute.xlu0 %1109
    %1112 = vset.pattern.permute.xlu0 1
    %1113 = vperm.xlu0 %1112, %v1030
    %v1114 = vpop.permute.xlu0 %1113
    %1116 = vset.pattern.permute.xlu0 1
    %1117 = vperm.xlu0 %1116, %v1031
    %v1118 = vpop.permute.xlu0 %1117
    %1120 = vset.pattern.permute.xlu0 1
    %1121 = vperm.xlu0 %1120, %v1032
    %v1122 = vpop.permute.xlu0 %1121
    %v1124 = vperm.slane %v1091, 0
    %v1125 = vmul.f32 %v1094, %v1124
    %v1126 = vmul.f32 %v1098, %v1124
    %v1127 = vmul.f32 %v1102, %v1124
    %v1128 = vmul.f32 %v1106, %v1124
    %v1129 = vmul.f32 %v1110, %v1124
    %v1130 = vmul.f32 %v1114, %v1124
    %v1131 = vmul.f32 %v1118, %v1124
    %v1132 = vmul.f32 %v1122, %v1124
    %v1133 = vadd.f32 %v1083, %v1125
    %v1134 = vadd.f32 %v1084, %v1126
    %v1135 = vadd.f32 %v1085, %v1127
    %v1136 = vadd.f32 %v1086, %v1128
    %v1137 = vadd.f32 %v1087, %v1129
    %v1138 = vadd.f32 %v1088, %v1130
    %v1139 = vadd.f32 %v1089, %v1131
    %v1140 = vadd.f32 %v1090, %v1132
    %v1141 = vld [vmem:[%s5 + $0x6] sm:$0x1]
    %1142 = vset.pattern.permute.xlu0 2
    %1143 = vperm.xlu0 %1142, %v1025
    %v1144 = vpop.permute.xlu0 %1143
    %1146 = vset.pattern.permute.xlu0 2
    %1147 = vperm.xlu0 %1146, %v1026
    %v1148 = vpop.permute.xlu0 %1147
    %1150 = vset.pattern.permute.xlu0 2
    %1151 = vperm.xlu0 %1150, %v1027
    %v1152 = vpop.permute.xlu0 %1151
    %1154 = vset.pattern.permute.xlu0 2
    %1155 = vperm.xlu0 %1154, %v1028
    %v1156 = vpop.permute.xlu0 %1155
    %1158 = vset.pattern.permute.xlu0 2
    %1159 = vperm.xlu0 %1158, %v1029
    %v1160 = vpop.permute.xlu0 %1159
    %1162 = vset.pattern.permute.xlu0 2
    %1163 = vperm.xlu0 %1162, %v1030
    %v1164 = vpop.permute.xlu0 %1163
    %1166 = vset.pattern.permute.xlu0 2
    %1167 = vperm.xlu0 %1166, %v1031
    %v1168 = vpop.permute.xlu0 %1167
    %1170 = vset.pattern.permute.xlu0 2
    %1171 = vperm.xlu0 %1170, %v1032
    %v1172 = vpop.permute.xlu0 %1171
    %v1174 = vperm.slane %v1141, 0
    %v1175 = vmul.f32 %v1144, %v1174
    %v1176 = vmul.f32 %v1148, %v1174
    %v1177 = vmul.f32 %v1152, %v1174
    %v1178 = vmul.f32 %v1156, %v1174
    %v1179 = vmul.f32 %v1160, %v1174
    %v1180 = vmul.f32 %v1164, %v1174
    %v1181 = vmul.f32 %v1168, %v1174
    %v1182 = vmul.f32 %v1172, %v1174
    %v1183 = vadd.f32 %v1133, %v1175
    %v1184 = vadd.f32 %v1134, %v1176
    %v1185 = vadd.f32 %v1135, %v1177
    %v1186 = vadd.f32 %v1136, %v1178
    %v1187 = vadd.f32 %v1137, %v1179
    %v1188 = vadd.f32 %v1138, %v1180
    %v1189 = vadd.f32 %v1139, %v1181
    %v1190 = vadd.f32 %v1140, %v1182
    %v1191 = vld [vmem:[%s5 + $0x7] sm:$0x1]
    %1192 = vset.pattern.permute.xlu0 3
    %1193 = vperm.xlu0 %1192, %v1025
    %v1194 = vpop.permute.xlu0 %1193
    %1196 = vset.pattern.permute.xlu0 3
    %1197 = vperm.xlu0 %1196, %v1026
    %v1198 = vpop.permute.xlu0 %1197
    %1200 = vset.pattern.permute.xlu0 3
    %1201 = vperm.xlu0 %1200, %v1027
    %v1202 = vpop.permute.xlu0 %1201
    %1204 = vset.pattern.permute.xlu0 3
    %1205 = vperm.xlu0 %1204, %v1028
    %v1206 = vpop.permute.xlu0 %1205
    %1208 = vset.pattern.permute.xlu0 3
    %1209 = vperm.xlu0 %1208, %v1029
    %v1210 = vpop.permute.xlu0 %1209
    %1212 = vset.pattern.permute.xlu0 3
    %1213 = vperm.xlu0 %1212, %v1030
    %v1214 = vpop.permute.xlu0 %1213
    %1216 = vset.pattern.permute.xlu0 3
    %1217 = vperm.xlu0 %1216, %v1031
    %v1218 = vpop.permute.xlu0 %1217
    %1220 = vset.pattern.permute.xlu0 3
    %1221 = vperm.xlu0 %1220, %v1032
    %v1222 = vpop.permute.xlu0 %1221
    %v1224 = vperm.slane %v1191, 0
    %v1225 = vmul.f32 %v1194, %v1224
    %v1226 = vmul.f32 %v1198, %v1224
    %v1227 = vmul.f32 %v1202, %v1224
    %v1228 = vmul.f32 %v1206, %v1224
    %v1229 = vmul.f32 %v1210, %v1224
    %v1230 = vmul.f32 %v1214, %v1224
    %v1231 = vmul.f32 %v1218, %v1224
    %v1232 = vmul.f32 %v1222, %v1224
    %v1233 = vadd.f32 %v1183, %v1225
    %v1234 = vadd.f32 %v1184, %v1226
    %v1235 = vadd.f32 %v1185, %v1227
    %v1236 = vadd.f32 %v1186, %v1228
    %v1237 = vadd.f32 %v1187, %v1229
    %v1238 = vadd.f32 %v1188, %v1230
    %v1239 = vadd.f32 %v1189, %v1231
    %v1240 = vadd.f32 %v1190, %v1232
    %v1241 = vld [vmem:[#allocation2 + $0x2] sm:$0xff]
    %v1242 = vld [vmem:[#allocation2 + $0xa] sm:$0xff]
    %v1243 = vld [vmem:[#allocation2 + $0x12] sm:$0xff]
    %v1244 = vld [vmem:[#allocation2 + $0x1a] sm:$0xff]
    %v1245 = vld [vmem:[#allocation2 + $0x2a] sm:$0xff]
    %v1246 = vld [vmem:[#allocation2 + $0x32] sm:$0xff]
    %v1247 = vld [vmem:[#allocation2 + $0x3a] sm:$0xff]
    %v1248 = vld [vmem:[#allocation2 + $0x42] sm:$0xff]
    %v1249 = vld [vmem:[%s5 + $0x8] sm:$0x1]
    %1251 = vset.pattern.permute.xlu0 0
    %1252 = vperm.xlu0 %1251, %v1241
    %v1253 = vpop.permute.xlu0 %1252
    %1256 = vset.pattern.permute.xlu0 0
    %1257 = vperm.xlu0 %1256, %v1242
    %v1258 = vpop.permute.xlu0 %1257
    %1261 = vset.pattern.permute.xlu0 0
    %1262 = vperm.xlu0 %1261, %v1243
    %v1263 = vpop.permute.xlu0 %1262
    %1266 = vset.pattern.permute.xlu0 0
    %1267 = vperm.xlu0 %1266, %v1244
    %v1268 = vpop.permute.xlu0 %1267
    %1271 = vset.pattern.permute.xlu0 0
    %1272 = vperm.xlu0 %1271, %v1245
    %v1273 = vpop.permute.xlu0 %1272
    %1276 = vset.pattern.permute.xlu0 0
    %1277 = vperm.xlu0 %1276, %v1246
    %v1278 = vpop.permute.xlu0 %1277
    %1281 = vset.pattern.permute.xlu0 0
    %1282 = vperm.xlu0 %1281, %v1247
    %v1283 = vpop.permute.xlu0 %1282
    %1286 = vset.pattern.permute.xlu0 0
    %1287 = vperm.xlu0 %1286, %v1248
    %v1288 = vpop.permute.xlu0 %1287
    %v1290 = vperm.slane %v1249, 0
    %v1291 = vmul.f32 %v1253, %v1290
    %v1292 = vmul.f32 %v1258, %v1290
    %v1293 = vmul.f32 %v1263, %v1290
    %v1294 = vmul.f32 %v1268, %v1290
    %v1295 = vmul.f32 %v1273, %v1290
    %v1296 = vmul.f32 %v1278, %v1290
    %v1297 = vmul.f32 %v1283, %v1290
    %v1298 = vmul.f32 %v1288, %v1290
    %v1299 = vadd.f32 %v1233, %v1291
    %v1300 = vadd.f32 %v1234, %v1292
    %v1301 = vadd.f32 %v1235, %v1293
    %v1302 = vadd.f32 %v1236, %v1294
    %v1303 = vadd.f32 %v1237, %v1295
    %v1304 = vadd.f32 %v1238, %v1296
    %v1305 = vadd.f32 %v1239, %v1297
    %v1306 = vadd.f32 %v1240, %v1298
    %v1307 = vld [vmem:[%s5 + $0x9] sm:$0x1]
    %1308 = vset.pattern.permute.xlu0 1
    %1309 = vperm.xlu0 %1308, %v1241
    %v1310 = vpop.permute.xlu0 %1309
    %1312 = vset.pattern.permute.xlu0 1
    %1313 = vperm.xlu0 %1312, %v1242
    %v1314 = vpop.permute.xlu0 %1313
    %1316 = vset.pattern.permute.xlu0 1
    %1317 = vperm.xlu0 %1316, %v1243
    %v1318 = vpop.permute.xlu0 %1317
    %1320 = vset.pattern.permute.xlu0 1
    %1321 = vperm.xlu0 %1320, %v1244
    %v1322 = vpop.permute.xlu0 %1321
    %1324 = vset.pattern.permute.xlu0 1
    %1325 = vperm.xlu0 %1324, %v1245
    %v1326 = vpop.permute.xlu0 %1325
    %1328 = vset.pattern.permute.xlu0 1
    %1329 = vperm.xlu0 %1328, %v1246
    %v1330 = vpop.permute.xlu0 %1329
    %1332 = vset.pattern.permute.xlu0 1
    %1333 = vperm.xlu0 %1332, %v1247
    %v1334 = vpop.permute.xlu0 %1333
    %1336 = vset.pattern.permute.xlu0 1
    %1337 = vperm.xlu0 %1336, %v1248
    %v1338 = vpop.permute.xlu0 %1337
    %v1340 = vperm.slane %v1307, 0
    %v1341 = vmul.f32 %v1310, %v1340
    %v1342 = vmul.f32 %v1314, %v1340
    %v1343 = vmul.f32 %v1318, %v1340
    %v1344 = vmul.f32 %v1322, %v1340
    %v1345 = vmul.f32 %v1326, %v1340
    %v1346 = vmul.f32 %v1330, %v1340
    %v1347 = vmul.f32 %v1334, %v1340
    %v1348 = vmul.f32 %v1338, %v1340
    %v1349 = vadd.f32 %v1299, %v1341
    %v1350 = vadd.f32 %v1300, %v1342
    %v1351 = vadd.f32 %v1301, %v1343
    %v1352 = vadd.f32 %v1302, %v1344
    %v1353 = vadd.f32 %v1303, %v1345
    %v1354 = vadd.f32 %v1304, %v1346
    %v1355 = vadd.f32 %v1305, %v1347
    %v1356 = vadd.f32 %v1306, %v1348
    %v1357 = vld [vmem:[%s5 + $0xa] sm:$0x1]
    %1358 = vset.pattern.permute.xlu0 2
    %1359 = vperm.xlu0 %1358, %v1241
    %v1360 = vpop.permute.xlu0 %1359
    %1362 = vset.pattern.permute.xlu0 2
    %1363 = vperm.xlu0 %1362, %v1242
    %v1364 = vpop.permute.xlu0 %1363
    %1366 = vset.pattern.permute.xlu0 2
    %1367 = vperm.xlu0 %1366, %v1243
    %v1368 = vpop.permute.xlu0 %1367
    %1370 = vset.pattern.permute.xlu0 2
    %1371 = vperm.xlu0 %1370, %v1244
    %v1372 = vpop.permute.xlu0 %1371
    %1374 = vset.pattern.permute.xlu0 2
    %1375 = vperm.xlu0 %1374, %v1245
    %v1376 = vpop.permute.xlu0 %1375
    %1378 = vset.pattern.permute.xlu0 2
    %1379 = vperm.xlu0 %1378, %v1246
    %v1380 = vpop.permute.xlu0 %1379
    %1382 = vset.pattern.permute.xlu0 2
    %1383 = vperm.xlu0 %1382, %v1247
    %v1384 = vpop.permute.xlu0 %1383
    %1386 = vset.pattern.permute.xlu0 2
    %1387 = vperm.xlu0 %1386, %v1248
    %v1388 = vpop.permute.xlu0 %1387
    %v1390 = vperm.slane %v1357, 0
    %v1391 = vmul.f32 %v1360, %v1390
    %v1392 = vmul.f32 %v1364, %v1390
    %v1393 = vmul.f32 %v1368, %v1390
    %v1394 = vmul.f32 %v1372, %v1390
    %v1395 = vmul.f32 %v1376, %v1390
    %v1396 = vmul.f32 %v1380, %v1390
    %v1397 = vmul.f32 %v1384, %v1390
    %v1398 = vmul.f32 %v1388, %v1390
    %v1399 = vadd.f32 %v1349, %v1391
    %v1400 = vadd.f32 %v1350, %v1392
    %v1401 = vadd.f32 %v1351, %v1393
    %v1402 = vadd.f32 %v1352, %v1394
    %v1403 = vadd.f32 %v1353, %v1395
    %v1404 = vadd.f32 %v1354, %v1396
    %v1405 = vadd.f32 %v1355, %v1397
    %v1406 = vadd.f32 %v1356, %v1398
    %v1407 = vld [vmem:[%s5 + $0xb] sm:$0x1]
    %1408 = vset.pattern.permute.xlu0 3
    %1409 = vperm.xlu0 %1408, %v1241
    %v1410 = vpop.permute.xlu0 %1409
    %1412 = vset.pattern.permute.xlu0 3
    %1413 = vperm.xlu0 %1412, %v1242
    %v1414 = vpop.permute.xlu0 %1413
    %1416 = vset.pattern.permute.xlu0 3
    %1417 = vperm.xlu0 %1416, %v1243
    %v1418 = vpop.permute.xlu0 %1417
    %1420 = vset.pattern.permute.xlu0 3
    %1421 = vperm.xlu0 %1420, %v1244
    %v1422 = vpop.permute.xlu0 %1421
    %1424 = vset.pattern.permute.xlu0 3
    %1425 = vperm.xlu0 %1424, %v1245
    %v1426 = vpop.permute.xlu0 %1425
    %1428 = vset.pattern.permute.xlu0 3
    %1429 = vperm.xlu0 %1428, %v1246
    %v1430 = vpop.permute.xlu0 %1429
    %1432 = vset.pattern.permute.xlu0 3
    %1433 = vperm.xlu0 %1432, %v1247
    %v1434 = vpop.permute.xlu0 %1433
    %1436 = vset.pattern.permute.xlu0 3
    %1437 = vperm.xlu0 %1436, %v1248
    %v1438 = vpop.permute.xlu0 %1437
    %v1440 = vperm.slane %v1407, 0
    %v1441 = vmul.f32 %v1410, %v1440
    %v1442 = vmul.f32 %v1414, %v1440
    %v1443 = vmul.f32 %v1418, %v1440
    %v1444 = vmul.f32 %v1422, %v1440
    %v1445 = vmul.f32 %v1426, %v1440
    %v1446 = vmul.f32 %v1430, %v1440
    %v1447 = vmul.f32 %v1434, %v1440
    %v1448 = vmul.f32 %v1438, %v1440
    %v1449 = vadd.f32 %v1399, %v1441
    %v1450 = vadd.f32 %v1400, %v1442
    %v1451 = vadd.f32 %v1401, %v1443
    %v1452 = vadd.f32 %v1402, %v1444
    %v1453 = vadd.f32 %v1403, %v1445
    %v1454 = vadd.f32 %v1404, %v1446
    %v1455 = vadd.f32 %v1405, %v1447
    %v1456 = vadd.f32 %v1406, %v1448
    %v1457 = vld [vmem:[#allocation14] sm:$0x1]
    %v1459 = vperm.slane %v1457, 0
    %v1461 = vadd.f32 %v1449, %v1459
    %v1462 = vadd.f32 %v1450, %v1459
    %v1463 = vadd.f32 %v1451, %v1459
    %v1464 = vadd.f32 %v1452, %v1459
    %v1465 = vadd.f32 %v1453, %v1459
    %v1466 = vadd.f32 %v1454, %v1459
    %v1467 = vadd.f32 %v1455, %v1459
    %v1468 = vadd.f32 %v1456, %v1459
    %v1469 = vmax.f32 %v1461, 0.0
    %v1470 = vmax.f32 %v1462, 0.0
    %v1471 = vmax.f32 %v1463, 0.0
    %v1472 = vmax.f32 %v1464, 0.0
    %v1473 = vmax.f32 %v1465, 0.0
    %v1474 = vmax.f32 %v1466, 0.0
    %v1475 = vmax.f32 %v1467, 0.0
    %v1476 = vmax.f32 %v1468, 0.0
    %vm1477 = vcmask 64512
    %1478 = vst.msk [vmem:[#allocation4] sm:$0xff] %vm1477, %v1469
    %1479 = vst.msk [vmem:[#allocation4 + $0x8] sm:$0xff] %vm1477, %v1470
    %1480 = vst.msk [vmem:[#allocation4 + $0x10] sm:$0xff] %vm1477, %v1471
    %1481 = vst.msk [vmem:[#allocation4 + $0x18] sm:$0xff] %vm1477, %v1472
    %1482 = vst.msk [vmem:[#allocation4 + $0x20] sm:$0xff] %vm1477, %v1473
    %1483 = vst.msk [vmem:[#allocation4 + $0x28] sm:$0xff] %vm1477, %v1474
    %1484 = vst.msk [vmem:[#allocation4 + $0x30] sm:$0xff] %vm1477, %v1475
    %1485 = vst.msk [vmem:[#allocation4 + $0x38] sm:$0xff] %vm1477, %v1476
    %v1486 = vld [vmem:[#allocation4] ss:$2 sm:$0xff]
    %s1487 = scalar_lea.vmem [#allocation4], 16
    %v1488 = vld [vmem:[%s1487] ss:$2 sm:$0xff]
    %s1489 = scalar_lea.vmem [#allocation4], 32
    %v1490 = vld [vmem:[%s1489] ss:$2 sm:$0xff]
    %s1491 = scalar_lea.vmem [#allocation4], 48
    %v1492 = vld [vmem:[%s1491] ss:$2 sm:$0xff]
    %s1493 = scalar_lea.vmem [#allocation4], 1
    %v1494 = vld [vmem:[%s1493] ss:$2 sm:$0xff]
    %s1495 = scalar_lea.vmem [#allocation4], 17
    %v1496 = vld [vmem:[%s1495] ss:$2 sm:$0xff]
    %s1497 = scalar_lea.vmem [#allocation4], 33
    %v1498 = vld [vmem:[%s1497] ss:$2 sm:$0xff]
    %s1499 = scalar_lea.vmem [#allocation4], 49
    %v1500 = vld [vmem:[%s1499] ss:$2 sm:$0xff]
    %v1501 = vadd.f32 %v1486, %v1494
    %v1502 = vadd.f32 %v1488, %v1496
    %v1503 = vadd.f32 %v1490, %v1498
    %v1504 = vadd.f32 %v1492, %v1500
    %v1505 = vmul.f32 %v1501, 0.5
    %v1506 = vmul.f32 %v1502, 0.5
    %v1507 = vmul.f32 %v1503, 0.5
    %v1508 = vmul.f32 %v1504, 0.5
    %v1509 = vsel %vm1477, %v1505, 0.0
    %v1510 = vsel %vm1477, %v1506, 0.0
    %v1511 = vadd.f32 %v1509, %v1510
    %v1512 = vrot.slane %v1511, 4
    %v1513 = vadd.f32 %v1511, %v1512
    %v1514 = vrot.slane %v1513, 2
    %v1515 = vadd.f32 %v1513, %v1514
    %v1516 = vrot.slane %v1515, 1
    %v1517 = vadd.f32 %v1515, %v1516
    %v1518 = vsel %vm1477, %v1507, 0.0
    %v1519 = vsel %vm1477, %v1508, 0.0
    %v1520 = vadd.f32 %v1518, %v1519
    %v1521 = vrot.slane %v1520, 4
    %v1522 = vadd.f32 %v1520, %v1521
    %v1523 = vrot.slane %v1522, 2
    %v1524 = vadd.f32 %v1522, %v1523
    %v1525 = vrot.slane %v1524, 1
    %v1526 = vadd.f32 %v1524, %v1525
    %v1527 = vsel %vm1477, %v1517, 0.0
    %v1528 = vsel %vm1477, %v1526, 0.0
    %v1529 = vadd.f32 %v1527, %v1528
    %v1530 = vmul.f32 %v1529, 0.03125
    %v1531 = vsub.f32 %v1505, %v1530
    %v1532 = vsub.f32 %v1506, %v1530
    %v1533 = vsub.f32 %v1507, %v1530
    %v1534 = vsub.f32 %v1508, %v1530
    %v1535 = vmul.f32 %v1531, %v1531
    %v1536 = vmul.f32 %v1532, %v1532
    %v1537 = vmul.f32 %v1533, %v1533
    %v1538 = vmul.f32 %v1534, %v1534
    %v1539 = vsel %vm1477, %v1535, 0.0
    %v1540 = vsel %vm1477, %v1536, 0.0
    %v1541 = vadd.f32 %v1539, %v1540
    %v1542 = vrot.slane %v1541, 4
    %v1543 = vadd.f32 %v1541, %v1542
    %v1544 = vrot.slane %v1543, 2
    %v1545 = vadd.f32 %v1543, %v1544
    %v1546 = vrot.slane %v1545, 1
    %v1547 = vadd.f32 %v1545, %v1546
    %v1548 = vsel %vm1477, %v1537, 0.0
    %v1549 = vsel %vm1477, %v1538, 0.0
    %v1550 = vadd.f32 %v1548, %v1549
    %v1551 = vrot.slane %v1550, 4
    %v1552 = vadd.f32 %v1550, %v1551
    %v1553 = vrot.slane %v1552, 2
    %v1554 = vadd.f32 %v1552, %v1553
    %v1555 = vrot.slane %v1554, 1
    %v1556 = vadd.f32 %v1554, %v1555
    %v1557 = vsel %vm1477, %v1547, 0.0
    %v1558 = vsel %vm1477, %v1556, 0.0
    %v1559 = vadd.f32 %v1557, %v1558
    %v1560 = vmul.f32 %v1559, 0.03125
    %v1561 = vadd.f32 %v1560, 1e-05
    %v1562 = vrsqrt.pop %v1561
    %v1563 = vmul.f32 %v1562, %v1561
    %v1564 = vmul.f32 %v1563, %v1562
    %v1565 = vmul.f32 0.5, %v1564
    %v1566 = vsub.f32 1.5, %v1565
    %v1567 = vmul.f32 %v1562, %v1566
    %vm1568 = vweird.f32 %v1561
    %vm1569 = vweird.f32 %v1562
    %vm1570 = vmor %vm1568, %vm1569
    %v1571 = vsel %vm1570, %v1562, %v1567
    %v1572 = vld [vmem:[#allocation15] sm:$0x1]
    %v1573 = vmul.f32 %v1571, %v1572
    %v1574 = vperm.slane %v1573, 0
    %v1575 = vmul.f32 %v1531, %v1574
    %v1576 = vmul.f32 %v1532, %v1574
    %v1577 = vmul.f32 %v1533, %v1574
    %v1578 = vmul.f32 %v1534, %v1574
    %v1579 = vld [vmem:[#allocation17] sm:$0x1]
    %v1581 = vperm.slane %v1579, 0
    %v1583 = vadd.f32 %v1575, %v1581
    %v1584 = vadd.f32 %v1576, %v1581
    %v1585 = vadd.f32 %v1577, %v1581
    %v1586 = vadd.f32 %v1578, %v1581
    %v1589 = vrot.slane %v1585, 7
    %vm1590 = vcmask 1041409
    %v1591 = vsel %vm1590, %v1589, %v1583
    %vm1593 = vcmask 58368
    %1594 = vst.msk [vmem:[#allocation5] sm:$0x3] %vm1593, %v1591
    %vm1595 = vcmask 1042434
    %v1596 = vsel %vm1595, %v1589, %v1583
    %1597 = vrot.lane.b32.xlu0 %v1596, 8
    %v1598 = vpop.permute.xlu0 %1597
    %vm1600 = vcmask 124993
    %1601 = vst.msk [vmem:[#allocation5 - $0x1] sm:$0x6] %vm1600, %v1598
    %vm1602 = vcmask 1043459
    %v1603 = vsel %vm1602, %v1589, %v1583
    %1604 = vrot.lane.b32.xlu0 %v1603, 16
    %v1605 = vpop.permute.xlu0 %1604
    %vm1607 = vcmask 191618
    %1608 = vst.msk [vmem:[#allocation5 - $0x2] sm:$0xc] %vm1607, %v1605
    %vm1609 = vcmask 1044484
    %v1610 = vsel %vm1609, %v1589, %v1583
    %1611 = vrot.lane.b32.xlu0 %v1610, 24
    %v1612 = vpop.permute.xlu0 %1611
    %vm1614 = vcmask 258243
    %1615 = vst.msk [vmem:[#allocation5 - $0x3] sm:$0x18] %vm1614, %v1612
    %vm1616 = vcmask 1045509
    %v1617 = vsel %vm1616, %v1589, %v1583
    %1618 = vrot.lane.b32.xlu0 %v1617, 32
    %v1619 = vpop.permute.xlu0 %1618
    %vm1621 = vcmask 324868
    %1622 = vst.msk [vmem:[#allocation5 - $0x4] sm:$0x30] %vm1621, %v1619
    %vm1623 = vcmask 1046534
    %v1624 = vsel %vm1623, %v1589, %v1583
    %1625 = vrot.lane.b32.xlu0 %v1624, 40
    %v1626 = vpop.permute.xlu0 %1625
    %vm1628 = vcmask 391493
    %1629 = vst.msk [vmem:[#allocation5 - $0x5] sm:$0x60] %vm1628, %v1626
    %vm1630 = vcmask 1047559
    %v1631 = vsel %vm1630, %v1589, %v1583
    %1632 = vrot.lane.b32.xlu0 %v1631, 48
    %v1633 = vpop.permute.xlu0 %1632
    %vm1635 = vcmask 458118
    %1636 = vst.msk [vmem:[#allocation5 - $0x6] sm:$0xc0] %vm1635, %v1633
    %1637 = vrot.lane.b32.xlu0 %v1583, 56
    %v1638 = vpop.permute.xlu0 %1637
    %1639 = vrot.lane.b32.xlu0 %v1589, 56
    %v1640 = vpop.permute.xlu0 %1639
    %vm1643 = vcmask 523719
    %1644 = vst.msk [vmem:[#allocation5 - $0x7] sm:$0x80] %vm1643, %v1638
    %vm1645 = vcmask 516544
    %1646 = vst.msk [vmem:[#allocation5 + $0x1] sm:$0x1] %vm1645, %v1640
    %v1649 = vrot.slane %v1586, 7
    %v1650 = vsel %vm1590, %v1649, %v1584
    %1651 = vrot.lane.b32.xlu0 %v1650, 64
    %v1652 = vpop.permute.xlu0 %1651
    %vm1654 = vcmask 583168
    %1655 = vst.msk [vmem:[#allocation5] sm:$0x3] %vm1654, %v1652
    %v1656 = vsel %vm1595, %v1649, %v1584
    %1657 = vrot.lane.b32.xlu0 %v1656, 72
    %v1658 = vpop.permute.xlu0 %1657
    %vm1660 = vcmask 649793
    %1661 = vst.msk [vmem:[#allocation5 - $0x1] sm:$0x6] %vm1660, %v1658
    %v1662 = vsel %vm1602, %v1649, %v1584
    %1663 = vrot.lane.b32.xlu0 %v1662, 80
    %v1664 = vpop.permute.xlu0 %1663
    %vm1666 = vcmask 716418
    %1667 = vst.msk [vmem:[#allocation5 - $0x2] sm:$0xc] %vm1666, %v1664
    %v1668 = vsel %vm1609, %v1649, %v1584
    %1669 = vrot.lane.b32.xlu0 %v1668, 88
    %v1670 = vpop.permute.xlu0 %1669
    %vm1672 = vcmask 783043
    %1673 = vst.msk [vmem:[#allocation5 - $0x3] sm:$0x18] %vm1672, %v1670
    %v1674 = vsel %vm1616, %v1649, %v1584
    %1675 = vrot.lane.b32.xlu0 %v1674, 96
    %v1676 = vpop.permute.xlu0 %1675
    %vm1678 = vcmask 849668
    %1679 = vst.msk [vmem:[#allocation5 - $0x4] sm:$0x30] %vm1678, %v1676
    %v1680 = vsel %vm1623, %v1649, %v1584
    %1681 = vrot.lane.b32.xlu0 %v1680, 104
    %v1682 = vpop.permute.xlu0 %1681
    %vm1684 = vcmask 916293
    %1685 = vst.msk [vmem:[#allocation5 - $0x5] sm:$0x60] %vm1684, %v1682
    %v1686 = vsel %vm1630, %v1649, %v1584
    %1687 = vrot.lane.b32.xlu0 %v1686, 112
    %v1688 = vpop.permute.xlu0 %1687
    %vm1690 = vcmask 982918
    %1691 = vst.msk [vmem:[#allocation5 - $0x6] sm:$0xc0] %vm1690, %v1688
    %1692 = vrot.lane.b32.xlu0 %v1584, 120
    %v1693 = vpop.permute.xlu0 %1692
    %1694 = vrot.lane.b32.xlu0 %v1649, 120
    %v1695 = vpop.permute.xlu0 %1694
    %vm1698 = vcmask 1048519
    %1699 = vst.msk [vmem:[#allocation5 - $0x7] sm:$0x80] %vm1698, %v1693
    %vm1700 = vcmask 1041344
    %1701 = vst.msk [vmem:[#allocation5 + $0x1] sm:$0x1] %vm1700, %v1695
    %v1702 = vld [vmem:[#allocation5] sm:$0x3]
    %v1703 = vld [vmem:[#allocation18] sm:$0xff]
    %v1704 = vld [vmem:[#allocation18 + $0x8] sm:$0xff]
    %v1705 = vld [vmem:[#allocation18 + $0x10] sm:$0xff]
    %v1706 = vld [vmem:[#allocation18 + $0x18] sm:$0xff]
    %v1707 = vld [vmem:[#allocation18 + $0x20] sm:$0xff]
    %v1708 = vld [vmem:[#allocation18 + $0x28] sm:$0xff]
    %v1709 = vld [vmem:[#allocation18 + $0x30] sm:$0xff]
    %v1710 = vld [vmem:[#allocation18 + $0x38] sm:$0xff]
    %v1711 = vld [vmem:[#allocation18 + $0x40] sm:$0xff]
    %v1712 = vld [vmem:[#allocation18 + $0x48] sm:$0xff]
    %v1713 = vld [vmem:[#allocation18 + $0x50] sm:$0xff]
    %v1714 = vld [vmem:[#allocation18 + $0x58] sm:$0xff]
    %v1715 = vld [vmem:[#allocation18 + $0x60] sm:$0xff]
    %v1716 = vld [vmem:[#allocation18 + $0x68] sm:$0xff]
    %v1717 = vld [vmem:[#allocation18 + $0x70] sm:$0xff]
    %v1718 = vld [vmem:[#allocation18 + $0x78] sm:$0xff]
    %v1719 = vld [vmem:[#allocation18 + $0x80] sm:$0xff]
    %v1720 = vld [vmem:[#allocation18 + $0x88] sm:$0xff]
    %v1721 = vld [vmem:[#allocation18 + $0x90] sm:$0xff]
    %v1722 = vld [vmem:[#allocation18 + $0x98] sm:$0xff]
    %v1723 = vld [vmem:[#allocation18 + $0xa0] sm:$0xff]
    %v1724 = vld [vmem:[#allocation18 + $0xa8] sm:$0xff]
    %v1725 = vld [vmem:[#allocation18 + $0xb0] sm:$0xff]
    %v1726 = vld [vmem:[#allocation18 + $0xb8] sm:$0xff]
    %v1727 = vld [vmem:[#allocation18 + $0xc0] sm:$0xff]
    %v1728 = vld [vmem:[#allocation18 + $0xc8] sm:$0xff]
    %v1729 = vld [vmem:[#allocation18 + $0xd0] sm:$0xff]
    %v1730 = vld [vmem:[#allocation18 + $0xd8] sm:$0xff]
    %v1731 = vld [vmem:[#allocation18 + $0xe0] sm:$0xff]
    %v1732 = vld [vmem:[#allocation18 + $0xe8] sm:$0xff]
    %v1733 = vld [vmem:[#allocation18 + $0xf0] sm:$0xff]
    %v1734 = vld [vmem:[#allocation18 + $0xf8] sm:$0xff]
    %v1735 = vld [vmem:[#allocation18 + $0x100] sm:$0xff]
    %v1736 = vld [vmem:[#allocation18 + $0x108] sm:$0xff]
    %v1737 = vld [vmem:[#allocation18 + $0x110] sm:$0xff]
    %v1738 = vld [vmem:[#allocation18 + $0x118] sm:$0xff]
    %v1739 = vld [vmem:[#allocation18 + $0x120] sm:$0xff]
    %v1740 = vld [vmem:[#allocation18 + $0x128] sm:$0xff]
    %v1741 = vld [vmem:[#allocation18 + $0x130] sm:$0xff]
    %v1742 = vld [vmem:[#allocation18 + $0x138] sm:$0xff]
    %v1743 = vld [vmem:[#allocation18 + $0x140] sm:$0xff]
    %v1744 = vld [vmem:[#allocation18 + $0x148] sm:$0xff]
    %v1745 = vld [vmem:[#allocation18 + $0x150] sm:$0xff]
    %v1746 = vld [vmem:[#allocation18 + $0x158] sm:$0xff]
    %v1747 = vld [vmem:[#allocation18 + $0x160] sm:$0xff]
    %v1748 = vld [vmem:[#allocation18 + $0x168] sm:$0xff]
    %v1749 = vld [vmem:[#allocation18 + $0x170] sm:$0xff]
    %v1750 = vld [vmem:[#allocation18 + $0x178] sm:$0xff]
    %v1751 = vld [vmem:[#allocation18 + $0x180] sm:$0xff]
    %v1752 = vld [vmem:[#allocation18 + $0x188] sm:$0xff]
    %v1753 = vld [vmem:[#allocation18 + $0x190] sm:$0xff]
    %v1754 = vld [vmem:[#allocation18 + $0x198] sm:$0xff]
    %v1755 = vld [vmem:[#allocation18 + $0x1a0] sm:$0xff]
    %v1756 = vld [vmem:[#allocation18 + $0x1a8] sm:$0xff]
    %v1757 = vld [vmem:[#allocation18 + $0x1b0] sm:$0xff]
    %v1758 = vld [vmem:[#allocation18 + $0x1b8] sm:$0xff]
    %v1759 = vld [vmem:[#allocation18 + $0x1c0] sm:$0xff]
    %v1760 = vld [vmem:[#allocation18 + $0x1c8] sm:$0xff]
    %v1761 = vld [vmem:[#allocation18 + $0x1d0] sm:$0xff]
    %v1762 = vld [vmem:[#allocation18 + $0x1d8] sm:$0xff]
    %v1763 = vld [vmem:[#allocation18 + $0x1e0] sm:$0xff]
    %v1764 = vld [vmem:[#allocation18 + $0x1e8] sm:$0xff]
    %v1765 = vld [vmem:[#allocation18 + $0x1f0] sm:$0xff]
    %v1766 = vld [vmem:[#allocation18 + $0x1f8] sm:$0xff]
    %v1767 = vld [vmem:[#allocation18 + $0x200] sm:$0xff]
    %v1768 = vld [vmem:[#allocation18 + $0x208] sm:$0xff]
    %v1769 = vld [vmem:[#allocation18 + $0x210] sm:$0xff]
    %v1770 = vld [vmem:[#allocation18 + $0x218] sm:$0xff]
    %v1771 = vld [vmem:[#allocation18 + $0x220] sm:$0xff]
    %v1772 = vld [vmem:[#allocation18 + $0x228] sm:$0xff]
    %v1773 = vld [vmem:[#allocation18 + $0x230] sm:$0xff]
    %v1774 = vld [vmem:[#allocation18 + $0x238] sm:$0xff]
    %v1775 = vld [vmem:[#allocation18 + $0x240] sm:$0xff]
    %v1776 = vld [vmem:[#allocation18 + $0x248] sm:$0xff]
    %v1777 = vld [vmem:[#allocation18 + $0x250] sm:$0xff]
    %v1778 = vld [vmem:[#allocation18 + $0x258] sm:$0xff]
    %v1779 = vld [vmem:[#allocation18 + $0x260] sm:$0xff]
    %v1780 = vld [vmem:[#allocation18 + $0x268] sm:$0xff]
    %v1781 = vld [vmem:[#allocation18 + $0x270] sm:$0xff]
    %v1782 = vld [vmem:[#allocation18 + $0x278] sm:$0xff]
    %v1783 = vld [vmem:[#allocation18 + $0x280] sm:$0xff]
    %v1784 = vld [vmem:[#allocation18 + $0x288] sm:$0xff]
    %v1785 = vld [vmem:[#allocation18 + $0x290] sm:$0xff]
    %v1786 = vld [vmem:[#allocation18 + $0x298] sm:$0xff]
    %v1787 = vld [vmem:[#allocation18 + $0x2a0] sm:$0xff]
    %v1788 = vld [vmem:[#allocation18 + $0x2a8] sm:$0xff]
    %v1789 = vld [vmem:[#allocation18 + $0x2b0] sm:$0xff]
    %v1790 = vld [vmem:[#allocation18 + $0x2b8] sm:$0xff]
    %v1791 = vld [vmem:[#allocation18 + $0x2c0] sm:$0xff]
    %v1792 = vld [vmem:[#allocation18 + $0x2c8] sm:$0xff]
    %v1793 = vld [vmem:[#allocation18 + $0x2d0] sm:$0xff]
    %v1794 = vld [vmem:[#allocation18 + $0x2d8] sm:$0xff]
    %v1795 = vld [vmem:[#allocation18 + $0x2e0] sm:$0xff]
    %v1796 = vld [vmem:[#allocation18 + $0x2e8] sm:$0xff]
    %v1797 = vld [vmem:[#allocation18 + $0x2f0] sm:$0xff]
    %v1798 = vld [vmem:[#allocation18 + $0x2f8] sm:$0xff]
    %v1799 = vld [vmem:[#allocation18 + $0x300] sm:$0xff]
    %v1800 = vld [vmem:[#allocation18 + $0x308] sm:$0xff]
    %v1801 = vld [vmem:[#allocation18 + $0x310] sm:$0xff]
    %v1802 = vld [vmem:[#allocation18 + $0x318] sm:$0xff]
    %v1803 = vld [vmem:[#allocation18 + $0x320] sm:$0xff]
    %v1804 = vld [vmem:[#allocation18 + $0x328] sm:$0xff]
    %v1805 = vld [vmem:[#allocation18 + $0x330] sm:$0xff]
    %v1806 = vld [vmem:[#allocation18 + $0x338] sm:$0xff]
    %v1807 = vld [vmem:[#allocation18 + $0x340] sm:$0xff]
    %v1808 = vld [vmem:[#allocation18 + $0x348] sm:$0xff]
    %v1809 = vld [vmem:[#allocation18 + $0x350] sm:$0xff]
    %v1810 = vld [vmem:[#allocation18 + $0x358] sm:$0xff]
    %v1811 = vld [vmem:[#allocation18 + $0x360] sm:$0xff]
    %v1812 = vld [vmem:[#allocation18 + $0x368] sm:$0xff]
    %v1813 = vld [vmem:[#allocation18 + $0x370] sm:$0xff]
    %v1814 = vld [vmem:[#allocation18 + $0x378] sm:$0xff]
    %v1815 = vld [vmem:[#allocation18 + $0x380] sm:$0xff]
    %v1816 = vld [vmem:[#allocation18 + $0x388] sm:$0xff]
    %v1817 = vld [vmem:[#allocation18 + $0x390] sm:$0xff]
    %v1818 = vld [vmem:[#allocation18 + $0x398] sm:$0xff]
    %v1819 = vld [vmem:[#allocation18 + $0x3a0] sm:$0xff]
    %v1820 = vld [vmem:[#allocation18 + $0x3a8] sm:$0xff]
    %v1821 = vld [vmem:[#allocation18 + $0x3b0] sm:$0xff]
    %v1822 = vld [vmem:[#allocation18 + $0x3b8] sm:$0xff]
    %v1823 = vld [vmem:[#allocation18 + $0x3c0] sm:$0xff]
    %v1824 = vld [vmem:[#allocation18 + $0x3c8] sm:$0xff]
    %v1825 = vld [vmem:[#allocation18 + $0x3d0] sm:$0xff]
    %v1826 = vld [vmem:[#allocation18 + $0x3d8] sm:$0xff]
    %v1827 = vld [vmem:[#allocation18 + $0x3e0] sm:$0xff]
    %v1828 = vld [vmem:[#allocation18 + $0x3e8] sm:$0xff]
    %v1829 = vld [vmem:[#allocation18 + $0x3f0] sm:$0xff]
    %v1830 = vld [vmem:[#allocation18 + $0x3f8] sm:$0xff]
    %v1831 = vld [vmem:[#allocation18 + $0x400] sm:$0xff]
    %v1832 = vld [vmem:[#allocation18 + $0x408] sm:$0xff]
    %v1833 = vld [vmem:[#allocation18 + $0x410] sm:$0xff]
    %v1834 = vld [vmem:[#allocation18 + $0x418] sm:$0xff]
    %v1835 = vld [vmem:[#allocation18 + $0x420] sm:$0xff]
    %v1836 = vld [vmem:[#allocation18 + $0x428] sm:$0xff]
    %v1837 = vld [vmem:[#allocation18 + $0x430] sm:$0xff]
    %v1838 = vld [vmem:[#allocation18 + $0x438] sm:$0xff]
    %v1839 = vld [vmem:[#allocation18 + $0x440] sm:$0xff]
    %v1840 = vld [vmem:[#allocation18 + $0x448] sm:$0xff]
    %v1841 = vld [vmem:[#allocation18 + $0x450] sm:$0xff]
    %v1842 = vld [vmem:[#allocation18 + $0x458] sm:$0xff]
    %v1843 = vld [vmem:[#allocation18 + $0x460] sm:$0xff]
    %v1844 = vld [vmem:[#allocation18 + $0x468] sm:$0xff]
    %v1845 = vld [vmem:[#allocation18 + $0x470] sm:$0xff]
    %v1846 = vld [vmem:[#allocation18 + $0x478] sm:$0xff]
    %v1847 = vld [vmem:[#allocation18 + $0x480] sm:$0xff]
    %v1848 = vld [vmem:[#allocation18 + $0x488] sm:$0xff]
    %v1849 = vld [vmem:[#allocation18 + $0x490] sm:$0xff]
    %v1850 = vld [vmem:[#allocation18 + $0x498] sm:$0xff]
    %v1851 = vld [vmem:[#allocation18 + $0x4a0] sm:$0xff]
    %v1852 = vld [vmem:[#allocation18 + $0x4a8] sm:$0xff]
    %v1853 = vld [vmem:[#allocation18 + $0x4b0] sm:$0xff]
    %v1854 = vld [vmem:[#allocation18 + $0x4b8] sm:$0xff]
    %v1855 = vld [vmem:[#allocation18 + $0x4c0] sm:$0xff]
    %v1856 = vld [vmem:[#allocation18 + $0x4c8] sm:$0xff]
    %v1857 = vld [vmem:[#allocation18 + $0x4d0] sm:$0xff]
    %v1858 = vld [vmem:[#allocation18 + $0x4d8] sm:$0xff]
    %v1859 = vld [vmem:[#allocation18 + $0x4e0] sm:$0xff]
    %v1860 = vld [vmem:[#allocation18 + $0x4e8] sm:$0xff]
    %v1861 = vld [vmem:[#allocation18 + $0x4f0] sm:$0xff]
    %v1862 = vld [vmem:[#allocation18 + $0x4f8] sm:$0xff]
    %v1863 = vld [vmem:[#allocation18 + $0x500] sm:$0xff]
    %v1864 = vld [vmem:[#allocation18 + $0x508] sm:$0xff]
    %v1865 = vld [vmem:[#allocation18 + $0x510] sm:$0xff]
    %v1866 = vld [vmem:[#allocation18 + $0x518] sm:$0xff]
    %v1867 = vld [vmem:[#allocation18 + $0x520] sm:$0xff]
    %v1868 = vld [vmem:[#allocation18 + $0x528] sm:$0xff]
    %v1869 = vld [vmem:[#allocation18 + $0x530] sm:$0xff]
    %v1870 = vld [vmem:[#allocation18 + $0x538] sm:$0xff]
    %v1871 = vld [vmem:[#allocation18 + $0x540] sm:$0xff]
    %v1872 = vld [vmem:[#allocation18 + $0x548] sm:$0xff]
    %v1873 = vld [vmem:[#allocation18 + $0x550] sm:$0xff]
    %v1874 = vld [vmem:[#allocation18 + $0x558] sm:$0xff]
    %v1875 = vld [vmem:[#allocation18 + $0x560] sm:$0xff]
    %v1876 = vld [vmem:[#allocation18 + $0x568] sm:$0xff]
    %v1877 = vld [vmem:[#allocation18 + $0x570] sm:$0xff]
    %v1878 = vld [vmem:[#allocation18 + $0x578] sm:$0xff]
    %v1879 = vld [vmem:[#allocation18 + $0x580] sm:$0xff]
    %v1880 = vld [vmem:[#allocation18 + $0x588] sm:$0xff]
    %v1881 = vld [vmem:[#allocation18 + $0x590] sm:$0xff]
    %v1882 = vld [vmem:[#allocation18 + $0x598] sm:$0xff]
    %v1883 = vld [vmem:[#allocation18 + $0x5a0] sm:$0xff]
    %v1884 = vld [vmem:[#allocation18 + $0x5a8] sm:$0xff]
    %v1885 = vld [vmem:[#allocation18 + $0x5b0] sm:$0xff]
    %v1886 = vld [vmem:[#allocation18 + $0x5b8] sm:$0xff]
    %v1887 = vld [vmem:[#allocation18 + $0x5c0] sm:$0xff]
    %v1888 = vld [vmem:[#allocation18 + $0x5c8] sm:$0xff]
    %v1889 = vld [vmem:[#allocation18 + $0x5d0] sm:$0xff]
    %v1890 = vld [vmem:[#allocation18 + $0x5d8] sm:$0xff]
    %v1891 = vld [vmem:[#allocation18 + $0x5e0] sm:$0xff]
    %v1892 = vld [vmem:[#allocation18 + $0x5e8] sm:$0xff]
    %v1893 = vld [vmem:[#allocation18 + $0x5f0] sm:$0xff]
    %v1894 = vld [vmem:[#allocation18 + $0x5f8] sm:$0xff]
    %v1895 = vld [vmem:[#allocation18 + $0x600] sm:$0xff]
    %v1896 = vld [vmem:[#allocation18 + $0x608] sm:$0xff]
    %v1897 = vld [vmem:[#allocation18 + $0x610] sm:$0xff]
    %v1898 = vld [vmem:[#allocation18 + $0x618] sm:$0xff]
    %v1899 = vld [vmem:[#allocation18 + $0x620] sm:$0xff]
    %v1900 = vld [vmem:[#allocation18 + $0x628] sm:$0xff]
    %v1901 = vld [vmem:[#allocation18 + $0x630] sm:$0xff]
    %v1902 = vld [vmem:[#allocation18 + $0x638] sm:$0xff]
    %v1903 = vld [vmem:[#allocation18 + $0x640] sm:$0xff]
    %v1904 = vld [vmem:[#allocation18 + $0x648] sm:$0xff]
    %v1905 = vld [vmem:[#allocation18 + $0x650] sm:$0xff]
    %v1906 = vld [vmem:[#allocation18 + $0x658] sm:$0xff]
    %v1907 = vld [vmem:[#allocation18 + $0x660] sm:$0xff]
    %v1908 = vld [vmem:[#allocation18 + $0x668] sm:$0xff]
    %v1909 = vld [vmem:[#allocation18 + $0x670] sm:$0xff]
    %v1910 = vld [vmem:[#allocation18 + $0x678] sm:$0xff]
    %v1911 = vld [vmem:[#allocation18 + $0x680] sm:$0xff]
    %v1912 = vld [vmem:[#allocation18 + $0x688] sm:$0xff]
    %v1913 = vld [vmem:[#allocation18 + $0x690] sm:$0xff]
    %v1914 = vld [vmem:[#allocation18 + $0x698] sm:$0xff]
    %v1915 = vld [vmem:[#allocation18 + $0x6a0] sm:$0xff]
    %v1916 = vld [vmem:[#allocation18 + $0x6a8] sm:$0xff]
    %v1917 = vld [vmem:[#allocation18 + $0x6b0] sm:$0xff]
    %v1918 = vld [vmem:[#allocation18 + $0x6b8] sm:$0xff]
    %v1919 = vld [vmem:[#allocation18 + $0x6c0] sm:$0xff]
    %v1920 = vld [vmem:[#allocation18 + $0x6c8] sm:$0xff]
    %v1921 = vld [vmem:[#allocation18 + $0x6d0] sm:$0xff]
    %v1922 = vld [vmem:[#allocation18 + $0x6d8] sm:$0xff]
    %v1923 = vld [vmem:[#allocation18 + $0x6e0] sm:$0xff]
    %v1924 = vld [vmem:[#allocation18 + $0x6e8] sm:$0xff]
    %v1925 = vld [vmem:[#allocation18 + $0x6f0] sm:$0xff]
    %v1926 = vld [vmem:[#allocation18 + $0x6f8] sm:$0xff]
    %v1927 = vld [vmem:[#allocation18 + $0x700] sm:$0xff]
    %v1928 = vld [vmem:[#allocation18 + $0x708] sm:$0xff]
    %v1929 = vld [vmem:[#allocation18 + $0x710] sm:$0xff]
    %v1930 = vld [vmem:[#allocation18 + $0x718] sm:$0xff]
    %v1931 = vld [vmem:[#allocation18 + $0x720] sm:$0xff]
    %v1932 = vld [vmem:[#allocation18 + $0x728] sm:$0xff]
    %v1933 = vld [vmem:[#allocation18 + $0x730] sm:$0xff]
    %v1934 = vld [vmem:[#allocation18 + $0x738] sm:$0xff]
    %v1935 = vld [vmem:[#allocation18 + $0x740] sm:$0xff]
    %v1936 = vld [vmem:[#allocation18 + $0x748] sm:$0xff]
    %v1937 = vld [vmem:[#allocation18 + $0x750] sm:$0xff]
    %v1938 = vld [vmem:[#allocation18 + $0x758] sm:$0xff]
    %v1939 = vld [vmem:[#allocation18 + $0x760] sm:$0xff]
    %v1940 = vld [vmem:[#allocation18 + $0x768] sm:$0xff]
    %v1941 = vld [vmem:[#allocation18 + $0x770] sm:$0xff]
    %v1942 = vld [vmem:[#allocation18 + $0x778] sm:$0xff]
    %v1943 = vld [vmem:[#allocation18 + $0x780] sm:$0xff]
    %v1944 = vld [vmem:[#allocation18 + $0x788] sm:$0xff]
    %v1945 = vld [vmem:[#allocation18 + $0x790] sm:$0xff]
    %v1946 = vld [vmem:[#allocation18 + $0x798] sm:$0xff]
    %v1947 = vld [vmem:[#allocation18 + $0x7a0] sm:$0xff]
    %v1948 = vld [vmem:[#allocation18 + $0x7a8] sm:$0xff]
    %v1949 = vld [vmem:[#allocation18 + $0x7b0] sm:$0xff]
    %v1950 = vld [vmem:[#allocation18 + $0x7b8] sm:$0xff]
    %v1951 = vld [vmem:[#allocation18 + $0x7c0] sm:$0xff]
    %v1952 = vld [vmem:[#allocation18 + $0x7c8] sm:$0xff]
    %v1953 = vld [vmem:[#allocation18 + $0x7d0] sm:$0xff]
    %v1954 = vld [vmem:[#allocation18 + $0x7d8] sm:$0xff]
    %v1955 = vld [vmem:[#allocation18 + $0x7e0] sm:$0xff]
    %v1956 = vld [vmem:[#allocation18 + $0x7e8] sm:$0xff]
    %v1957 = vld [vmem:[#allocation18 + $0x7f0] sm:$0xff]
    %v1958 = vld [vmem:[#allocation18 + $0x7f8] sm:$0xff]
    %v1959 = vld [vmem:[#allocation18 + $0x800] sm:$0xff]
    %v1960 = vld [vmem:[#allocation18 + $0x808] sm:$0xff]
    %v1961 = vld [vmem:[#allocation18 + $0x810] sm:$0xff]
    %v1962 = vld [vmem:[#allocation18 + $0x818] sm:$0xff]
    %v1963 = vld [vmem:[#allocation18 + $0x820] sm:$0xff]
    %v1964 = vld [vmem:[#allocation18 + $0x828] sm:$0xff]
    %v1965 = vld [vmem:[#allocation18 + $0x830] sm:$0xff]
    %v1966 = vld [vmem:[#allocation18 + $0x838] sm:$0xff]
    %v1967 = vld [vmem:[#allocation18 + $0x840] sm:$0xff]
    %v1968 = vld [vmem:[#allocation18 + $0x848] sm:$0xff]
    %v1969 = vld [vmem:[#allocation18 + $0x850] sm:$0xff]
    %v1970 = vld [vmem:[#allocation18 + $0x858] sm:$0xff]
    %v1971 = vld [vmem:[#allocation18 + $0x860] sm:$0xff]
    %v1972 = vld [vmem:[#allocation18 + $0x868] sm:$0xff]
    %v1973 = vld [vmem:[#allocation18 + $0x870] sm:$0xff]
    %v1974 = vld [vmem:[#allocation18 + $0x878] sm:$0xff]
    %v1975 = vld [vmem:[#allocation18 + $0x880] sm:$0xff]
    %v1976 = vld [vmem:[#allocation18 + $0x888] sm:$0xff]
    %v1977 = vld [vmem:[#allocation18 + $0x890] sm:$0xff]
    %v1978 = vld [vmem:[#allocation18 + $0x898] sm:$0xff]
    %v1979 = vld [vmem:[#allocation18 + $0x8a0] sm:$0xff]
    %v1980 = vld [vmem:[#allocation18 + $0x8a8] sm:$0xff]
    %v1981 = vld [vmem:[#allocation18 + $0x8b0] sm:$0xff]
    %v1982 = vld [vmem:[#allocation18 + $0x8b8] sm:$0xff]
    %v1983 = vld [vmem:[#allocation18 + $0x8c0] sm:$0xff]
    %v1984 = vld [vmem:[#allocation18 + $0x8c8] sm:$0xff]
    %v1985 = vld [vmem:[#allocation18 + $0x8d0] sm:$0xff]
    %v1986 = vld [vmem:[#allocation18 + $0x8d8] sm:$0xff]
    %v1987 = vld [vmem:[#allocation18 + $0x8e0] sm:$0xff]
    %v1988 = vld [vmem:[#allocation18 + $0x8e8] sm:$0xff]
    %v1989 = vld [vmem:[#allocation18 + $0x8f0] sm:$0xff]
    %v1990 = vld [vmem:[#allocation18 + $0x8f8] sm:$0xff]
    %v1991 = vld [vmem:[#allocation18 + $0x900] sm:$0xff]
    %v1992 = vld [vmem:[#allocation18 + $0x908] sm:$0xff]
    %v1993 = vld [vmem:[#allocation18 + $0x910] sm:$0xff]
    %v1994 = vld [vmem:[#allocation18 + $0x918] sm:$0xff]
    %v1995 = vld [vmem:[#allocation18 + $0x920] sm:$0xff]
    %v1996 = vld [vmem:[#allocation18 + $0x928] sm:$0xff]
    %v1997 = vld [vmem:[#allocation18 + $0x930] sm:$0xff]
    %v1998 = vld [vmem:[#allocation18 + $0x938] sm:$0xff]
    %v1999 = vld [vmem:[#allocation18 + $0x940] sm:$0xff]
    %v2000 = vld [vmem:[#allocation18 + $0x948] sm:$0xff]
    %v2001 = vld [vmem:[#allocation18 + $0x950] sm:$0xff]
    %v2002 = vld [vmem:[#allocation18 + $0x958] sm:$0xff]
    %v2003 = vld [vmem:[#allocation18 + $0x960] sm:$0xff]
    %v2004 = vld [vmem:[#allocation18 + $0x968] sm:$0xff]
    %v2005 = vld [vmem:[#allocation18 + $0x970] sm:$0xff]
    %v2006 = vld [vmem:[#allocation18 + $0x978] sm:$0xff]
    %v2007 = vld [vmem:[#allocation18 + $0x980] sm:$0xff]
    %v2008 = vld [vmem:[#allocation18 + $0x988] sm:$0xff]
    %v2009 = vld [vmem:[#allocation18 + $0x990] sm:$0xff]
    %v2010 = vld [vmem:[#allocation18 + $0x998] sm:$0xff]
    %v2011 = vld [vmem:[#allocation18 + $0x9a0] sm:$0xff]
    %v2012 = vld [vmem:[#allocation18 + $0x9a8] sm:$0xff]
    %v2013 = vld [vmem:[#allocation18 + $0x9b0] sm:$0xff]
    %v2014 = vld [vmem:[#allocation18 + $0x9b8] sm:$0xff]
    %v2015 = vld [vmem:[#allocation18 + $0x9c0] sm:$0xff]
    %v2016 = vld [vmem:[#allocation18 + $0x9c8] sm:$0xff]
    %v2017 = vld [vmem:[#allocation18 + $0x9d0] sm:$0xff]
    %v2018 = vld [vmem:[#allocation18 + $0x9d8] sm:$0xff]
    %v2019 = vld [vmem:[#allocation18 + $0x9e0] sm:$0xff]
    %v2020 = vld [vmem:[#allocation18 + $0x9e8] sm:$0xff]
    %v2021 = vld [vmem:[#allocation18 + $0x9f0] sm:$0xff]
    %v2022 = vld [vmem:[#allocation18 + $0x9f8] sm:$0xff]
    %v2023 = vld [vmem:[#allocation18 + $0xa00] sm:$0xff]
    %v2024 = vld [vmem:[#allocation18 + $0xa08] sm:$0xff]
    %v2025 = vld [vmem:[#allocation18 + $0xa10] sm:$0xff]
    %v2026 = vld [vmem:[#allocation18 + $0xa18] sm:$0xff]
    %v2027 = vld [vmem:[#allocation18 + $0xa20] sm:$0xff]
    %v2028 = vld [vmem:[#allocation18 + $0xa28] sm:$0xff]
    %v2029 = vld [vmem:[#allocation18 + $0xa30] sm:$0xff]
    %v2030 = vld [vmem:[#allocation18 + $0xa38] sm:$0xff]
    %v2031 = vld [vmem:[#allocation18 + $0xa40] sm:$0xff]
    %v2032 = vld [vmem:[#allocation18 + $0xa48] sm:$0xff]
    %v2033 = vld [vmem:[#allocation18 + $0xa50] sm:$0xff]
    %v2034 = vld [vmem:[#allocation18 + $0xa58] sm:$0xff]
    %v2035 = vld [vmem:[#allocation18 + $0xa60] sm:$0xff]
    %v2036 = vld [vmem:[#allocation18 + $0xa68] sm:$0xff]
    %v2037 = vld [vmem:[#allocation18 + $0xa70] sm:$0xff]
    %v2038 = vld [vmem:[#allocation18 + $0xa78] sm:$0xff]
    %v2039 = vld [vmem:[#allocation18 + $0xa80] sm:$0xff]
    %v2040 = vld [vmem:[#allocation18 + $0xa88] sm:$0xff]
    %v2041 = vld [vmem:[#allocation18 + $0xa90] sm:$0xff]
    %v2042 = vld [vmem:[#allocation18 + $0xa98] sm:$0xff]
    %v2043 = vld [vmem:[#allocation18 + $0xaa0] sm:$0xff]
    %v2044 = vld [vmem:[#allocation18 + $0xaa8] sm:$0xff]
    %v2045 = vld [vmem:[#allocation18 + $0xab0] sm:$0xff]
    %v2046 = vld [vmem:[#allocation18 + $0xab8] sm:$0xff]
    %v2047 = vld [vmem:[#allocation18 + $0xac0] sm:$0xff]
    %v2048 = vld [vmem:[#allocation18 + $0xac8] sm:$0xff]
    %v2049 = vld [vmem:[#allocation18 + $0xad0] sm:$0xff]
    %v2050 = vld [vmem:[#allocation18 + $0xad8] sm:$0xff]
    %v2051 = vld [vmem:[#allocation18 + $0xae0] sm:$0xff]
    %v2052 = vld [vmem:[#allocation18 + $0xae8] sm:$0xff]
    %v2053 = vld [vmem:[#allocation18 + $0xaf0] sm:$0xff]
    %v2054 = vld [vmem:[#allocation18 + $0xaf8] sm:$0xff]
    %v2055 = vld [vmem:[#allocation18 + $0xb00] sm:$0xff]
    %v2056 = vld [vmem:[#allocation18 + $0xb08] sm:$0xff]
    %v2057 = vld [vmem:[#allocation18 + $0xb10] sm:$0xff]
    %v2058 = vld [vmem:[#allocation18 + $0xb18] sm:$0xff]
    %v2059 = vld [vmem:[#allocation18 + $0xb20] sm:$0xff]
    %v2060 = vld [vmem:[#allocation18 + $0xb28] sm:$0xff]
    %v2061 = vld [vmem:[#allocation18 + $0xb30] sm:$0xff]
    %v2062 = vld [vmem:[#allocation18 + $0xb38] sm:$0xff]
    %v2063 = vld [vmem:[#allocation18 + $0xb40] sm:$0xff]
    %v2064 = vld [vmem:[#allocation18 + $0xb48] sm:$0xff]
    %v2065 = vld [vmem:[#allocation18 + $0xb50] sm:$0xff]
    %v2066 = vld [vmem:[#allocation18 + $0xb58] sm:$0xff]
    %v2067 = vld [vmem:[#allocation18 + $0xb60] sm:$0xff]
    %v2068 = vld [vmem:[#allocation18 + $0xb68] sm:$0xff]
    %v2069 = vld [vmem:[#allocation18 + $0xb70] sm:$0xff]
    %v2070 = vld [vmem:[#allocation18 + $0xb78] sm:$0xff]
    %v2071 = vld [vmem:[#allocation18 + $0xb80] sm:$0xff]
    %v2072 = vld [vmem:[#allocation18 + $0xb88] sm:$0xff]
    %v2073 = vld [vmem:[#allocation18 + $0xb90] sm:$0xff]
    %v2074 = vld [vmem:[#allocation18 + $0xb98] sm:$0xff]
    %v2075 = vld [vmem:[#allocation18 + $0xba0] sm:$0xff]
    %v2076 = vld [vmem:[#allocation18 + $0xba8] sm:$0xff]
    %v2077 = vld [vmem:[#allocation18 + $0xbb0] sm:$0xff]
    %v2078 = vld [vmem:[#allocation18 + $0xbb8] sm:$0xff]
    %v2079 = vld [vmem:[#allocation18 + $0xbc0] sm:$0xff]
    %v2080 = vld [vmem:[#allocation18 + $0xbc8] sm:$0xff]
    %v2081 = vld [vmem:[#allocation18 + $0xbd0] sm:$0xff]
    %v2082 = vld [vmem:[#allocation18 + $0xbd8] sm:$0xff]
    %v2083 = vld [vmem:[#allocation18 + $0xbe0] sm:$0xff]
    %v2084 = vld [vmem:[#allocation18 + $0xbe8] sm:$0xff]
    %v2085 = vld [vmem:[#allocation18 + $0xbf0] sm:$0xff]
    %v2086 = vld [vmem:[#allocation18 + $0xbf8] sm:$0xff]
    %v2087 = vld [vmem:[#allocation18 + $0xc00] sm:$0xff]
    %v2088 = vld [vmem:[#allocation18 + $0xc08] sm:$0xff]
    %v2089 = vld [vmem:[#allocation18 + $0xc10] sm:$0xff]
    %v2090 = vld [vmem:[#allocation18 + $0xc18] sm:$0xff]
    %v2091 = vld [vmem:[#allocation18 + $0xc20] sm:$0xff]
    %v2092 = vld [vmem:[#allocation18 + $0xc28] sm:$0xff]
    %v2093 = vld [vmem:[#allocation18 + $0xc30] sm:$0xff]
    %v2094 = vld [vmem:[#allocation18 + $0xc38] sm:$0xff]
    %v2095 = vld [vmem:[#allocation18 + $0xc40] sm:$0xff]
    %v2096 = vld [vmem:[#allocation18 + $0xc48] sm:$0xff]
    %v2097 = vld [vmem:[#allocation18 + $0xc50] sm:$0xff]
    %v2098 = vld [vmem:[#allocation18 + $0xc58] sm:$0xff]
    %v2099 = vld [vmem:[#allocation18 + $0xc60] sm:$0xff]
    %v2100 = vld [vmem:[#allocation18 + $0xc68] sm:$0xff]
    %v2101 = vld [vmem:[#allocation18 + $0xc70] sm:$0xff]
    %v2102 = vld [vmem:[#allocation18 + $0xc78] sm:$0xff]
    %v2103 = vld [vmem:[#allocation18 + $0xc80] sm:$0xff]
    %v2104 = vld [vmem:[#allocation18 + $0xc88] sm:$0xff]
    %v2105 = vld [vmem:[#allocation18 + $0xc90] sm:$0xff]
    %v2106 = vld [vmem:[#allocation18 + $0xc98] sm:$0xff]
    %v2107 = vld [vmem:[#allocation18 + $0xca0] sm:$0xff]
    %v2108 = vld [vmem:[#allocation18 + $0xca8] sm:$0xff]
    %v2109 = vld [vmem:[#allocation18 + $0xcb0] sm:$0xff]
    %v2110 = vld [vmem:[#allocation18 + $0xcb8] sm:$0xff]
    %v2111 = vld [vmem:[#allocation18 + $0xcc0] sm:$0xff]
    %v2112 = vld [vmem:[#allocation18 + $0xcc8] sm:$0xff]
    %v2113 = vld [vmem:[#allocation18 + $0xcd0] sm:$0xff]
    %v2114 = vld [vmem:[#allocation18 + $0xcd8] sm:$0xff]
    %v2115 = vld [vmem:[#allocation18 + $0xce0] sm:$0xff]
    %v2116 = vld [vmem:[#allocation18 + $0xce8] sm:$0xff]
    %v2117 = vld [vmem:[#allocation18 + $0xcf0] sm:$0xff]
    %v2118 = vld [vmem:[#allocation18 + $0xcf8] sm:$0xff]
    %v2119 = vld [vmem:[#allocation18 + $0xd00] sm:$0xff]
    %v2120 = vld [vmem:[#allocation18 + $0xd08] sm:$0xff]
    %v2121 = vld [vmem:[#allocation18 + $0xd10] sm:$0xff]
    %v2122 = vld [vmem:[#allocation18 + $0xd18] sm:$0xff]
    %v2123 = vld [vmem:[#allocation18 + $0xd20] sm:$0xff]
    %v2124 = vld [vmem:[#allocation18 + $0xd28] sm:$0xff]
    %v2125 = vld [vmem:[#allocation18 + $0xd30] sm:$0xff]
    %v2126 = vld [vmem:[#allocation18 + $0xd38] sm:$0xff]
    %v2127 = vld [vmem:[#allocation18 + $0xd40] sm:$0xff]
    %v2128 = vld [vmem:[#allocation18 + $0xd48] sm:$0xff]
    %v2129 = vld [vmem:[#allocation18 + $0xd50] sm:$0xff]
    %v2130 = vld [vmem:[#allocation18 + $0xd58] sm:$0xff]
    %v2131 = vld [vmem:[#allocation18 + $0xd60] sm:$0xff]
    %v2132 = vld [vmem:[#allocation18 + $0xd68] sm:$0xff]
    %v2133 = vld [vmem:[#allocation18 + $0xd70] sm:$0xff]
    %v2134 = vld [vmem:[#allocation18 + $0xd78] sm:$0xff]
    %v2135 = vld [vmem:[#allocation18 + $0xd80] sm:$0xff]
    %v2136 = vld [vmem:[#allocation18 + $0xd88] sm:$0xff]
    %v2137 = vld [vmem:[#allocation18 + $0xd90] sm:$0xff]
    %v2138 = vld [vmem:[#allocation18 + $0xd98] sm:$0xff]
    %v2139 = vld [vmem:[#allocation18 + $0xda0] sm:$0xff]
    %v2140 = vld [vmem:[#allocation18 + $0xda8] sm:$0xff]
    %v2141 = vld [vmem:[#allocation18 + $0xdb0] sm:$0xff]
    %v2142 = vld [vmem:[#allocation18 + $0xdb8] sm:$0xff]
    %v2143 = vld [vmem:[#allocation18 + $0xdc0] sm:$0xff]
    %v2144 = vld [vmem:[#allocation18 + $0xdc8] sm:$0xff]
    %v2145 = vld [vmem:[#allocation18 + $0xdd0] sm:$0xff]
    %v2146 = vld [vmem:[#allocation18 + $0xdd8] sm:$0xff]
    %v2147 = vld [vmem:[#allocation18 + $0xde0] sm:$0xff]
    %v2148 = vld [vmem:[#allocation18 + $0xde8] sm:$0xff]
    %v2149 = vld [vmem:[#allocation18 + $0xdf0] sm:$0xff]
    %v2150 = vld [vmem:[#allocation18 + $0xdf8] sm:$0xff]
    %v2151 = vld [vmem:[#allocation18 + $0xe00] sm:$0xff]
    %v2152 = vld [vmem:[#allocation18 + $0xe08] sm:$0xff]
    %v2153 = vld [vmem:[#allocation18 + $0xe10] sm:$0xff]
    %v2154 = vld [vmem:[#allocation18 + $0xe18] sm:$0xff]
    %v2155 = vld [vmem:[#allocation18 + $0xe20] sm:$0xff]
    %v2156 = vld [vmem:[#allocation18 + $0xe28] sm:$0xff]
    %v2157 = vld [vmem:[#allocation18 + $0xe30] sm:$0xff]
    %v2158 = vld [vmem:[#allocation18 + $0xe38] sm:$0xff]
    %v2159 = vld [vmem:[#allocation18 + $0xe40] sm:$0xff]
    %v2160 = vld [vmem:[#allocation18 + $0xe48] sm:$0xff]
    %v2161 = vld [vmem:[#allocation18 + $0xe50] sm:$0xff]
    %v2162 = vld [vmem:[#allocation18 + $0xe58] sm:$0xff]
    %v2163 = vld [vmem:[#allocation18 + $0xe60] sm:$0xff]
    %v2164 = vld [vmem:[#allocation18 + $0xe68] sm:$0xff]
    %v2165 = vld [vmem:[#allocation18 + $0xe70] sm:$0xff]
    %v2166 = vld [vmem:[#allocation18 + $0xe78] sm:$0xff]
    %v2167 = vld [vmem:[#allocation18 + $0xe80] sm:$0xff]
    %v2168 = vld [vmem:[#allocation18 + $0xe88] sm:$0xff]
    %v2169 = vld [vmem:[#allocation18 + $0xe90] sm:$0xff]
    %v2170 = vld [vmem:[#allocation18 + $0xe98] sm:$0xff]
    %v2171 = vld [vmem:[#allocation18 + $0xea0] sm:$0xff]
    %v2172 = vld [vmem:[#allocation18 + $0xea8] sm:$0xff]
    %v2173 = vld [vmem:[#allocation18 + $0xeb0] sm:$0xff]
    %v2174 = vld [vmem:[#allocation18 + $0xeb8] sm:$0xff]
    %v2175 = vld [vmem:[#allocation18 + $0xec0] sm:$0xff]
    %v2176 = vld [vmem:[#allocation18 + $0xec8] sm:$0xff]
    %v2177 = vld [vmem:[#allocation18 + $0xed0] sm:$0xff]
    %v2178 = vld [vmem:[#allocation18 + $0xed8] sm:$0xff]
    %v2179 = vld [vmem:[#allocation18 + $0xee0] sm:$0xff]
    %v2180 = vld [vmem:[#allocation18 + $0xee8] sm:$0xff]
    %v2181 = vld [vmem:[#allocation18 + $0xef0] sm:$0xff]
    %v2182 = vld [vmem:[#allocation18 + $0xef8] sm:$0xff]
    %v2183 = vld [vmem:[#allocation18 + $0xf00] sm:$0xff]
    %v2184 = vld [vmem:[#allocation18 + $0xf08] sm:$0xff]
    %v2185 = vld [vmem:[#allocation18 + $0xf10] sm:$0xff]
    %v2186 = vld [vmem:[#allocation18 + $0xf18] sm:$0xff]
    %v2187 = vld [vmem:[#allocation18 + $0xf20] sm:$0xff]
    %v2188 = vld [vmem:[#allocation18 + $0xf28] sm:$0xff]
    %v2189 = vld [vmem:[#allocation18 + $0xf30] sm:$0xff]
    %v2190 = vld [vmem:[#allocation18 + $0xf38] sm:$0xff]
    %v2191 = vld [vmem:[#allocation18 + $0xf40] sm:$0xff]
    %v2192 = vld [vmem:[#allocation18 + $0xf48] sm:$0xff]
    %v2193 = vld [vmem:[#allocation18 + $0xf50] sm:$0xff]
    %v2194 = vld [vmem:[#allocation18 + $0xf58] sm:$0xff]
    %v2195 = vld [vmem:[#allocation18 + $0xf60] sm:$0xff]
    %v2196 = vld [vmem:[#allocation18 + $0xf68] sm:$0xff]
    %v2197 = vld [vmem:[#allocation18 + $0xf70] sm:$0xff]
    %v2198 = vld [vmem:[#allocation18 + $0xf78] sm:$0xff]
    %v2199 = vld [vmem:[#allocation18 + $0xf80] sm:$0xff]
    %v2200 = vld [vmem:[#allocation18 + $0xf88] sm:$0xff]
    %v2201 = vld [vmem:[#allocation18 + $0xf90] sm:$0xff]
    %v2202 = vld [vmem:[#allocation18 + $0xf98] sm:$0xff]
    %v2203 = vld [vmem:[#allocation18 + $0xfa0] sm:$0xff]
    %v2204 = vld [vmem:[#allocation18 + $0xfa8] sm:$0xff]
    %v2205 = vld [vmem:[#allocation18 + $0xfb0] sm:$0xff]
    %v2206 = vld [vmem:[#allocation18 + $0xfb8] sm:$0xff]
    %v2207 = vld [vmem:[#allocation18 + $0xfc0] sm:$0xff]
    %v2208 = vld [vmem:[#allocation18 + $0xfc8] sm:$0xff]
    %v2209 = vld [vmem:[#allocation18 + $0xfd0] sm:$0xff]
    %v2210 = vld [vmem:[#allocation18 + $0xfd8] sm:$0xff]
    %v2211 = vld [vmem:[#allocation18 + $0xfe0] sm:$0xff]
    %v2212 = vld [vmem:[#allocation18 + $0xfe8] sm:$0xff]
    %v2213 = vld [vmem:[#allocation18 + $0xff0] sm:$0xff]
    %v2214 = vld [vmem:[#allocation18 + $0xff8] sm:$0xff]
    %v2215 = vld [vmem:[#allocation20] sm:$0xff]
    %v2216 = vld [vmem:[#allocation20 + $0x8] sm:$0xff]
    %v2217 = vld [vmem:[#allocation20 + $0x10] sm:$0xff]
    %v2218 = vld [vmem:[#allocation20 + $0x18] sm:$0xff]
    %v2223 = vperm.slane %v2215, 0
    %v2224 = vperm.slane %v2215, 1
    %v2225 = vperm.slane %v2215, 2
    %v2226 = vperm.slane %v2215, 3
    %v2227 = vperm.slane %v2215, 4
    %v2228 = vperm.slane %v2215, 5
    %v2229 = vperm.slane %v2215, 6
    %v2230 = vperm.slane %v2215, 7
    %v2231 = vperm.slane %v2216, 0
    %v2232 = vperm.slane %v2216, 1
    %v2233 = vperm.slane %v2216, 2
    %v2234 = vperm.slane %v2216, 3
    %v2235 = vperm.slane %v2216, 4
    %v2236 = vperm.slane %v2216, 5
    %v2237 = vperm.slane %v2216, 6
    %v2238 = vperm.slane %v2216, 7
    %v2239 = vperm.slane %v2217, 0
    %v2240 = vperm.slane %v2217, 1
    %v2241 = vperm.slane %v2217, 2
    %v2242 = vperm.slane %v2217, 3
    %v2243 = vperm.slane %v2217, 4
    %v2244 = vperm.slane %v2217, 5
    %v2245 = vperm.slane %v2217, 6
    %v2246 = vperm.slane %v2217, 7
    %v2247 = vperm.slane %v2218, 0
    %v2248 = vperm.slane %v2218, 1
    %v2249 = vperm.slane %v2218, 2
    %v2250 = vperm.slane %v2218, 3
    %v2251 = vperm.slane %v2218, 4
    %v2252 = vperm.slane %v2218, 5
    %v2253 = vperm.slane %v2218, 6
    %v2254 = vperm.slane %v2218, 7
    %2287 = vmatpush.msra.mxu0 %v2183
    %2288 = vmatpush.msra.mxu0 %v2151
    %2289 = vmatpush.msra.mxu0 %v2119
    %2290 = vmatpush.msra.mxu0 %v2087
    %2291 = vmatpush.msra.mxu0 %v2055
    %2292 = vmatpush.msra.mxu0 %v2023
    %2293 = vmatpush.msra.mxu0 %v1991
    %2294 = vmatpush.msra.mxu0 %v1959
    %2295 = vmatpush.msra.mxu0 %v1927
    %2296 = vmatpush.msra.mxu0 %v1895
    %2297 = vmatpush.msra.mxu0 %v1863
    %2298 = vmatpush.msra.mxu0 %v1831
    %2299 = vmatpush.msra.mxu0 %v1799
    %2300 = vmatpush.msra.mxu0 %v1767
    %2301 = vmatpush.msra.mxu0 %v1735
    %2302 = vmatpush.msra.mxu0 %v1703
    %2303 = vmatmul.f32.gmra.mxu0 %v1702
    %v2304 = vpop.f32.mrf.mxu0
    %v2305 = vadd.f32 %v2223, %v2304
    %2306 = vdwg.mxu0
    %2307 = vmatpush.msra.mxu0 %v2184
    %2308 = vmatpush.msra.mxu0 %v2152
    %2309 = vmatpush.msra.mxu0 %v2120
    %2310 = vmatpush.msra.mxu0 %v2088
    %2311 = vmatpush.msra.mxu0 %v2056
    %2312 = vmatpush.msra.mxu0 %v2024
    %2313 = vmatpush.msra.mxu0 %v1992
    %2314 = vmatpush.msra.mxu0 %v1960
    %2315 = vmatpush.msra.mxu0 %v1928
    %2316 = vmatpush.msra.mxu0 %v1896
    %2317 = vmatpush.msra.mxu0 %v1864
    %2318 = vmatpush.msra.mxu0 %v1832
    %2319 = vmatpush.msra.mxu0 %v1800
    %2320 = vmatpush.msra.mxu0 %v1768
    %2321 = vmatpush.msra.mxu0 %v1736
    %2322 = vmatpush.msra.mxu0 %v1704
    %2323 = vmatmul.f32.gmra.mxu0 %v1702
    %v2324 = vpop.f32.mrf.mxu0
    %v2325 = vadd.f32 %v2224, %v2324
    %2326 = vdwg.mxu0
    %2327 = vmatpush.msra.mxu0 %v2185
    %2328 = vmatpush.msra.mxu0 %v2153
    %2329 = vmatpush.msra.mxu0 %v2121
    %2330 = vmatpush.msra.mxu0 %v2089
    %2331 = vmatpush.msra.mxu0 %v2057
    %2332 = vmatpush.msra.mxu0 %v2025
    %2333 = vmatpush.msra.mxu0 %v1993
    %2334 = vmatpush.msra.mxu0 %v1961
    %2335 = vmatpush.msra.mxu0 %v1929
    %2336 = vmatpush.msra.mxu0 %v1897
    %2337 = vmatpush.msra.mxu0 %v1865
    %2338 = vmatpush.msra.mxu0 %v1833
    %2339 = vmatpush.msra.mxu0 %v1801
    %2340 = vmatpush.msra.mxu0 %v1769
    %2341 = vmatpush.msra.mxu0 %v1737
    %2342 = vmatpush.msra.mxu0 %v1705
    %2343 = vmatmul.f32.gmra.mxu0 %v1702
    %v2344 = vpop.f32.mrf.mxu0
    %v2345 = vadd.f32 %v2225, %v2344
    %2346 = vdwg.mxu0
    %2347 = vmatpush.msra.mxu0 %v2186
    %2348 = vmatpush.msra.mxu0 %v2154
    %2349 = vmatpush.msra.mxu0 %v2122
    %2350 = vmatpush.msra.mxu0 %v2090
    %2351 = vmatpush.msra.mxu0 %v2058
    %2352 = vmatpush.msra.mxu0 %v2026
    %2353 = vmatpush.msra.mxu0 %v1994
    %2354 = vmatpush.msra.mxu0 %v1962
    %2355 = vmatpush.msra.mxu0 %v1930
    %2356 = vmatpush.msra.mxu0 %v1898
    %2357 = vmatpush.msra.mxu0 %v1866
    %2358 = vmatpush.msra.mxu0 %v1834
    %2359 = vmatpush.msra.mxu0 %v1802
    %2360 = vmatpush.msra.mxu0 %v1770
    %2361 = vmatpush.msra.mxu0 %v1738
    %2362 = vmatpush.msra.mxu0 %v1706
    %2363 = vmatmul.f32.gmra.mxu0 %v1702
    %v2364 = vpop.f32.mrf.mxu0
    %v2365 = vadd.f32 %v2226, %v2364
    %2366 = vdwg.mxu0
    %2367 = vmatpush.msra.mxu0 %v2187
    %2368 = vmatpush.msra.mxu0 %v2155
    %2369 = vmatpush.msra.mxu0 %v2123
    %2370 = vmatpush.msra.mxu0 %v2091
    %2371 = vmatpush.msra.mxu0 %v2059
    %2372 = vmatpush.msra.mxu0 %v2027
    %2373 = vmatpush.msra.mxu0 %v1995
    %2374 = vmatpush.msra.mxu0 %v1963
    %2375 = vmatpush.msra.mxu0 %v1931
    %2376 = vmatpush.msra.mxu0 %v1899
    %2377 = vmatpush.msra.mxu0 %v1867
    %2378 = vmatpush.msra.mxu0 %v1835
    %2379 = vmatpush.msra.mxu0 %v1803
    %2380 = vmatpush.msra.mxu0 %v1771
    %2381 = vmatpush.msra.mxu0 %v1739
    %2382 = vmatpush.msra.mxu0 %v1707
    %2383 = vmatmul.f32.gmra.mxu0 %v1702
    %v2384 = vpop.f32.mrf.mxu0
    %v2385 = vadd.f32 %v2227, %v2384
    %2386 = vdwg.mxu0
    %2387 = vmatpush.msra.mxu0 %v2188
    %2388 = vmatpush.msra.mxu0 %v2156
    %2389 = vmatpush.msra.mxu0 %v2124
    %2390 = vmatpush.msra.mxu0 %v2092
    %2391 = vmatpush.msra.mxu0 %v2060
    %2392 = vmatpush.msra.mxu0 %v2028
    %2393 = vmatpush.msra.mxu0 %v1996
    %2394 = vmatpush.msra.mxu0 %v1964
    %2395 = vmatpush.msra.mxu0 %v1932
    %2396 = vmatpush.msra.mxu0 %v1900
    %2397 = vmatpush.msra.mxu0 %v1868
    %2398 = vmatpush.msra.mxu0 %v1836
    %2399 = vmatpush.msra.mxu0 %v1804
    %2400 = vmatpush.msra.mxu0 %v1772
    %2401 = vmatpush.msra.mxu0 %v1740
    %2402 = vmatpush.msra.mxu0 %v1708
    %2403 = vmatmul.f32.gmra.mxu0 %v1702
    %v2404 = vpop.f32.mrf.mxu0
    %v2405 = vadd.f32 %v2228, %v2404
    %2406 = vdwg.mxu0
    %2407 = vmatpush.msra.mxu0 %v2189
    %2408 = vmatpush.msra.mxu0 %v2157
    %2409 = vmatpush.msra.mxu0 %v2125
    %2410 = vmatpush.msra.mxu0 %v2093
    %2411 = vmatpush.msra.mxu0 %v2061
    %2412 = vmatpush.msra.mxu0 %v2029
    %2413 = vmatpush.msra.mxu0 %v1997
    %2414 = vmatpush.msra.mxu0 %v1965
    %2415 = vmatpush.msra.mxu0 %v1933
    %2416 = vmatpush.msra.mxu0 %v1901
    %2417 = vmatpush.msra.mxu0 %v1869
    %2418 = vmatpush.msra.mxu0 %v1837
    %2419 = vmatpush.msra.mxu0 %v1805
    %2420 = vmatpush.msra.mxu0 %v1773
    %2421 = vmatpush.msra.mxu0 %v1741
    %2422 = vmatpush.msra.mxu0 %v1709
    %2423 = vmatmul.f32.gmra.mxu0 %v1702
    %v2424 = vpop.f32.mrf.mxu0
    %v2425 = vadd.f32 %v2229, %v2424
    %2426 = vdwg.mxu0
    %2427 = vmatpush.msra.mxu0 %v2190
    %2428 = vmatpush.msra.mxu0 %v2158
    %2429 = vmatpush.msra.mxu0 %v2126
    %2430 = vmatpush.msra.mxu0 %v2094
    %2431 = vmatpush.msra.mxu0 %v2062
    %2432 = vmatpush.msra.mxu0 %v2030
    %2433 = vmatpush.msra.mxu0 %v1998
    %2434 = vmatpush.msra.mxu0 %v1966
    %2435 = vmatpush.msra.mxu0 %v1934
    %2436 = vmatpush.msra.mxu0 %v1902
    %2437 = vmatpush.msra.mxu0 %v1870
    %2438 = vmatpush.msra.mxu0 %v1838
    %2439 = vmatpush.msra.mxu0 %v1806
    %2440 = vmatpush.msra.mxu0 %v1774
    %2441 = vmatpush.msra.mxu0 %v1742
    %2442 = vmatpush.msra.mxu0 %v1710
    %2443 = vmatmul.f32.gmra.mxu0 %v1702
    %v2444 = vpop.f32.mrf.mxu0
    %v2445 = vadd.f32 %v2230, %v2444
    %2446 = vdwg.mxu0
    %2447 = vmatpush.msra.mxu0 %v2191
    %2448 = vmatpush.msra.mxu0 %v2159
    %2449 = vmatpush.msra.mxu0 %v2127
    %2450 = vmatpush.msra.mxu0 %v2095
    %2451 = vmatpush.msra.mxu0 %v2063
    %2452 = vmatpush.msra.mxu0 %v2031
    %2453 = vmatpush.msra.mxu0 %v1999
    %2454 = vmatpush.msra.mxu0 %v1967
    %2455 = vmatpush.msra.mxu0 %v1935
    %2456 = vmatpush.msra.mxu0 %v1903
    %2457 = vmatpush.msra.mxu0 %v1871
    %2458 = vmatpush.msra.mxu0 %v1839
    %2459 = vmatpush.msra.mxu0 %v1807
    %2460 = vmatpush.msra.mxu0 %v1775
    %2461 = vmatpush.msra.mxu0 %v1743
    %2462 = vmatpush.msra.mxu0 %v1711
    %2463 = vmatmul.f32.gmra.mxu0 %v1702
    %v2464 = vpop.f32.mrf.mxu0
    %v2465 = vadd.f32 %v2231, %v2464
    %2466 = vdwg.mxu0
    %2467 = vmatpush.msra.mxu0 %v2192
    %2468 = vmatpush.msra.mxu0 %v2160
    %2469 = vmatpush.msra.mxu0 %v2128
    %2470 = vmatpush.msra.mxu0 %v2096
    %2471 = vmatpush.msra.mxu0 %v2064
    %2472 = vmatpush.msra.mxu0 %v2032
    %2473 = vmatpush.msra.mxu0 %v2000
    %2474 = vmatpush.msra.mxu0 %v1968
    %2475 = vmatpush.msra.mxu0 %v1936
    %2476 = vmatpush.msra.mxu0 %v1904
    %2477 = vmatpush.msra.mxu0 %v1872
    %2478 = vmatpush.msra.mxu0 %v1840
    %2479 = vmatpush.msra.mxu0 %v1808
    %2480 = vmatpush.msra.mxu0 %v1776
    %2481 = vmatpush.msra.mxu0 %v1744
    %2482 = vmatpush.msra.mxu0 %v1712
    %2483 = vmatmul.f32.gmra.mxu0 %v1702
    %v2484 = vpop.f32.mrf.mxu0
    %v2485 = vadd.f32 %v2232, %v2484
    %2486 = vdwg.mxu0
    %2487 = vmatpush.msra.mxu0 %v2193
    %2488 = vmatpush.msra.mxu0 %v2161
    %2489 = vmatpush.msra.mxu0 %v2129
    %2490 = vmatpush.msra.mxu0 %v2097
    %2491 = vmatpush.msra.mxu0 %v2065
    %2492 = vmatpush.msra.mxu0 %v2033
    %2493 = vmatpush.msra.mxu0 %v2001
    %2494 = vmatpush.msra.mxu0 %v1969
    %2495 = vmatpush.msra.mxu0 %v1937
    %2496 = vmatpush.msra.mxu0 %v1905
    %2497 = vmatpush.msra.mxu0 %v1873
    %2498 = vmatpush.msra.mxu0 %v1841
    %2499 = vmatpush.msra.mxu0 %v1809
    %2500 = vmatpush.msra.mxu0 %v1777
    %2501 = vmatpush.msra.mxu0 %v1745
    %2502 = vmatpush.msra.mxu0 %v1713
    %2503 = vmatmul.f32.gmra.mxu0 %v1702
    %v2504 = vpop.f32.mrf.mxu0
    %v2505 = vadd.f32 %v2233, %v2504
    %2506 = vdwg.mxu0
    %2507 = vmatpush.msra.mxu0 %v2194
    %2508 = vmatpush.msra.mxu0 %v2162
    %2509 = vmatpush.msra.mxu0 %v2130
    %2510 = vmatpush.msra.mxu0 %v2098
    %2511 = vmatpush.msra.mxu0 %v2066
    %2512 = vmatpush.msra.mxu0 %v2034
    %2513 = vmatpush.msra.mxu0 %v2002
    %2514 = vmatpush.msra.mxu0 %v1970
    %2515 = vmatpush.msra.mxu0 %v1938
    %2516 = vmatpush.msra.mxu0 %v1906
    %2517 = vmatpush.msra.mxu0 %v1874
    %2518 = vmatpush.msra.mxu0 %v1842
    %2519 = vmatpush.msra.mxu0 %v1810
    %2520 = vmatpush.msra.mxu0 %v1778
    %2521 = vmatpush.msra.mxu0 %v1746
    %2522 = vmatpush.msra.mxu0 %v1714
    %2523 = vmatmul.f32.gmra.mxu0 %v1702
    %v2524 = vpop.f32.mrf.mxu0
    %v2525 = vadd.f32 %v2234, %v2524
    %2526 = vdwg.mxu0
    %2527 = vmatpush.msra.mxu0 %v2195
    %2528 = vmatpush.msra.mxu0 %v2163
    %2529 = vmatpush.msra.mxu0 %v2131
    %2530 = vmatpush.msra.mxu0 %v2099
    %2531 = vmatpush.msra.mxu0 %v2067
    %2532 = vmatpush.msra.mxu0 %v2035
    %2533 = vmatpush.msra.mxu0 %v2003
    %2534 = vmatpush.msra.mxu0 %v1971
    %2535 = vmatpush.msra.mxu0 %v1939
    %2536 = vmatpush.msra.mxu0 %v1907
    %2537 = vmatpush.msra.mxu0 %v1875
    %2538 = vmatpush.msra.mxu0 %v1843
    %2539 = vmatpush.msra.mxu0 %v1811
    %2540 = vmatpush.msra.mxu0 %v1779
    %2541 = vmatpush.msra.mxu0 %v1747
    %2542 = vmatpush.msra.mxu0 %v1715
    %2543 = vmatmul.f32.gmra.mxu0 %v1702
    %v2544 = vpop.f32.mrf.mxu0
    %v2545 = vadd.f32 %v2235, %v2544
    %2546 = vdwg.mxu0
    %2547 = vmatpush.msra.mxu0 %v2196
    %2548 = vmatpush.msra.mxu0 %v2164
    %2549 = vmatpush.msra.mxu0 %v2132
    %2550 = vmatpush.msra.mxu0 %v2100
    %2551 = vmatpush.msra.mxu0 %v2068
    %2552 = vmatpush.msra.mxu0 %v2036
    %2553 = vmatpush.msra.mxu0 %v2004
    %2554 = vmatpush.msra.mxu0 %v1972
    %2555 = vmatpush.msra.mxu0 %v1940
    %2556 = vmatpush.msra.mxu0 %v1908
    %2557 = vmatpush.msra.mxu0 %v1876
    %2558 = vmatpush.msra.mxu0 %v1844
    %2559 = vmatpush.msra.mxu0 %v1812
    %2560 = vmatpush.msra.mxu0 %v1780
    %2561 = vmatpush.msra.mxu0 %v1748
    %2562 = vmatpush.msra.mxu0 %v1716
    %2563 = vmatmul.f32.gmra.mxu0 %v1702
    %v2564 = vpop.f32.mrf.mxu0
    %v2565 = vadd.f32 %v2236, %v2564
    %2566 = vdwg.mxu0
    %2567 = vmatpush.msra.mxu0 %v2197
    %2568 = vmatpush.msra.mxu0 %v2165
    %2569 = vmatpush.msra.mxu0 %v2133
    %2570 = vmatpush.msra.mxu0 %v2101
    %2571 = vmatpush.msra.mxu0 %v2069
    %2572 = vmatpush.msra.mxu0 %v2037
    %2573 = vmatpush.msra.mxu0 %v2005
    %2574 = vmatpush.msra.mxu0 %v1973
    %2575 = vmatpush.msra.mxu0 %v1941
    %2576 = vmatpush.msra.mxu0 %v1909
    %2577 = vmatpush.msra.mxu0 %v1877
    %2578 = vmatpush.msra.mxu0 %v1845
    %2579 = vmatpush.msra.mxu0 %v1813
    %2580 = vmatpush.msra.mxu0 %v1781
    %2581 = vmatpush.msra.mxu0 %v1749
    %2582 = vmatpush.msra.mxu0 %v1717
    %2583 = vmatmul.f32.gmra.mxu0 %v1702
    %v2584 = vpop.f32.mrf.mxu0
    %v2585 = vadd.f32 %v2237, %v2584
    %2586 = vdwg.mxu0
    %2587 = vmatpush.msra.mxu0 %v2198
    %2588 = vmatpush.msra.mxu0 %v2166
    %2589 = vmatpush.msra.mxu0 %v2134
    %2590 = vmatpush.msra.mxu0 %v2102
    %2591 = vmatpush.msra.mxu0 %v2070
    %2592 = vmatpush.msra.mxu0 %v2038
    %2593 = vmatpush.msra.mxu0 %v2006
    %2594 = vmatpush.msra.mxu0 %v1974
    %2595 = vmatpush.msra.mxu0 %v1942
    %2596 = vmatpush.msra.mxu0 %v1910
    %2597 = vmatpush.msra.mxu0 %v1878
    %2598 = vmatpush.msra.mxu0 %v1846
    %2599 = vmatpush.msra.mxu0 %v1814
    %2600 = vmatpush.msra.mxu0 %v1782
    %2601 = vmatpush.msra.mxu0 %v1750
    %2602 = vmatpush.msra.mxu0 %v1718
    %2603 = vmatmul.f32.gmra.mxu0 %v1702
    %v2604 = vpop.f32.mrf.mxu0
    %v2605 = vadd.f32 %v2238, %v2604
    %2606 = vdwg.mxu0
    %2607 = vmatpush.msra.mxu0 %v2199
    %2608 = vmatpush.msra.mxu0 %v2167
    %2609 = vmatpush.msra.mxu0 %v2135
    %2610 = vmatpush.msra.mxu0 %v2103
    %2611 = vmatpush.msra.mxu0 %v2071
    %2612 = vmatpush.msra.mxu0 %v2039
    %2613 = vmatpush.msra.mxu0 %v2007
    %2614 = vmatpush.msra.mxu0 %v1975
    %2615 = vmatpush.msra.mxu0 %v1943
    %2616 = vmatpush.msra.mxu0 %v1911
    %2617 = vmatpush.msra.mxu0 %v1879
    %2618 = vmatpush.msra.mxu0 %v1847
    %2619 = vmatpush.msra.mxu0 %v1815
    %2620 = vmatpush.msra.mxu0 %v1783
    %2621 = vmatpush.msra.mxu0 %v1751
    %2622 = vmatpush.msra.mxu0 %v1719
    %2623 = vmatmul.f32.gmra.mxu0 %v1702
    %v2624 = vpop.f32.mrf.mxu0
    %v2625 = vadd.f32 %v2239, %v2624
    %2626 = vdwg.mxu0
    %2627 = vmatpush.msra.mxu0 %v2200
    %2628 = vmatpush.msra.mxu0 %v2168
    %2629 = vmatpush.msra.mxu0 %v2136
    %2630 = vmatpush.msra.mxu0 %v2104
    %2631 = vmatpush.msra.mxu0 %v2072
    %2632 = vmatpush.msra.mxu0 %v2040
    %2633 = vmatpush.msra.mxu0 %v2008
    %2634 = vmatpush.msra.mxu0 %v1976
    %2635 = vmatpush.msra.mxu0 %v1944
    %2636 = vmatpush.msra.mxu0 %v1912
    %2637 = vmatpush.msra.mxu0 %v1880
    %2638 = vmatpush.msra.mxu0 %v1848
    %2639 = vmatpush.msra.mxu0 %v1816
    %2640 = vmatpush.msra.mxu0 %v1784
    %2641 = vmatpush.msra.mxu0 %v1752
    %2642 = vmatpush.msra.mxu0 %v1720
    %2643 = vmatmul.f32.gmra.mxu0 %v1702
    %v2644 = vpop.f32.mrf.mxu0
    %v2645 = vadd.f32 %v2240, %v2644
    %2646 = vdwg.mxu0
    %2647 = vmatpush.msra.mxu0 %v2201
    %2648 = vmatpush.msra.mxu0 %v2169
    %2649 = vmatpush.msra.mxu0 %v2137
    %2650 = vmatpush.msra.mxu0 %v2105
    %2651 = vmatpush.msra.mxu0 %v2073
    %2652 = vmatpush.msra.mxu0 %v2041
    %2653 = vmatpush.msra.mxu0 %v2009
    %2654 = vmatpush.msra.mxu0 %v1977
    %2655 = vmatpush.msra.mxu0 %v1945
    %2656 = vmatpush.msra.mxu0 %v1913
    %2657 = vmatpush.msra.mxu0 %v1881
    %2658 = vmatpush.msra.mxu0 %v1849
    %2659 = vmatpush.msra.mxu0 %v1817
    %2660 = vmatpush.msra.mxu0 %v1785
    %2661 = vmatpush.msra.mxu0 %v1753
    %2662 = vmatpush.msra.mxu0 %v1721
    %2663 = vmatmul.f32.gmra.mxu0 %v1702
    %v2664 = vpop.f32.mrf.mxu0
    %v2665 = vadd.f32 %v2241, %v2664
    %2666 = vdwg.mxu0
    %2667 = vmatpush.msra.mxu0 %v2202
    %2668 = vmatpush.msra.mxu0 %v2170
    %2669 = vmatpush.msra.mxu0 %v2138
    %2670 = vmatpush.msra.mxu0 %v2106
    %2671 = vmatpush.msra.mxu0 %v2074
    %2672 = vmatpush.msra.mxu0 %v2042
    %2673 = vmatpush.msra.mxu0 %v2010
    %2674 = vmatpush.msra.mxu0 %v1978
    %2675 = vmatpush.msra.mxu0 %v1946
    %2676 = vmatpush.msra.mxu0 %v1914
    %2677 = vmatpush.msra.mxu0 %v1882
    %2678 = vmatpush.msra.mxu0 %v1850
    %2679 = vmatpush.msra.mxu0 %v1818
    %2680 = vmatpush.msra.mxu0 %v1786
    %2681 = vmatpush.msra.mxu0 %v1754
    %2682 = vmatpush.msra.mxu0 %v1722
    %2683 = vmatmul.f32.gmra.mxu0 %v1702
    %v2684 = vpop.f32.mrf.mxu0
    %v2685 = vadd.f32 %v2242, %v2684
    %2686 = vdwg.mxu0
    %2687 = vmatpush.msra.mxu0 %v2203
    %2688 = vmatpush.msra.mxu0 %v2171
    %2689 = vmatpush.msra.mxu0 %v2139
    %2690 = vmatpush.msra.mxu0 %v2107
    %2691 = vmatpush.msra.mxu0 %v2075
    %2692 = vmatpush.msra.mxu0 %v2043
    %2693 = vmatpush.msra.mxu0 %v2011
    %2694 = vmatpush.msra.mxu0 %v1979
    %2695 = vmatpush.msra.mxu0 %v1947
    %2696 = vmatpush.msra.mxu0 %v1915
    %2697 = vmatpush.msra.mxu0 %v1883
    %2698 = vmatpush.msra.mxu0 %v1851
    %2699 = vmatpush.msra.mxu0 %v1819
    %2700 = vmatpush.msra.mxu0 %v1787
    %2701 = vmatpush.msra.mxu0 %v1755
    %2702 = vmatpush.msra.mxu0 %v1723
    %2703 = vmatmul.f32.gmra.mxu0 %v1702
    %v2704 = vpop.f32.mrf.mxu0
    %v2705 = vadd.f32 %v2243, %v2704
    %2706 = vdwg.mxu0
    %2707 = vmatpush.msra.mxu0 %v2204
    %2708 = vmatpush.msra.mxu0 %v2172
    %2709 = vmatpush.msra.mxu0 %v2140
    %2710 = vmatpush.msra.mxu0 %v2108
    %2711 = vmatpush.msra.mxu0 %v2076
    %2712 = vmatpush.msra.mxu0 %v2044
    %2713 = vmatpush.msra.mxu0 %v2012
    %2714 = vmatpush.msra.mxu0 %v1980
    %2715 = vmatpush.msra.mxu0 %v1948
    %2716 = vmatpush.msra.mxu0 %v1916
    %2717 = vmatpush.msra.mxu0 %v1884
    %2718 = vmatpush.msra.mxu0 %v1852
    %2719 = vmatpush.msra.mxu0 %v1820
    %2720 = vmatpush.msra.mxu0 %v1788
    %2721 = vmatpush.msra.mxu0 %v1756
    %2722 = vmatpush.msra.mxu0 %v1724
    %2723 = vmatmul.f32.gmra.mxu0 %v1702
    %v2724 = vpop.f32.mrf.mxu0
    %v2725 = vadd.f32 %v2244, %v2724
    %2726 = vdwg.mxu0
    %2727 = vmatpush.msra.mxu0 %v2205
    %2728 = vmatpush.msra.mxu0 %v2173
    %2729 = vmatpush.msra.mxu0 %v2141
    %2730 = vmatpush.msra.mxu0 %v2109
    %2731 = vmatpush.msra.mxu0 %v2077
    %2732 = vmatpush.msra.mxu0 %v2045
    %2733 = vmatpush.msra.mxu0 %v2013
    %2734 = vmatpush.msra.mxu0 %v1981
    %2735 = vmatpush.msra.mxu0 %v1949
    %2736 = vmatpush.msra.mxu0 %v1917
    %2737 = vmatpush.msra.mxu0 %v1885
    %2738 = vmatpush.msra.mxu0 %v1853
    %2739 = vmatpush.msra.mxu0 %v1821
    %2740 = vmatpush.msra.mxu0 %v1789
    %2741 = vmatpush.msra.mxu0 %v1757
    %2742 = vmatpush.msra.mxu0 %v1725
    %2743 = vmatmul.f32.gmra.mxu0 %v1702
    %v2744 = vpop.f32.mrf.mxu0
    %v2745 = vadd.f32 %v2245, %v2744
    %2746 = vdwg.mxu0
    %2747 = vmatpush.msra.mxu0 %v2206
    %2748 = vmatpush.msra.mxu0 %v2174
    %2749 = vmatpush.msra.mxu0 %v2142
    %2750 = vmatpush.msra.mxu0 %v2110
    %2751 = vmatpush.msra.mxu0 %v2078
    %2752 = vmatpush.msra.mxu0 %v2046
    %2753 = vmatpush.msra.mxu0 %v2014
    %2754 = vmatpush.msra.mxu0 %v1982
    %2755 = vmatpush.msra.mxu0 %v1950
    %2756 = vmatpush.msra.mxu0 %v1918
    %2757 = vmatpush.msra.mxu0 %v1886
    %2758 = vmatpush.msra.mxu0 %v1854
    %2759 = vmatpush.msra.mxu0 %v1822
    %2760 = vmatpush.msra.mxu0 %v1790
    %2761 = vmatpush.msra.mxu0 %v1758
    %2762 = vmatpush.msra.mxu0 %v1726
    %2763 = vmatmul.f32.gmra.mxu0 %v1702
    %v2764 = vpop.f32.mrf.mxu0
    %v2765 = vadd.f32 %v2246, %v2764
    %2766 = vdwg.mxu0
    %2767 = vmatpush.msra.mxu0 %v2207
    %2768 = vmatpush.msra.mxu0 %v2175
    %2769 = vmatpush.msra.mxu0 %v2143
    %2770 = vmatpush.msra.mxu0 %v2111
    %2771 = vmatpush.msra.mxu0 %v2079
    %2772 = vmatpush.msra.mxu0 %v2047
    %2773 = vmatpush.msra.mxu0 %v2015
    %2774 = vmatpush.msra.mxu0 %v1983
    %2775 = vmatpush.msra.mxu0 %v1951
    %2776 = vmatpush.msra.mxu0 %v1919
    %2777 = vmatpush.msra.mxu0 %v1887
    %2778 = vmatpush.msra.mxu0 %v1855
    %2779 = vmatpush.msra.mxu0 %v1823
    %2780 = vmatpush.msra.mxu0 %v1791
    %2781 = vmatpush.msra.mxu0 %v1759
    %2782 = vmatpush.msra.mxu0 %v1727
    %2783 = vmatmul.f32.gmra.mxu0 %v1702
    %v2784 = vpop.f32.mrf.mxu0
    %v2785 = vadd.f32 %v2247, %v2784
    %2786 = vdwg.mxu0
    %2787 = vmatpush.msra.mxu0 %v2208
    %2788 = vmatpush.msra.mxu0 %v2176
    %2789 = vmatpush.msra.mxu0 %v2144
    %2790 = vmatpush.msra.mxu0 %v2112
    %2791 = vmatpush.msra.mxu0 %v2080
    %2792 = vmatpush.msra.mxu0 %v2048
    %2793 = vmatpush.msra.mxu0 %v2016
    %2794 = vmatpush.msra.mxu0 %v1984
    %2795 = vmatpush.msra.mxu0 %v1952
    %2796 = vmatpush.msra.mxu0 %v1920
    %2797 = vmatpush.msra.mxu0 %v1888
    %2798 = vmatpush.msra.mxu0 %v1856
    %2799 = vmatpush.msra.mxu0 %v1824
    %2800 = vmatpush.msra.mxu0 %v1792
    %2801 = vmatpush.msra.mxu0 %v1760
    %2802 = vmatpush.msra.mxu0 %v1728
    %2803 = vmatmul.f32.gmra.mxu0 %v1702
    %v2804 = vpop.f32.mrf.mxu0
    %v2805 = vadd.f32 %v2248, %v2804
    %2806 = vdwg.mxu0
    %2807 = vmatpush.msra.mxu0 %v2209
    %2808 = vmatpush.msra.mxu0 %v2177
    %2809 = vmatpush.msra.mxu0 %v2145
    %2810 = vmatpush.msra.mxu0 %v2113
    %2811 = vmatpush.msra.mxu0 %v2081
    %2812 = vmatpush.msra.mxu0 %v2049
    %2813 = vmatpush.msra.mxu0 %v2017
    %2814 = vmatpush.msra.mxu0 %v1985
    %2815 = vmatpush.msra.mxu0 %v1953
    %2816 = vmatpush.msra.mxu0 %v1921
    %2817 = vmatpush.msra.mxu0 %v1889
    %2818 = vmatpush.msra.mxu0 %v1857
    %2819 = vmatpush.msra.mxu0 %v1825
    %2820 = vmatpush.msra.mxu0 %v1793
    %2821 = vmatpush.msra.mxu0 %v1761
    %2822 = vmatpush.msra.mxu0 %v1729
    %2823 = vmatmul.f32.gmra.mxu0 %v1702
    %v2824 = vpop.f32.mrf.mxu0
    %v2825 = vadd.f32 %v2249, %v2824
    %2826 = vdwg.mxu0
    %2827 = vmatpush.msra.mxu0 %v2210
    %2828 = vmatpush.msra.mxu0 %v2178
    %2829 = vmatpush.msra.mxu0 %v2146
    %2830 = vmatpush.msra.mxu0 %v2114
    %2831 = vmatpush.msra.mxu0 %v2082
    %2832 = vmatpush.msra.mxu0 %v2050
    %2833 = vmatpush.msra.mxu0 %v2018
    %2834 = vmatpush.msra.mxu0 %v1986
    %2835 = vmatpush.msra.mxu0 %v1954
    %2836 = vmatpush.msra.mxu0 %v1922
    %2837 = vmatpush.msra.mxu0 %v1890
    %2838 = vmatpush.msra.mxu0 %v1858
    %2839 = vmatpush.msra.mxu0 %v1826
    %2840 = vmatpush.msra.mxu0 %v1794
    %2841 = vmatpush.msra.mxu0 %v1762
    %2842 = vmatpush.msra.mxu0 %v1730
    %2843 = vmatmul.f32.gmra.mxu0 %v1702
    %v2844 = vpop.f32.mrf.mxu0
    %v2845 = vadd.f32 %v2250, %v2844
    %2846 = vdwg.mxu0
    %2847 = vmatpush.msra.mxu0 %v2211
    %2848 = vmatpush.msra.mxu0 %v2179
    %2849 = vmatpush.msra.mxu0 %v2147
    %2850 = vmatpush.msra.mxu0 %v2115
    %2851 = vmatpush.msra.mxu0 %v2083
    %2852 = vmatpush.msra.mxu0 %v2051
    %2853 = vmatpush.msra.mxu0 %v2019
    %2854 = vmatpush.msra.mxu0 %v1987
    %2855 = vmatpush.msra.mxu0 %v1955
    %2856 = vmatpush.msra.mxu0 %v1923
    %2857 = vmatpush.msra.mxu0 %v1891
    %2858 = vmatpush.msra.mxu0 %v1859
    %2859 = vmatpush.msra.mxu0 %v1827
    %2860 = vmatpush.msra.mxu0 %v1795
    %2861 = vmatpush.msra.mxu0 %v1763
    %2862 = vmatpush.msra.mxu0 %v1731
    %2863 = vmatmul.f32.gmra.mxu0 %v1702
    %v2864 = vpop.f32.mrf.mxu0
    %v2865 = vadd.f32 %v2251, %v2864
    %2866 = vdwg.mxu0
    %2867 = vmatpush.msra.mxu0 %v2212
    %2868 = vmatpush.msra.mxu0 %v2180
    %2869 = vmatpush.msra.mxu0 %v2148
    %2870 = vmatpush.msra.mxu0 %v2116
    %2871 = vmatpush.msra.mxu0 %v2084
    %2872 = vmatpush.msra.mxu0 %v2052
    %2873 = vmatpush.msra.mxu0 %v2020
    %2874 = vmatpush.msra.mxu0 %v1988
    %2875 = vmatpush.msra.mxu0 %v1956
    %2876 = vmatpush.msra.mxu0 %v1924
    %2877 = vmatpush.msra.mxu0 %v1892
    %2878 = vmatpush.msra.mxu0 %v1860
    %2879 = vmatpush.msra.mxu0 %v1828
    %2880 = vmatpush.msra.mxu0 %v1796
    %2881 = vmatpush.msra.mxu0 %v1764
    %2882 = vmatpush.msra.mxu0 %v1732
    %2883 = vmatmul.f32.gmra.mxu0 %v1702
    %v2884 = vpop.f32.mrf.mxu0
    %v2885 = vadd.f32 %v2252, %v2884
    %2886 = vdwg.mxu0
    %2887 = vmatpush.msra.mxu0 %v2213
    %2888 = vmatpush.msra.mxu0 %v2181
    %2889 = vmatpush.msra.mxu0 %v2149
    %2890 = vmatpush.msra.mxu0 %v2117
    %2891 = vmatpush.msra.mxu0 %v2085
    %2892 = vmatpush.msra.mxu0 %v2053
    %2893 = vmatpush.msra.mxu0 %v2021
    %2894 = vmatpush.msra.mxu0 %v1989
    %2895 = vmatpush.msra.mxu0 %v1957
    %2896 = vmatpush.msra.mxu0 %v1925
    %2897 = vmatpush.msra.mxu0 %v1893
    %2898 = vmatpush.msra.mxu0 %v1861
    %2899 = vmatpush.msra.mxu0 %v1829
    %2900 = vmatpush.msra.mxu0 %v1797
    %2901 = vmatpush.msra.mxu0 %v1765
    %2902 = vmatpush.msra.mxu0 %v1733
    %2903 = vmatmul.f32.gmra.mxu0 %v1702
    %v2904 = vpop.f32.mrf.mxu0
    %v2905 = vadd.f32 %v2253, %v2904
    %2906 = vdwg.mxu0
    %2907 = vmatpush.msra.mxu0 %v2214
    %2908 = vmatpush.msra.mxu0 %v2182
    %2909 = vmatpush.msra.mxu0 %v2150
    %2910 = vmatpush.msra.mxu0 %v2118
    %2911 = vmatpush.msra.mxu0 %v2086
    %2912 = vmatpush.msra.mxu0 %v2054
    %2913 = vmatpush.msra.mxu0 %v2022
    %2914 = vmatpush.msra.mxu0 %v1990
    %2915 = vmatpush.msra.mxu0 %v1958
    %2916 = vmatpush.msra.mxu0 %v1926
    %2917 = vmatpush.msra.mxu0 %v1894
    %2918 = vmatpush.msra.mxu0 %v1862
    %2919 = vmatpush.msra.mxu0 %v1830
    %2920 = vmatpush.msra.mxu0 %v1798
    %2921 = vmatpush.msra.mxu0 %v1766
    %2922 = vmatpush.msra.mxu0 %v1734
    %2923 = vmatmul.f32.gmra.mxu0 %v1702
    %v2924 = vpop.f32.mrf.mxu0
    %v2925 = vadd.f32 %v2254, %v2924
    %2926 = vdwg.mxu0
    %v2927 = vmax.f32 %v2305, 0.0
    %v2928 = vmax.f32 %v2325, 0.0
    %v2929 = vmax.f32 %v2345, 0.0
    %v2930 = vmax.f32 %v2365, 0.0
    %v2931 = vmax.f32 %v2385, 0.0
    %v2932 = vmax.f32 %v2405, 0.0
    %v2933 = vmax.f32 %v2425, 0.0
    %v2934 = vmax.f32 %v2445, 0.0
    %v2935 = vmax.f32 %v2465, 0.0
    %v2936 = vmax.f32 %v2485, 0.0
    %v2937 = vmax.f32 %v2505, 0.0
    %v2938 = vmax.f32 %v2525, 0.0
    %v2939 = vmax.f32 %v2545, 0.0
    %v2940 = vmax.f32 %v2565, 0.0
    %v2941 = vmax.f32 %v2585, 0.0
    %v2942 = vmax.f32 %v2605, 0.0
    %v2943 = vmax.f32 %v2625, 0.0
    %v2944 = vmax.f32 %v2645, 0.0
    %v2945 = vmax.f32 %v2665, 0.0
    %v2946 = vmax.f32 %v2685, 0.0
    %v2947 = vmax.f32 %v2705, 0.0
    %v2948 = vmax.f32 %v2725, 0.0
    %v2949 = vmax.f32 %v2745, 0.0
    %v2950 = vmax.f32 %v2765, 0.0
    %v2951 = vmax.f32 %v2785, 0.0
    %v2952 = vmax.f32 %v2805, 0.0
    %v2953 = vmax.f32 %v2825, 0.0
    %v2954 = vmax.f32 %v2845, 0.0
    %v2955 = vmax.f32 %v2865, 0.0
    %v2956 = vmax.f32 %v2885, 0.0
    %v2957 = vmax.f32 %v2905, 0.0
    %v2958 = vmax.f32 %v2925, 0.0
    %v2959 = vld [vmem:[#allocation21] sm:$0xff]
    %v2960 = vld [vmem:[#allocation21 + $0x8] sm:$0xff]
    %v2961 = vld [vmem:[#allocation21 + $0x10] sm:$0xff]
    %v2962 = vld [vmem:[#allocation21 + $0x18] sm:$0xff]
    %v2963 = vld [vmem:[#allocation21 + $0x20] sm:$0xff]
    %v2964 = vld [vmem:[#allocation21 + $0x28] sm:$0xff]
    %v2965 = vld [vmem:[#allocation21 + $0x30] sm:$0xff]
    %v2966 = vld [vmem:[#allocation21 + $0x38] sm:$0xff]
    %v2967 = vld [vmem:[#allocation21 + $0x40] sm:$0xff]
    %v2968 = vld [vmem:[#allocation21 + $0x48] sm:$0xff]
    %v2969 = vld [vmem:[#allocation21 + $0x50] sm:$0xff]
    %v2970 = vld [vmem:[#allocation21 + $0x58] sm:$0xff]
    %v2971 = vld [vmem:[#allocation21 + $0x60] sm:$0xff]
    %v2972 = vld [vmem:[#allocation21 + $0x68] sm:$0xff]
    %v2973 = vld [vmem:[#allocation21 + $0x70] sm:$0xff]
    %v2974 = vld [vmem:[#allocation21 + $0x78] sm:$0xff]
    %v2975 = vld [vmem:[#allocation23] sm:$0x1]
    %v2977 = vperm.slane %v2975, 0
    %2995 = vst [vmem:[#allocation1] ss:$2 sm:$0xff] %v2959
    %s2996 = scalar_lea.vmem [#allocation1], 16
    %2997 = vst [vmem:[%s2996] ss:$2 sm:$0xff] %v2960
    %s2998 = scalar_lea.vmem [#allocation1], 32
    %2999 = vst [vmem:[%s2998] ss:$2 sm:$0xff] %v2961
    %s3000 = scalar_lea.vmem [#allocation1], 48
    %3001 = vst [vmem:[%s3000] ss:$2 sm:$0xff] %v2962
    %v3002 = vld.sshfl [vmem:[#allocation1] sm:$0xff pattern:$0x75316420]
    %v3003 = vld.sshfl [vmem:[#allocation1 + $0x8] sm:$0xff pattern:$0x75316420]
    %v3004 = vld.sshfl [vmem:[#allocation1 + $0x10] sm:$0xff pattern:$0x75316420]
    %v3005 = vld.sshfl [vmem:[#allocation1 + $0x18] sm:$0xff pattern:$0x75316420]
    %v3006 = vld.sshfl [vmem:[#allocation1 + $0x20] sm:$0xff pattern:$0x75316420]
    %v3007 = vld.sshfl [vmem:[#allocation1 + $0x28] sm:$0xff pattern:$0x75316420]
    %v3008 = vld.sshfl [vmem:[#allocation1 + $0x30] sm:$0xff pattern:$0x75316420]
    %v3009 = vld.sshfl [vmem:[#allocation1 + $0x38] sm:$0xff pattern:$0x75316420]
    %3010 = vst [vmem:[#allocation1] ss:$2 sm:$0xff] %v2963
    %3011 = vst [vmem:[%s2996] ss:$2 sm:$0xff] %v2964
    %3012 = vst [vmem:[%s2998] ss:$2 sm:$0xff] %v2965
    %3013 = vst [vmem:[%s3000] ss:$2 sm:$0xff] %v2966
    %v3014 = vld.sshfl [vmem:[#allocation1] sm:$0xff pattern:$0x75316420]
    %v3015 = vld.sshfl [vmem:[#allocation1 + $0x8] sm:$0xff pattern:$0x75316420]
    %v3016 = vld.sshfl [vmem:[#allocation1 + $0x10] sm:$0xff pattern:$0x75316420]
    %v3017 = vld.sshfl [vmem:[#allocation1 + $0x18] sm:$0xff pattern:$0x75316420]
    %v3018 = vld.sshfl [vmem:[#allocation1 + $0x20] sm:$0xff pattern:$0x75316420]
    %v3019 = vld.sshfl [vmem:[#allocation1 + $0x28] sm:$0xff pattern:$0x75316420]
    %v3020 = vld.sshfl [vmem:[#allocation1 + $0x30] sm:$0xff pattern:$0x75316420]
    %v3021 = vld.sshfl [vmem:[#allocation1 + $0x38] sm:$0xff pattern:$0x75316420]
    %3022 = vst [vmem:[#allocation1] ss:$2 sm:$0xff] %v2967
    %3023 = vst [vmem:[%s2996] ss:$2 sm:$0xff] %v2968
    %3024 = vst [vmem:[%s2998] ss:$2 sm:$0xff] %v2969
    %3025 = vst [vmem:[%s3000] ss:$2 sm:$0xff] %v2970
    %v3026 = vld.sshfl [vmem:[#allocation1] sm:$0xff pattern:$0x75316420]
    %v3027 = vld.sshfl [vmem:[#allocation1 + $0x8] sm:$0xff pattern:$0x75316420]
    %v3028 = vld.sshfl [vmem:[#allocation1 + $0x10] sm:$0xff pattern:$0x75316420]
    %v3029 = vld.sshfl [vmem:[#allocation1 + $0x18] sm:$0xff pattern:$0x75316420]
    %v3030 = vld.sshfl [vmem:[#allocation1 + $0x20] sm:$0xff pattern:$0x75316420]
    %v3031 = vld.sshfl [vmem:[#allocation1 + $0x28] sm:$0xff pattern:$0x75316420]
    %v3032 = vld.sshfl [vmem:[#allocation1 + $0x30] sm:$0xff pattern:$0x75316420]
    %v3033 = vld.sshfl [vmem:[#allocation1 + $0x38] sm:$0xff pattern:$0x75316420]
    %3034 = vst [vmem:[#allocation1] ss:$2 sm:$0xff] %v2971
    %3035 = vst [vmem:[%s2996] ss:$2 sm:$0xff] %v2972
    %3036 = vst [vmem:[%s2998] ss:$2 sm:$0xff] %v2973
    %3037 = vst [vmem:[%s3000] ss:$2 sm:$0xff] %v2974
    %v3038 = vld.sshfl [vmem:[#allocation1] sm:$0xff pattern:$0x75316420]
    %v3039 = vld.sshfl [vmem:[#allocation1 + $0x8] sm:$0xff pattern:$0x75316420]
    %v3040 = vld.sshfl [vmem:[#allocation1 + $0x10] sm:$0xff pattern:$0x75316420]
    %v3041 = vld.sshfl [vmem:[#allocation1 + $0x18] sm:$0xff pattern:$0x75316420]
    %v3042 = vld.sshfl [vmem:[#allocation1 + $0x20] sm:$0xff pattern:$0x75316420]
    %v3043 = vld.sshfl [vmem:[#allocation1 + $0x28] sm:$0xff pattern:$0x75316420]
    %v3044 = vld.sshfl [vmem:[#allocation1 + $0x30] sm:$0xff pattern:$0x75316420]
    %v3045 = vld.sshfl [vmem:[#allocation1 + $0x38] sm:$0xff pattern:$0x75316420]
    %3078 = vmatpush.xpose.msra.mxu0 0.0
    %3079 = vmatpush.xpose.msra.mxu0 0.0
    %3080 = vmatpush.xpose.msra.mxu0 0.0
    %3081 = vmatpush.xpose.msra.mxu0 0.0
    %3082 = vmatpush.xpose.msra.mxu0 0.0
    %3083 = vmatpush.xpose.msra.mxu0 0.0
    %3084 = vmatpush.xpose.msra.mxu0 0.0
    %3085 = vmatpush.xpose.msra.mxu0 0.0
    %3086 = vmatpush.xpose.msra.mxu0 0.0
    %3087 = vmatpush.xpose.msra.mxu0 0.0
    %3088 = vmatpush.xpose.msra.mxu0 0.0
    %3089 = vmatpush.xpose.msra.mxu0 0.0
    %3090 = vmatpush.xpose.msra.mxu0 0.0
    %3091 = vmatpush.xpose.msra.mxu0 0.0
    %3092 = vmatpush.xpose.msra.mxu0 0.0
    %3093 = vmatpush.xpose.msra.mxu0 %v3002
    %3094 = vmatmul.f32.gmra.mxu0 %v2927
    %v3095 = vpop.f32.mrf.mxu0
    %v3096 = vadd.f32 %v2977, %v3095
    %3097 = vdwg.mxu0
    %3098 = vmatpush.xpose.msra.mxu0 0.0
    %3099 = vmatpush.xpose.msra.mxu0 0.0
    %3100 = vmatpush.xpose.msra.mxu0 0.0
    %3101 = vmatpush.xpose.msra.mxu0 0.0
    %3102 = vmatpush.xpose.msra.mxu0 0.0
    %3103 = vmatpush.xpose.msra.mxu0 0.0
    %3104 = vmatpush.xpose.msra.mxu0 0.0
    %3105 = vmatpush.xpose.msra.mxu0 0.0
    %3106 = vmatpush.xpose.msra.mxu0 0.0
    %3107 = vmatpush.xpose.msra.mxu0 0.0
    %3108 = vmatpush.xpose.msra.mxu0 0.0
    %3109 = vmatpush.xpose.msra.mxu0 0.0
    %3110 = vmatpush.xpose.msra.mxu0 0.0
    %3111 = vmatpush.xpose.msra.mxu0 0.0
    %3112 = vmatpush.xpose.msra.mxu0 0.0
    %3113 = vmatpush.xpose.msra.mxu0 %v3003
    %3114 = vmatmul.f32.gmra.mxu0 %v2928
    %v3115 = vpop.f32.mrf.mxu0
    %v3116 = vadd.f32 %v3096, %v3115
    %3117 = vdwg.mxu0
    %3118 = vmatpush.xpose.msra.mxu0 0.0
    %3119 = vmatpush.xpose.msra.mxu0 0.0
    %3120 = vmatpush.xpose.msra.mxu0 0.0
    %3121 = vmatpush.xpose.msra.mxu0 0.0
    %3122 = vmatpush.xpose.msra.mxu0 0.0
    %3123 = vmatpush.xpose.msra.mxu0 0.0
    %3124 = vmatpush.xpose.msra.mxu0 0.0
    %3125 = vmatpush.xpose.msra.mxu0 0.0
    %3126 = vmatpush.xpose.msra.mxu0 0.0
    %3127 = vmatpush.xpose.msra.mxu0 0.0
    %3128 = vmatpush.xpose.msra.mxu0 0.0
    %3129 = vmatpush.xpose.msra.mxu0 0.0
    %3130 = vmatpush.xpose.msra.mxu0 0.0
    %3131 = vmatpush.xpose.msra.mxu0 0.0
    %3132 = vmatpush.xpose.msra.mxu0 0.0
    %3133 = vmatpush.xpose.msra.mxu0 %v3004
    %3134 = vmatmul.f32.gmra.mxu0 %v2929
    %v3135 = vpop.f32.mrf.mxu0
    %v3136 = vadd.f32 %v3116, %v3135
    %3137 = vdwg.mxu0
    %3138 = vmatpush.xpose.msra.mxu0 0.0
    %3139 = vmatpush.xpose.msra.mxu0 0.0
    %3140 = vmatpush.xpose.msra.mxu0 0.0
    %3141 = vmatpush.xpose.msra.mxu0 0.0
    %3142 = vmatpush.xpose.msra.mxu0 0.0
    %3143 = vmatpush.xpose.msra.mxu0 0.0
    %3144 = vmatpush.xpose.msra.mxu0 0.0
    %3145 = vmatpush.xpose.msra.mxu0 0.0
    %3146 = vmatpush.xpose.msra.mxu0 0.0
    %3147 = vmatpush.xpose.msra.mxu0 0.0
    %3148 = vmatpush.xpose.msra.mxu0 0.0
    %3149 = vmatpush.xpose.msra.mxu0 0.0
    %3150 = vmatpush.xpose.msra.mxu0 0.0
    %3151 = vmatpush.xpose.msra.mxu0 0.0
    %3152 = vmatpush.xpose.msra.mxu0 0.0
    %3153 = vmatpush.xpose.msra.mxu0 %v3005
    %3154 = vmatmul.f32.gmra.mxu0 %v2930
    %v3155 = vpop.f32.mrf.mxu0
    %v3156 = vadd.f32 %v3136, %v3155
    %3157 = vdwg.mxu0
    %3158 = vmatpush.xpose.msra.mxu0 0.0
    %3159 = vmatpush.xpose.msra.mxu0 0.0
    %3160 = vmatpush.xpose.msra.mxu0 0.0
    %3161 = vmatpush.xpose.msra.mxu0 0.0
    %3162 = vmatpush.xpose.msra.mxu0 0.0
    %3163 = vmatpush.xpose.msra.mxu0 0.0
    %3164 = vmatpush.xpose.msra.mxu0 0.0
    %3165 = vmatpush.xpose.msra.mxu0 0.0
    %3166 = vmatpush.xpose.msra.mxu0 0.0
    %3167 = vmatpush.xpose.msra.mxu0 0.0
    %3168 = vmatpush.xpose.msra.mxu0 0.0
    %3169 = vmatpush.xpose.msra.mxu0 0.0
    %3170 = vmatpush.xpose.msra.mxu0 0.0
    %3171 = vmatpush.xpose.msra.mxu0 0.0
    %3172 = vmatpush.xpose.msra.mxu0 0.0
    %3173 = vmatpush.xpose.msra.mxu0 %v3006
    %3174 = vmatmul.f32.gmra.mxu0 %v2931
    %v3175 = vpop.f32.mrf.mxu0
    %v3176 = vadd.f32 %v3156, %v3175
    %3177 = vdwg.mxu0
    %3178 = vmatpush.xpose.msra.mxu0 0.0
    %3179 = vmatpush.xpose.msra.mxu0 0.0
    %3180 = vmatpush.xpose.msra.mxu0 0.0
    %3181 = vmatpush.xpose.msra.mxu0 0.0
    %3182 = vmatpush.xpose.msra.mxu0 0.0
    %3183 = vmatpush.xpose.msra.mxu0 0.0
    %3184 = vmatpush.xpose.msra.mxu0 0.0
    %3185 = vmatpush.xpose.msra.mxu0 0.0
    %3186 = vmatpush.xpose.msra.mxu0 0.0
    %3187 = vmatpush.xpose.msra.mxu0 0.0
    %3188 = vmatpush.xpose.msra.mxu0 0.0
    %3189 = vmatpush.xpose.msra.mxu0 0.0
    %3190 = vmatpush.xpose.msra.mxu0 0.0
    %3191 = vmatpush.xpose.msra.mxu0 0.0
    %3192 = vmatpush.xpose.msra.mxu0 0.0
    %3193 = vmatpush.xpose.msra.mxu0 %v3007
    %3194 = vmatmul.f32.gmra.mxu0 %v2932
    %v3195 = vpop.f32.mrf.mxu0
    %v3196 = vadd.f32 %v3176, %v3195
    %3197 = vdwg.mxu0
    %3198 = vmatpush.xpose.msra.mxu0 0.0
    %3199 = vmatpush.xpose.msra.mxu0 0.0
    %3200 = vmatpush.xpose.msra.mxu0 0.0
    %3201 = vmatpush.xpose.msra.mxu0 0.0
    %3202 = vmatpush.xpose.msra.mxu0 0.0
    %3203 = vmatpush.xpose.msra.mxu0 0.0
    %3204 = vmatpush.xpose.msra.mxu0 0.0
    %3205 = vmatpush.xpose.msra.mxu0 0.0
    %3206 = vmatpush.xpose.msra.mxu0 0.0
    %3207 = vmatpush.xpose.msra.mxu0 0.0
    %3208 = vmatpush.xpose.msra.mxu0 0.0
    %3209 = vmatpush.xpose.msra.mxu0 0.0
    %3210 = vmatpush.xpose.msra.mxu0 0.0
    %3211 = vmatpush.xpose.msra.mxu0 0.0
    %3212 = vmatpush.xpose.msra.mxu0 0.0
    %3213 = vmatpush.xpose.msra.mxu0 %v3008
    %3214 = vmatmul.f32.gmra.mxu0 %v2933
    %v3215 = vpop.f32.mrf.mxu0
    %v3216 = vadd.f32 %v3196, %v3215
    %3217 = vdwg.mxu0
    %3218 = vmatpush.xpose.msra.mxu0 0.0
    %3219 = vmatpush.xpose.msra.mxu0 0.0
    %3220 = vmatpush.xpose.msra.mxu0 0.0
    %3221 = vmatpush.xpose.msra.mxu0 0.0
    %3222 = vmatpush.xpose.msra.mxu0 0.0
    %3223 = vmatpush.xpose.msra.mxu0 0.0
    %3224 = vmatpush.xpose.msra.mxu0 0.0
    %3225 = vmatpush.xpose.msra.mxu0 0.0
    %3226 = vmatpush.xpose.msra.mxu0 0.0
    %3227 = vmatpush.xpose.msra.mxu0 0.0
    %3228 = vmatpush.xpose.msra.mxu0 0.0
    %3229 = vmatpush.xpose.msra.mxu0 0.0
    %3230 = vmatpush.xpose.msra.mxu0 0.0
    %3231 = vmatpush.xpose.msra.mxu0 0.0
    %3232 = vmatpush.xpose.msra.mxu0 0.0
    %3233 = vmatpush.xpose.msra.mxu0 %v3009
    %3234 = vmatmul.f32.gmra.mxu0 %v2934
    %v3235 = vpop.f32.mrf.mxu0
    %v3236 = vadd.f32 %v3216, %v3235
    %3237 = vdwg.mxu0
    %3238 = vmatpush.xpose.msra.mxu0 0.0
    %3239 = vmatpush.xpose.msra.mxu0 0.0
    %3240 = vmatpush.xpose.msra.mxu0 0.0
    %3241 = vmatpush.xpose.msra.mxu0 0.0
    %3242 = vmatpush.xpose.msra.mxu0 0.0
    %3243 = vmatpush.xpose.msra.mxu0 0.0
    %3244 = vmatpush.xpose.msra.mxu0 0.0
    %3245 = vmatpush.xpose.msra.mxu0 0.0
    %3246 = vmatpush.xpose.msra.mxu0 0.0
    %3247 = vmatpush.xpose.msra.mxu0 0.0
    %3248 = vmatpush.xpose.msra.mxu0 0.0
    %3249 = vmatpush.xpose.msra.mxu0 0.0
    %3250 = vmatpush.xpose.msra.mxu0 0.0
    %3251 = vmatpush.xpose.msra.mxu0 0.0
    %3252 = vmatpush.xpose.msra.mxu0 0.0
    %3253 = vmatpush.xpose.msra.mxu0 %v3014
    %3254 = vmatmul.f32.gmra.mxu0 %v2935
    %v3255 = vpop.f32.mrf.mxu0
    %v3256 = vadd.f32 %v3236, %v3255
    %3257 = vdwg.mxu0
    %3258 = vmatpush.xpose.msra.mxu0 0.0
    %3259 = vmatpush.xpose.msra.mxu0 0.0
    %3260 = vmatpush.xpose.msra.mxu0 0.0
    %3261 = vmatpush.xpose.msra.mxu0 0.0
    %3262 = vmatpush.xpose.msra.mxu0 0.0
    %3263 = vmatpush.xpose.msra.mxu0 0.0
    %3264 = vmatpush.xpose.msra.mxu0 0.0
    %3265 = vmatpush.xpose.msra.mxu0 0.0
    %3266 = vmatpush.xpose.msra.mxu0 0.0
    %3267 = vmatpush.xpose.msra.mxu0 0.0
    %3268 = vmatpush.xpose.msra.mxu0 0.0
    %3269 = vmatpush.xpose.msra.mxu0 0.0
    %3270 = vmatpush.xpose.msra.mxu0 0.0
    %3271 = vmatpush.xpose.msra.mxu0 0.0
    %3272 = vmatpush.xpose.msra.mxu0 0.0
    %3273 = vmatpush.xpose.msra.mxu0 %v3015
    %3274 = vmatmul.f32.gmra.mxu0 %v2936
    %v3275 = vpop.f32.mrf.mxu0
    %v3276 = vadd.f32 %v3256, %v3275
    %3277 = vdwg.mxu0
    %3278 = vmatpush.xpose.msra.mxu0 0.0
    %3279 = vmatpush.xpose.msra.mxu0 0.0
    %3280 = vmatpush.xpose.msra.mxu0 0.0
    %3281 = vmatpush.xpose.msra.mxu0 0.0
    %3282 = vmatpush.xpose.msra.mxu0 0.0
    %3283 = vmatpush.xpose.msra.mxu0 0.0
    %3284 = vmatpush.xpose.msra.mxu0 0.0
    %3285 = vmatpush.xpose.msra.mxu0 0.0
    %3286 = vmatpush.xpose.msra.mxu0 0.0
    %3287 = vmatpush.xpose.msra.mxu0 0.0
    %3288 = vmatpush.xpose.msra.mxu0 0.0
    %3289 = vmatpush.xpose.msra.mxu0 0.0
    %3290 = vmatpush.xpose.msra.mxu0 0.0
    %3291 = vmatpush.xpose.msra.mxu0 0.0
    %3292 = vmatpush.xpose.msra.mxu0 0.0
    %3293 = vmatpush.xpose.msra.mxu0 %v3016
    %3294 = vmatmul.f32.gmra.mxu0 %v2937
    %v3295 = vpop.f32.mrf.mxu0
    %v3296 = vadd.f32 %v3276, %v3295
    %3297 = vdwg.mxu0
    %3298 = vmatpush.xpose.msra.mxu0 0.0
    %3299 = vmatpush.xpose.msra.mxu0 0.0
    %3300 = vmatpush.xpose.msra.mxu0 0.0
    %3301 = vmatpush.xpose.msra.mxu0 0.0
    %3302 = vmatpush.xpose.msra.mxu0 0.0
    %3303 = vmatpush.xpose.msra.mxu0 0.0
    %3304 = vmatpush.xpose.msra.mxu0 0.0
    %3305 = vmatpush.xpose.msra.mxu0 0.0
    %3306 = vmatpush.xpose.msra.mxu0 0.0
    %3307 = vmatpush.xpose.msra.mxu0 0.0
    %3308 = vmatpush.xpose.msra.mxu0 0.0
    %3309 = vmatpush.xpose.msra.mxu0 0.0
    %3310 = vmatpush.xpose.msra.mxu0 0.0
    %3311 = vmatpush.xpose.msra.mxu0 0.0
    %3312 = vmatpush.xpose.msra.mxu0 0.0
    %3313 = vmatpush.xpose.msra.mxu0 %v3017
    %3314 = vmatmul.f32.gmra.mxu0 %v2938
    %v3315 = vpop.f32.mrf.mxu0
    %v3316 = vadd.f32 %v3296, %v3315
    %3317 = vdwg.mxu0
    %3318 = vmatpush.xpose.msra.mxu0 0.0
    %3319 = vmatpush.xpose.msra.mxu0 0.0
    %3320 = vmatpush.xpose.msra.mxu0 0.0
    %3321 = vmatpush.xpose.msra.mxu0 0.0
    %3322 = vmatpush.xpose.msra.mxu0 0.0
    %3323 = vmatpush.xpose.msra.mxu0 0.0
    %3324 = vmatpush.xpose.msra.mxu0 0.0
    %3325 = vmatpush.xpose.msra.mxu0 0.0
    %3326 = vmatpush.xpose.msra.mxu0 0.0
    %3327 = vmatpush.xpose.msra.mxu0 0.0
    %3328 = vmatpush.xpose.msra.mxu0 0.0
    %3329 = vmatpush.xpose.msra.mxu0 0.0
    %3330 = vmatpush.xpose.msra.mxu0 0.0
    %3331 = vmatpush.xpose.msra.mxu0 0.0
    %3332 = vmatpush.xpose.msra.mxu0 0.0
    %3333 = vmatpush.xpose.msra.mxu0 %v3018
    %3334 = vmatmul.f32.gmra.mxu0 %v2939
    %v3335 = vpop.f32.mrf.mxu0
    %v3336 = vadd.f32 %v3316, %v3335
    %3337 = vdwg.mxu0
    %3338 = vmatpush.xpose.msra.mxu0 0.0
    %3339 = vmatpush.xpose.msra.mxu0 0.0
    %3340 = vmatpush.xpose.msra.mxu0 0.0
    %3341 = vmatpush.xpose.msra.mxu0 0.0
    %3342 = vmatpush.xpose.msra.mxu0 0.0
    %3343 = vmatpush.xpose.msra.mxu0 0.0
    %3344 = vmatpush.xpose.msra.mxu0 0.0
    %3345 = vmatpush.xpose.msra.mxu0 0.0
    %3346 = vmatpush.xpose.msra.mxu0 0.0
    %3347 = vmatpush.xpose.msra.mxu0 0.0
    %3348 = vmatpush.xpose.msra.mxu0 0.0
    %3349 = vmatpush.xpose.msra.mxu0 0.0
    %3350 = vmatpush.xpose.msra.mxu0 0.0
    %3351 = vmatpush.xpose.msra.mxu0 0.0
    %3352 = vmatpush.xpose.msra.mxu0 0.0
    %3353 = vmatpush.xpose.msra.mxu0 %v3019
    %3354 = vmatmul.f32.gmra.mxu0 %v2940
    %v3355 = vpop.f32.mrf.mxu0
    %v3356 = vadd.f32 %v3336, %v3355
    %3357 = vdwg.mxu0
    %3358 = vmatpush.xpose.msra.mxu0 0.0
    %3359 = vmatpush.xpose.msra.mxu0 0.0
    %3360 = vmatpush.xpose.msra.mxu0 0.0
    %3361 = vmatpush.xpose.msra.mxu0 0.0
    %3362 = vmatpush.xpose.msra.mxu0 0.0
    %3363 = vmatpush.xpose.msra.mxu0 0.0
    %3364 = vmatpush.xpose.msra.mxu0 0.0
    %3365 = vmatpush.xpose.msra.mxu0 0.0
    %3366 = vmatpush.xpose.msra.mxu0 0.0
    %3367 = vmatpush.xpose.msra.mxu0 0.0
    %3368 = vmatpush.xpose.msra.mxu0 0.0
    %3369 = vmatpush.xpose.msra.mxu0 0.0
    %3370 = vmatpush.xpose.msra.mxu0 0.0
    %3371 = vmatpush.xpose.msra.mxu0 0.0
    %3372 = vmatpush.xpose.msra.mxu0 0.0
    %3373 = vmatpush.xpose.msra.mxu0 %v3020
    %3374 = vmatmul.f32.gmra.mxu0 %v2941
    %v3375 = vpop.f32.mrf.mxu0
    %v3376 = vadd.f32 %v3356, %v3375
    %3377 = vdwg.mxu0
    %3378 = vmatpush.xpose.msra.mxu0 0.0
    %3379 = vmatpush.xpose.msra.mxu0 0.0
    %3380 = vmatpush.xpose.msra.mxu0 0.0
    %3381 = vmatpush.xpose.msra.mxu0 0.0
    %3382 = vmatpush.xpose.msra.mxu0 0.0
    %3383 = vmatpush.xpose.msra.mxu0 0.0
    %3384 = vmatpush.xpose.msra.mxu0 0.0
    %3385 = vmatpush.xpose.msra.mxu0 0.0
    %3386 = vmatpush.xpose.msra.mxu0 0.0
    %3387 = vmatpush.xpose.msra.mxu0 0.0
    %3388 = vmatpush.xpose.msra.mxu0 0.0
    %3389 = vmatpush.xpose.msra.mxu0 0.0
    %3390 = vmatpush.xpose.msra.mxu0 0.0
    %3391 = vmatpush.xpose.msra.mxu0 0.0
    %3392 = vmatpush.xpose.msra.mxu0 0.0
    %3393 = vmatpush.xpose.msra.mxu0 %v3021
    %3394 = vmatmul.f32.gmra.mxu0 %v2942
    %v3395 = vpop.f32.mrf.mxu0
    %v3396 = vadd.f32 %v3376, %v3395
    %3397 = vdwg.mxu0
    %3398 = vmatpush.xpose.msra.mxu0 0.0
    %3399 = vmatpush.xpose.msra.mxu0 0.0
    %3400 = vmatpush.xpose.msra.mxu0 0.0
    %3401 = vmatpush.xpose.msra.mxu0 0.0
    %3402 = vmatpush.xpose.msra.mxu0 0.0
    %3403 = vmatpush.xpose.msra.mxu0 0.0
    %3404 = vmatpush.xpose.msra.mxu0 0.0
    %3405 = vmatpush.xpose.msra.mxu0 0.0
    %3406 = vmatpush.xpose.msra.mxu0 0.0
    %3407 = vmatpush.xpose.msra.mxu0 0.0
    %3408 = vmatpush.xpose.msra.mxu0 0.0
    %3409 = vmatpush.xpose.msra.mxu0 0.0
    %3410 = vmatpush.xpose.msra.mxu0 0.0
    %3411 = vmatpush.xpose.msra.mxu0 0.0
    %3412 = vmatpush.xpose.msra.mxu0 0.0
    %3413 = vmatpush.xpose.msra.mxu0 %v3026
    %3414 = vmatmul.f32.gmra.mxu0 %v2943
    %v3415 = vpop.f32.mrf.mxu0
    %v3416 = vadd.f32 %v3396, %v3415
    %3417 = vdwg.mxu0
    %3418 = vmatpush.xpose.msra.mxu0 0.0
    %3419 = vmatpush.xpose.msra.mxu0 0.0
    %3420 = vmatpush.xpose.msra.mxu0 0.0
    %3421 = vmatpush.xpose.msra.mxu0 0.0
    %3422 = vmatpush.xpose.msra.mxu0 0.0
    %3423 = vmatpush.xpose.msra.mxu0 0.0
    %3424 = vmatpush.xpose.msra.mxu0 0.0
    %3425 = vmatpush.xpose.msra.mxu0 0.0
    %3426 = vmatpush.xpose.msra.mxu0 0.0
    %3427 = vmatpush.xpose.msra.mxu0 0.0
    %3428 = vmatpush.xpose.msra.mxu0 0.0
    %3429 = vmatpush.xpose.msra.mxu0 0.0
    %3430 = vmatpush.xpose.msra.mxu0 0.0
    %3431 = vmatpush.xpose.msra.mxu0 0.0
    %3432 = vmatpush.xpose.msra.mxu0 0.0
    %3433 = vmatpush.xpose.msra.mxu0 %v3027
    %3434 = vmatmul.f32.gmra.mxu0 %v2944
    %v3435 = vpop.f32.mrf.mxu0
    %v3436 = vadd.f32 %v3416, %v3435
    %3437 = vdwg.mxu0
    %3438 = vmatpush.xpose.msra.mxu0 0.0
    %3439 = vmatpush.xpose.msra.mxu0 0.0
    %3440 = vmatpush.xpose.msra.mxu0 0.0
    %3441 = vmatpush.xpose.msra.mxu0 0.0
    %3442 = vmatpush.xpose.msra.mxu0 0.0
    %3443 = vmatpush.xpose.msra.mxu0 0.0
    %3444 = vmatpush.xpose.msra.mxu0 0.0
    %3445 = vmatpush.xpose.msra.mxu0 0.0
    %3446 = vmatpush.xpose.msra.mxu0 0.0
    %3447 = vmatpush.xpose.msra.mxu0 0.0
    %3448 = vmatpush.xpose.msra.mxu0 0.0
    %3449 = vmatpush.xpose.msra.mxu0 0.0
    %3450 = vmatpush.xpose.msra.mxu0 0.0
    %3451 = vmatpush.xpose.msra.mxu0 0.0
    %3452 = vmatpush.xpose.msra.mxu0 0.0
    %3453 = vmatpush.xpose.msra.mxu0 %v3028
    %3454 = vmatmul.f32.gmra.mxu0 %v2945
    %v3455 = vpop.f32.mrf.mxu0
    %v3456 = vadd.f32 %v3436, %v3455
    %3457 = vdwg.mxu0
    %3458 = vmatpush.xpose.msra.mxu0 0.0
    %3459 = vmatpush.xpose.msra.mxu0 0.0
    %3460 = vmatpush.xpose.msra.mxu0 0.0
    %3461 = vmatpush.xpose.msra.mxu0 0.0
    %3462 = vmatpush.xpose.msra.mxu0 0.0
    %3463 = vmatpush.xpose.msra.mxu0 0.0
    %3464 = vmatpush.xpose.msra.mxu0 0.0
    %3465 = vmatpush.xpose.msra.mxu0 0.0
    %3466 = vmatpush.xpose.msra.mxu0 0.0
    %3467 = vmatpush.xpose.msra.mxu0 0.0
    %3468 = vmatpush.xpose.msra.mxu0 0.0
    %3469 = vmatpush.xpose.msra.mxu0 0.0
    %3470 = vmatpush.xpose.msra.mxu0 0.0
    %3471 = vmatpush.xpose.msra.mxu0 0.0
    %3472 = vmatpush.xpose.msra.mxu0 0.0
    %3473 = vmatpush.xpose.msra.mxu0 %v3029
    %3474 = vmatmul.f32.gmra.mxu0 %v2946
    %v3475 = vpop.f32.mrf.mxu0
    %v3476 = vadd.f32 %v3456, %v3475
    %3477 = vdwg.mxu0
    %3478 = vmatpush.xpose.msra.mxu0 0.0
    %3479 = vmatpush.xpose.msra.mxu0 0.0
    %3480 = vmatpush.xpose.msra.mxu0 0.0
    %3481 = vmatpush.xpose.msra.mxu0 0.0
    %3482 = vmatpush.xpose.msra.mxu0 0.0
    %3483 = vmatpush.xpose.msra.mxu0 0.0
    %3484 = vmatpush.xpose.msra.mxu0 0.0
    %3485 = vmatpush.xpose.msra.mxu0 0.0
    %3486 = vmatpush.xpose.msra.mxu0 0.0
    %3487 = vmatpush.xpose.msra.mxu0 0.0
    %3488 = vmatpush.xpose.msra.mxu0 0.0
    %3489 = vmatpush.xpose.msra.mxu0 0.0
    %3490 = vmatpush.xpose.msra.mxu0 0.0
    %3491 = vmatpush.xpose.msra.mxu0 0.0
    %3492 = vmatpush.xpose.msra.mxu0 0.0
    %3493 = vmatpush.xpose.msra.mxu0 %v3030
    %3494 = vmatmul.f32.gmra.mxu0 %v2947
    %v3495 = vpop.f32.mrf.mxu0
    %v3496 = vadd.f32 %v3476, %v3495
    %3497 = vdwg.mxu0
    %3498 = vmatpush.xpose.msra.mxu0 0.0
    %3499 = vmatpush.xpose.msra.mxu0 0.0
    %3500 = vmatpush.xpose.msra.mxu0 0.0
    %3501 = vmatpush.xpose.msra.mxu0 0.0
    %3502 = vmatpush.xpose.msra.mxu0 0.0
    %3503 = vmatpush.xpose.msra.mxu0 0.0
    %3504 = vmatpush.xpose.msra.mxu0 0.0
    %3505 = vmatpush.xpose.msra.mxu0 0.0
    %3506 = vmatpush.xpose.msra.mxu0 0.0
    %3507 = vmatpush.xpose.msra.mxu0 0.0
    %3508 = vmatpush.xpose.msra.mxu0 0.0
    %3509 = vmatpush.xpose.msra.mxu0 0.0
    %3510 = vmatpush.xpose.msra.mxu0 0.0
    %3511 = vmatpush.xpose.msra.mxu0 0.0
    %3512 = vmatpush.xpose.msra.mxu0 0.0
    %3513 = vmatpush.xpose.msra.mxu0 %v3031
    %3514 = vmatmul.f32.gmra.mxu0 %v2948
    %v3515 = vpop.f32.mrf.mxu0
    %v3516 = vadd.f32 %v3496, %v3515
    %3517 = vdwg.mxu0
    %3518 = vmatpush.xpose.msra.mxu0 0.0
    %3519 = vmatpush.xpose.msra.mxu0 0.0
    %3520 = vmatpush.xpose.msra.mxu0 0.0
    %3521 = vmatpush.xpose.msra.mxu0 0.0
    %3522 = vmatpush.xpose.msra.mxu0 0.0
    %3523 = vmatpush.xpose.msra.mxu0 0.0
    %3524 = vmatpush.xpose.msra.mxu0 0.0
    %3525 = vmatpush.xpose.msra.mxu0 0.0
    %3526 = vmatpush.xpose.msra.mxu0 0.0
    %3527 = vmatpush.xpose.msra.mxu0 0.0
    %3528 = vmatpush.xpose.msra.mxu0 0.0
    %3529 = vmatpush.xpose.msra.mxu0 0.0
    %3530 = vmatpush.xpose.msra.mxu0 0.0
    %3531 = vmatpush.xpose.msra.mxu0 0.0
    %3532 = vmatpush.xpose.msra.mxu0 0.0
    %3533 = vmatpush.xpose.msra.mxu0 %v3032
    %3534 = vmatmul.f32.gmra.mxu0 %v2949
    %v3535 = vpop.f32.mrf.mxu0
    %v3536 = vadd.f32 %v3516, %v3535
    %3537 = vdwg.mxu0
    %3538 = vmatpush.xpose.msra.mxu0 0.0
    %3539 = vmatpush.xpose.msra.mxu0 0.0
    %3540 = vmatpush.xpose.msra.mxu0 0.0
    %3541 = vmatpush.xpose.msra.mxu0 0.0
    %3542 = vmatpush.xpose.msra.mxu0 0.0
    %3543 = vmatpush.xpose.msra.mxu0 0.0
    %3544 = vmatpush.xpose.msra.mxu0 0.0
    %3545 = vmatpush.xpose.msra.mxu0 0.0
    %3546 = vmatpush.xpose.msra.mxu0 0.0
    %3547 = vmatpush.xpose.msra.mxu0 0.0
    %3548 = vmatpush.xpose.msra.mxu0 0.0
    %3549 = vmatpush.xpose.msra.mxu0 0.0
    %3550 = vmatpush.xpose.msra.mxu0 0.0
    %3551 = vmatpush.xpose.msra.mxu0 0.0
    %3552 = vmatpush.xpose.msra.mxu0 0.0
    %3553 = vmatpush.xpose.msra.mxu0 %v3033
    %3554 = vmatmul.f32.gmra.mxu0 %v2950
    %v3555 = vpop.f32.mrf.mxu0
    %v3556 = vadd.f32 %v3536, %v3555
    %3557 = vdwg.mxu0
    %3558 = vmatpush.xpose.msra.mxu0 0.0
    %3559 = vmatpush.xpose.msra.mxu0 0.0
    %3560 = vmatpush.xpose.msra.mxu0 0.0
    %3561 = vmatpush.xpose.msra.mxu0 0.0
    %3562 = vmatpush.xpose.msra.mxu0 0.0
    %3563 = vmatpush.xpose.msra.mxu0 0.0
    %3564 = vmatpush.xpose.msra.mxu0 0.0
    %3565 = vmatpush.xpose.msra.mxu0 0.0
    %3566 = vmatpush.xpose.msra.mxu0 0.0
    %3567 = vmatpush.xpose.msra.mxu0 0.0
    %3568 = vmatpush.xpose.msra.mxu0 0.0
    %3569 = vmatpush.xpose.msra.mxu0 0.0
    %3570 = vmatpush.xpose.msra.mxu0 0.0
    %3571 = vmatpush.xpose.msra.mxu0 0.0
    %3572 = vmatpush.xpose.msra.mxu0 0.0
    %3573 = vmatpush.xpose.msra.mxu0 %v3038
    %3574 = vmatmul.f32.gmra.mxu0 %v2951
    %v3575 = vpop.f32.mrf.mxu0
    %v3576 = vadd.f32 %v3556, %v3575
    %3577 = vdwg.mxu0
    %3578 = vmatpush.xpose.msra.mxu0 0.0
    %3579 = vmatpush.xpose.msra.mxu0 0.0
    %3580 = vmatpush.xpose.msra.mxu0 0.0
    %3581 = vmatpush.xpose.msra.mxu0 0.0
    %3582 = vmatpush.xpose.msra.mxu0 0.0
    %3583 = vmatpush.xpose.msra.mxu0 0.0
    %3584 = vmatpush.xpose.msra.mxu0 0.0
    %3585 = vmatpush.xpose.msra.mxu0 0.0
    %3586 = vmatpush.xpose.msra.mxu0 0.0
    %3587 = vmatpush.xpose.msra.mxu0 0.0
    %3588 = vmatpush.xpose.msra.mxu0 0.0
    %3589 = vmatpush.xpose.msra.mxu0 0.0
    %3590 = vmatpush.xpose.msra.mxu0 0.0
    %3591 = vmatpush.xpose.msra.mxu0 0.0
    %3592 = vmatpush.xpose.msra.mxu0 0.0
    %3593 = vmatpush.xpose.msra.mxu0 %v3039
    %3594 = vmatmul.f32.gmra.mxu0 %v2952
    %v3595 = vpop.f32.mrf.mxu0
    %v3596 = vadd.f32 %v3576, %v3595
    %3597 = vdwg.mxu0
    %3598 = vmatpush.xpose.msra.mxu0 0.0
    %3599 = vmatpush.xpose.msra.mxu0 0.0
    %3600 = vmatpush.xpose.msra.mxu0 0.0
    %3601 = vmatpush.xpose.msra.mxu0 0.0
    %3602 = vmatpush.xpose.msra.mxu0 0.0
    %3603 = vmatpush.xpose.msra.mxu0 0.0
    %3604 = vmatpush.xpose.msra.mxu0 0.0
    %3605 = vmatpush.xpose.msra.mxu0 0.0
    %3606 = vmatpush.xpose.msra.mxu0 0.0
    %3607 = vmatpush.xpose.msra.mxu0 0.0
    %3608 = vmatpush.xpose.msra.mxu0 0.0
    %3609 = vmatpush.xpose.msra.mxu0 0.0
    %3610 = vmatpush.xpose.msra.mxu0 0.0
    %3611 = vmatpush.xpose.msra.mxu0 0.0
    %3612 = vmatpush.xpose.msra.mxu0 0.0
    %3613 = vmatpush.xpose.msra.mxu0 %v3040
    %3614 = vmatmul.f32.gmra.mxu0 %v2953
    %v3615 = vpop.f32.mrf.mxu0
    %v3616 = vadd.f32 %v3596, %v3615
    %3617 = vdwg.mxu0
    %3618 = vmatpush.xpose.msra.mxu0 0.0
    %3619 = vmatpush.xpose.msra.mxu0 0.0
    %3620 = vmatpush.xpose.msra.mxu0 0.0
    %3621 = vmatpush.xpose.msra.mxu0 0.0
    %3622 = vmatpush.xpose.msra.mxu0 0.0
    %3623 = vmatpush.xpose.msra.mxu0 0.0
    %3624 = vmatpush.xpose.msra.mxu0 0.0
    %3625 = vmatpush.xpose.msra.mxu0 0.0
    %3626 = vmatpush.xpose.msra.mxu0 0.0
    %3627 = vmatpush.xpose.msra.mxu0 0.0
    %3628 = vmatpush.xpose.msra.mxu0 0.0
    %3629 = vmatpush.xpose.msra.mxu0 0.0
    %3630 = vmatpush.xpose.msra.mxu0 0.0
    %3631 = vmatpush.xpose.msra.mxu0 0.0
    %3632 = vmatpush.xpose.msra.mxu0 0.0
    %3633 = vmatpush.xpose.msra.mxu0 %v3041
    %3634 = vmatmul.f32.gmra.mxu0 %v2954
    %v3635 = vpop.f32.mrf.mxu0
    %v3636 = vadd.f32 %v3616, %v3635
    %3637 = vdwg.mxu0
    %3638 = vmatpush.xpose.msra.mxu0 0.0
    %3639 = vmatpush.xpose.msra.mxu0 0.0
    %3640 = vmatpush.xpose.msra.mxu0 0.0
    %3641 = vmatpush.xpose.msra.mxu0 0.0
    %3642 = vmatpush.xpose.msra.mxu0 0.0
    %3643 = vmatpush.xpose.msra.mxu0 0.0
    %3644 = vmatpush.xpose.msra.mxu0 0.0
    %3645 = vmatpush.xpose.msra.mxu0 0.0
    %3646 = vmatpush.xpose.msra.mxu0 0.0
    %3647 = vmatpush.xpose.msra.mxu0 0.0
    %3648 = vmatpush.xpose.msra.mxu0 0.0
    %3649 = vmatpush.xpose.msra.mxu0 0.0
    %3650 = vmatpush.xpose.msra.mxu0 0.0
    %3651 = vmatpush.xpose.msra.mxu0 0.0
    %3652 = vmatpush.xpose.msra.mxu0 0.0
    %3653 = vmatpush.xpose.msra.mxu0 %v3042
    %3654 = vmatmul.f32.gmra.mxu0 %v2955
    %v3655 = vpop.f32.mrf.mxu0
    %v3656 = vadd.f32 %v3636, %v3655
    %3657 = vdwg.mxu0
    %3658 = vmatpush.xpose.msra.mxu0 0.0
    %3659 = vmatpush.xpose.msra.mxu0 0.0
    %3660 = vmatpush.xpose.msra.mxu0 0.0
    %3661 = vmatpush.xpose.msra.mxu0 0.0
    %3662 = vmatpush.xpose.msra.mxu0 0.0
    %3663 = vmatpush.xpose.msra.mxu0 0.0
    %3664 = vmatpush.xpose.msra.mxu0 0.0
    %3665 = vmatpush.xpose.msra.mxu0 0.0
    %3666 = vmatpush.xpose.msra.mxu0 0.0
    %3667 = vmatpush.xpose.msra.mxu0 0.0
    %3668 = vmatpush.xpose.msra.mxu0 0.0
    %3669 = vmatpush.xpose.msra.mxu0 0.0
    %3670 = vmatpush.xpose.msra.mxu0 0.0
    %3671 = vmatpush.xpose.msra.mxu0 0.0
    %3672 = vmatpush.xpose.msra.mxu0 0.0
    %3673 = vmatpush.xpose.msra.mxu0 %v3043
    %3674 = vmatmul.f32.gmra.mxu0 %v2956
    %v3675 = vpop.f32.mrf.mxu0
    %v3676 = vadd.f32 %v3656, %v3675
    %3677 = vdwg.mxu0
    %3678 = vmatpush.xpose.msra.mxu0 0.0
    %3679 = vmatpush.xpose.msra.mxu0 0.0
    %3680 = vmatpush.xpose.msra.mxu0 0.0
    %3681 = vmatpush.xpose.msra.mxu0 0.0
    %3682 = vmatpush.xpose.msra.mxu0 0.0
    %3683 = vmatpush.xpose.msra.mxu0 0.0
    %3684 = vmatpush.xpose.msra.mxu0 0.0
    %3685 = vmatpush.xpose.msra.mxu0 0.0
    %3686 = vmatpush.xpose.msra.mxu0 0.0
    %3687 = vmatpush.xpose.msra.mxu0 0.0
    %3688 = vmatpush.xpose.msra.mxu0 0.0
    %3689 = vmatpush.xpose.msra.mxu0 0.0
    %3690 = vmatpush.xpose.msra.mxu0 0.0
    %3691 = vmatpush.xpose.msra.mxu0 0.0
    %3692 = vmatpush.xpose.msra.mxu0 0.0
    %3693 = vmatpush.xpose.msra.mxu0 %v3044
    %3694 = vmatmul.f32.gmra.mxu0 %v2957
    %v3695 = vpop.f32.mrf.mxu0
    %v3696 = vadd.f32 %v3676, %v3695
    %3697 = vdwg.mxu0
    %3698 = vmatpush.xpose.msra.mxu0 0.0
    %3699 = vmatpush.xpose.msra.mxu0 0.0
    %3700 = vmatpush.xpose.msra.mxu0 0.0
    %3701 = vmatpush.xpose.msra.mxu0 0.0
    %3702 = vmatpush.xpose.msra.mxu0 0.0
    %3703 = vmatpush.xpose.msra.mxu0 0.0
    %3704 = vmatpush.xpose.msra.mxu0 0.0
    %3705 = vmatpush.xpose.msra.mxu0 0.0
    %3706 = vmatpush.xpose.msra.mxu0 0.0
    %3707 = vmatpush.xpose.msra.mxu0 0.0
    %3708 = vmatpush.xpose.msra.mxu0 0.0
    %3709 = vmatpush.xpose.msra.mxu0 0.0
    %3710 = vmatpush.xpose.msra.mxu0 0.0
    %3711 = vmatpush.xpose.msra.mxu0 0.0
    %3712 = vmatpush.xpose.msra.mxu0 0.0
    %3713 = vmatpush.xpose.msra.mxu0 %v3045
    %3714 = vmatmul.f32.gmra.mxu0 %v2958
    %v3715 = vpop.f32.mrf.mxu0
    %v3716 = vadd.f32 %v3696, %v3715
    %3717 = vdwg.mxu0
    %vm3718 = vcmask 25600
    %3719 = vst.msk [vmem:[#allocation24] sm:$0x3] %vm3718, %v3716
    // Predicated region
    $region98: #{tpu_custom_call.1} parent=1 // pred_check
      _
    $region99: #{tpu_custom_call.1} parent=1 // pred_check_branch
      %3721 = sbr.rel (0) target = $region101
    $region100: #{tpu_custom_call.1} parent=1 // pred_region
      %3723 = vsyncadd [#allocation8], 0
      %s3725 = sshll.u32 [#allocation24], 4
      %s3726 = int_to_ptr.vmem [resolvable:$true] %s3725
      %s3727 = sshll.u32 %s13, 4
      %s3728 = int_to_ptr.hbm [resolvable:$true] %s3727
      %3730 = dma.vmem_to_hbm [thread:$0]  %s3726, 32, %s3728, [#allocation8]
    $region101: #{tpu_custom_call.1} parent=1 // pred_fallthru
      _
    // Predicated region
    $region102: #{tpu_custom_call.1} parent=1 // pred_check
      _
    $region103: #{tpu_custom_call.1} parent=1 // pred_check_branch
      %3732 = sbr.rel (0) target = $region105
    $region104: #{tpu_custom_call.1} parent=1 // pred_region
      %3734 = dma.done [#allocation8], 32
    $region105: #{tpu_custom_call.1} parent=1 // pred_fallthru
      _
    %3735 = vsyncpa [#allocation7], 1
    %3736 = vsyncpa [#allocation10], 1
    %3737 = vsyncpa [#allocation13], 1
    %3738 = vsyncpa [#allocation16], 1
    %3739 = vsyncpa [#allocation19], 1
    %3740 = vsyncpa [#allocation22], 1
    %3741 = vsyncpa [#allocation8], 1

</llo_original>
